<compile_context>
chip_gen: v5e
topology: v5e:2x2
jax: 0.10.0
libtpu: 0.0.40
codegen_flags: <defaults>
</compile_context>

<pallas_src>
import numpy as np
import jax
import jax.numpy as jnp
from jax import lax
from jax.experimental import pallas as pl
from jax.experimental.pallas import tpu as pltpu

# ----------------------------- configuration --------------------------------
B = 2                 # batch
IMG = 32              # input image size (square)
CIN = 3               # input channels
PATCH = 8             # ViT patch size
GRID = IMG // PATCH   # 4x4 image-embedding grid
VIT_DIM = 32          # ViT (interm) feature dim
EMBED = 32            # prompt / decoder embedding dim
MLP_VIT = 64
MLP_DEC = 64
NUM_MASK_TOKENS = 5   # 4 SAM mask tokens + 1 HQ token
C_UP = EMBED // 8     # channels of upscaled mask embedding
UP = 4 * GRID         # upscaled spatial size (low-res mask resolution)
NT = 1 + NUM_MASK_TOKENS + 2   # decoder tokens per batch element (iou+masks+2 corners)
GG = GRID * GRID


# --------------------------- in-kernel helpers -------------------------------
def _ln(x, g, b, eps=1e-6):
    """LayerNorm over the last dim (g, b broadcast as (1, C))."""
    mu = jnp.mean(x, axis=-1, keepdims=True)
    var = jnp.mean(jnp.square(x - mu), axis=-1, keepdims=True)
    return (x - mu) * lax.rsqrt(var + eps) * g + b


def _softmax_attn(q, k, v):
    """Single-head softmax(QK^T)V batched over B via a free leading-dim
    reshape (one einsum pair instead of per-batch slices + concatenate).
    The attention scale is already folded into the q projection weights."""
    d = q.shape[-1]
    tq = q.shape[0] // B
    tk = k.shape[0] // B
    qb = q.reshape(B, tq, d)
    kb = k.reshape(B, tk, d)
    vb = v.reshape(B, tk, d)
    s = jnp.einsum('bqd,bkd->bqk', qb, kb, preferred_element_type=jnp.float32)
    s = s - jnp.max(s, axis=-1, keepdims=True)
    p = jnp.exp(s)
    # divide -> EUP reciprocal (VPU divide is multi-op, EUP slot is idle here)
    p = p * pl.reciprocal(jnp.sum(p, axis=-1, keepdims=True), approx=True)
    o = jnp.einsum('bqk,bkd->bqd', p, vb, preferred_element_type=jnp.float32)
    return o.reshape(B * tq, d)


# ------------------------- single fused forward kernel -----------------------
_KERN_NAMES = (
    # runtime inputs
    'patches', 'tokens',
    # image encoder params
    'pos', 'patch_w', 'patch_b', 'ln1_g', 'ln1_b',
    'qkv_w', 'qkv_b', 'proj_w', 'proj_b', 'ln2_g', 'ln2_b',
    'mlp_w1', 'mlp_b1', 'mlp_w2', 'mlp_b2',
    'neck_w', 'neck_ln_g', 'neck_ln_b',
    # mask decoder params
    'dense', 'pos_src',
    'attn_w', 'attn_b', 'norm_g', 'norm_b',
    'dmlp_w1', 'dmlp_b1', 'dmlp_w2', 'dmlp_b2',
    'up1_w', 'up1_b', 'up_ln_g', 'up_ln_b', 'up2_w', 'up2_b',
    'hq_enc_w', 'hq_enc_b', 'hq_vit_w', 'hq_vit_b', 'hq_mask_w', 'hq_mask_b',
    'hyp_w1', 'hyp_b1', 'hyp_w2', 'hyp_b2',
    'sel_sam', 'sel_hq',
)


def _samhq_kernel(*refs):
    r = dict(zip(_KERN_NAMES, refs))
    out_ref = refs[len(_KERN_NAMES)]

    # ============================ image encoder ==============================
    # patch embedding + positional embedding
    tok = jnp.dot(r['patches'][...], r['patch_w'][...],
                  preferred_element_type=jnp.float32)
    tok = tok + r['patch_b'][...] + r['pos'][...]

    # one transformer block (TODO(synk): real SAM-HQ ViT uses many windowed
    # blocks with relative position bias; depth-1 global attention here)
    h = _ln(tok, r['ln1_g'][...], r['ln1_b'][...])
    # q/k/v kept as stacked (3,D,D) weights: fusing into one (D,3D) matmul
    # would need 32-wide lane slices that can trigger relayout copies.
    q = jnp.dot(h, r['qkv_w'][0], preferred_element_type=jnp.float32) + r['qkv_b'][0]
    k = jnp.dot(h, r['qkv_w'][1], preferred_element_type=jnp.float32) + r['qkv_b'][1]
    v = jnp.dot(h, r['qkv_w'][2], preferred_element_type=jnp.float32) + r['qkv_b'][2]
    a = _softmax_attn(q, k, v)
    a = jnp.dot(a, r['proj_w'][...], preferred_element_type=jnp.float32) + r['proj_b'][...]
    tok = tok + a

    h2 = _ln(tok, r['ln2_g'][...], r['ln2_b'][...])
    m = jnp.dot(h2, r['mlp_w1'][...], preferred_element_type=jnp.float32) + r['mlp_b1'][...]
    m = jax.nn.gelu(m)
    m = jnp.dot(m, r['mlp_w2'][...], preferred_element_type=jnp.float32) + r['mlp_b2'][...]
    tok = tok + m

    interm = tok                                              # (B*GG, VIT_DIM), stays in VMEM
    # neck: 1x1 conv (channel matmul) + LayerNorm2d
    features = _ln(jnp.dot(tok, r['neck_w'][...], preferred_element_type=jnp.float32),
                   r['neck_ln_g'][...], r['neck_ln_b'][...])  # (B*GG, EMBED)

    # ============================ mask decoder ===============================
    aw, ab = r['attn_w'], r['attn_b']          # (4,4,E,E) / (4,4,1,E) stacked q,k,v,o
    ng, nb = r['norm_g'], r['norm_b']          # (5,1,E)

    def attend(ai, q_in, k_in, v_in):
        q = jnp.dot(q_in, aw[ai, 0], preferred_element_type=jnp.float32) + ab[ai, 0]
        k = jnp.dot(k_in, aw[ai, 1], preferred_element_type=jnp.float32) + ab[ai, 1]
        v = jnp.dot(v_in, aw[ai, 2], preferred_element_type=jnp.float32) + ab[ai, 2]
        o = _softmax_attn(q, k, v)
        return jnp.dot(o, aw[ai, 3], preferred_element_type=jnp.float32) + ab[ai, 3]

    tok0 = r['tokens'][...]                                   # (B*NT, E)
    src0 = features + r['dense'][...]                         # dense prompt add
    qpe = tok0
    kpe = r['pos_src'][...]                                   # (B*GG, E)

    # TwoWayAttentionBlock (depth 1, skip_first_layer_pe=True)
    queries = attend(0, tok0, tok0, tok0)
    queries = _ln(queries, ng[0], nb[0])

    queries = queries + attend(1, queries + qpe, src0 + kpe, src0)
    queries = _ln(queries, ng[1], nb[1])

    m = jnp.dot(queries, r['dmlp_w1'][...], preferred_element_type=jnp.float32) + r['dmlp_b1'][...]
    m = jnp.maximum(m, 0.0)
    m = jnp.dot(m, r['dmlp_w2'][...], preferred_element_type=jnp.float32) + r['dmlp_b2'][...]
    queries = _ln(queries + m, ng[2], nb[2])

    keys = src0 + attend(2, src0 + kpe, queries + qpe, queries)
    keys = _ln(keys, ng[3], nb[3])

    # final token -> image attention
    queries = queries + attend(3, queries + qpe, keys + kpe, keys)
    queries = _ln(queries, ng[4], nb[4])

    # ---- output upscaling (SAM path) evaluated at GRID resolution: the
    # nearest-upsample+1x1 projections, GELU and per-pixel LayerNorm commute
    # with the upsample, which is deferred to the wrapper (16x fewer rows).
    u = jnp.dot(keys, r['up1_w'][...], preferred_element_type=jnp.float32) + r['up1_b'][...]
    u = _ln(u, r['up_ln_g'][...], r['up_ln_b'][...])
    u = jax.nn.gelu(u)
    u = jnp.dot(u, r['up2_w'][...], preferred_element_type=jnp.float32) + r['up2_b'][...]
    up_sam = jax.nn.gelu(u)                                    # (B*GG, C_UP)

    # ---- HQ feature path (also at GRID resolution)
    enc = jnp.dot(features, r['hq_enc_w'][...],
                  preferred_element_type=jnp.float32) + r['hq_enc_b'][...]
    vitc = jnp.dot(interm, r['hq_vit_w'][...],
                   preferred_element_type=jnp.float32) + r['hq_vit_b'][...]
    hq_feat = enc + vitc
    mf = jnp.dot(up_sam, r['hq_mask_w'][...],
                 preferred_element_type=jnp.float32) + r['hq_mask_b'][...]
    up_hq = mf + hq_feat                                       # (B*GG, C_UP)

    # ---- hypernetworks + mask product.  multimask_output=False and
    # hq_token_only=False => low_res = hyper0 . up_sam + hyper_hq . up_hq,
    # so only mask tokens 0 and 4 (HQ) are computed.  Token rows are pulled
    # out with constant 0/1 selector matmuls (one MXU op each, no iota/where)
    # and both hypernet MLPs run on all B rows at once.
    t_sam = jnp.dot(r['sel_sam'][...], queries, preferred_element_type=jnp.float32)  # (B, E)
    t_hq = jnp.dot(r['sel_hq'][...], queries, preferred_element_type=jnp.float32)    # (B, E)

    def hyper(hi, t):
        h = jnp.dot(t, r['hyp_w1'][hi], preferred_element_type=jnp.float32) + r['hyp_b1'][hi]
        h = jnp.maximum(h, 0.0)
        return jnp.dot(h, r['hyp_w2'][hi], preferred_element_type=jnp.float32) + r['hyp_b2'][hi]

    h_sam = hyper(0, t_sam)                                    # (B, C_UP)
    h_hq = hyper(1, t_hq)                                      # (B, C_UP)

    # batched per-pixel dot product: broadcast-multiply + lane reduce
    # (C_UP=4, cheaper than pushing a K=4 matmul through the MXU), stored
    # directly to out_ref.
    up_sam_b = up_sam.reshape(B, GG, C_UP)
    up_hq_b = up_hq.reshape(B, GG, C_UP)
    prod = h_sam[:, None, :] * up_sam_b + h_hq[:, None, :] * up_hq_b
    out_ref[...] = jnp.sum(prod, axis=-1)                      # (B, GG)


# --------------------------- pallas_call wrapper ------------------------------
_VSPEC = pl.BlockSpec(memory_space=pltpu.MemorySpace.VMEM)


def samhq_kernel_call(kern_params, patches, tokens):
    ops = dict(kern_params)
    ops.update(patches=patches, tokens=tokens)
    args = [ops[n] for n in _KERN_NAMES]
    # grid-less launch: whole working set (<100 KiB) stays VMEM-resident.
    return pl.pallas_call(
        _samhq_kernel,
        out_shape=jax.ShapeDtypeStruct((B, GG), jnp.float32),
        in_specs=[_VSPEC] * len(args),
        out_specs=_VSPEC,
    )(*args)


# --------------------------- parameter init ----------------------------------
def make_params(key):
    keys = iter(jax.random.split(key, 128))

    def w(shape, scale=0.05):
        return scale * jax.random.normal(next(keys), shape, dtype=jnp.float32)

    def zeros(shape):
        return jnp.zeros(shape, jnp.float32)

    def ones(shape):
        return jnp.ones(shape, jnp.float32)

    def attn_params():
        d = {}
        for n in ('q', 'k', 'v', 'o'):
            d['w' + n] = w((EMBED, EMBED))
            d['b' + n] = zeros((EMBED,))
        return d

    p = {
        # --- image encoder (ViT-style, depth 1) ---
        'patch_w': w((PATCH * PATCH * CIN, VIT_DIM)),
        'patch_b': zeros((VIT_DIM,)),
        'pos_embed': w((1, GG, VIT_DIM)),
        'ln1_g': ones((VIT_DIM,)), 'ln1_b': zeros((VIT_DIM,)),
        'ln2_g': ones((VIT_DIM,)), 'ln2_b': zeros((VIT_DIM,)),
        'qkv_w': w((VIT_DIM, 3 * VIT_DIM)), 'qkv_b': zeros((3 * VIT_DIM,)),
        'proj_w': w((VIT_DIM, VIT_DIM)), 'proj_b': zeros((VIT_DIM,)),
        'mlp_w1': w((VIT_DIM, MLP_VIT)), 'mlp_b1': zeros((MLP_VIT,)),
        'mlp_w2': w((MLP_VIT, VIT_DIM)), 'mlp_b2': zeros((VIT_DIM,)),
        'neck_w': w((VIT_DIM, EMBED)),
        'neck_ln_g': ones((EMBED,)), 'neck_ln_b': zeros((EMBED,)),
        # --- prompt encoder (boxes) ---
        'pe_gauss': w((2, EMBED // 2), scale=1.0),
        'pt_emb_2': w((EMBED,)), 'pt_emb_3': w((EMBED,)),
        'no_mask_embed': w((EMBED,)),
        # --- mask decoder ---
        'iou_token': w((EMBED,)),
        'mask_tokens': w((NUM_MASK_TOKENS, EMBED)),
        'sa': attn_params(), 't2i': attn_params(),
        'i2t': attn_params(), 'final': attn_params(),
        'n1_g': ones((EMBED,)), 'n1_b': zeros((EMBED,)),
        'n2_g': ones((EMBED,)), 'n2_b': zeros((EMBED,)),
        'n3_g': ones((EMBED,)), 'n3_b': zeros((EMBED,)),
        'n4_g': ones((EMBED,)), 'n4_b': zeros((EMBED,)),
        'nf_g': ones((EMBED,)), 'nf_b': zeros((EMBED,)),
        'dmlp_w1': w((EMBED, MLP_DEC)), 'dmlp_b1': zeros((MLP_DEC,)),
        'dmlp_w2': w((MLP_DEC, EMBED)), 'dmlp_b2': zeros((EMBED,)),
        # output upscaling (ConvTranspose2d(2,2) approximated as
        # nearest-2x upsample + 1x1 projection)
        'up1_w': w((EMBED, EMBED // 4)), 'up1_b': zeros((EMBED // 4,)),
        'up_ln_g': ones((EMBED // 4,)), 'up_ln_b': zeros((EMBED // 4,)),
        'up2_w': w((EMBED // 4, C_UP)), 'up2_b': zeros((C_UP,)),
        # HQ branch
        'hq_enc_w': w((EMBED, C_UP)), 'hq_enc_b': zeros((C_UP,)),
        'hq_vit_w': w((VIT_DIM, C_UP)), 'hq_vit_b': zeros((C_UP,)),
        'hq_mask_w': w((C_UP, C_UP)), 'hq_mask_b': zeros((C_UP,)),
    }
    for i in range(NUM_MASK_TOKENS):
        p[f'hyp_w1_{i}'] = w((EMBED, EMBED))
        p[f'hyp_b1_{i}'] = zeros((EMBED,))
        p[f'hyp_w2_{i}'] = w((EMBED, C_UP))
        p[f'hyp_b2_{i}'] = zeros((C_UP,))
    return p


def pe_encoding(coords, gauss):
    """Random-Fourier positional encoding (plain JAX; a few hundred FLOPs)."""
    c = 2.0 * coords.astype(jnp.float32) - 1.0
    proj = jnp.matmul(c, gauss) * (2.0 * np.pi)
    return jnp.concatenate([jnp.sin(proj), jnp.cos(proj)], axis=-1)


def pack_params(p):
    """Pack raw params into the flat, kernel-resident operand layout of the
    single fused kernel (done once, outside jit).  All constant/param-only
    tensors (dense PE grid, batch tiles, token selectors, attention-scale
    folding) are hoisted here."""
    def row(v):
        return v.reshape(1, -1)

    enc_scale = VIT_DIM ** -0.5
    dec_scale = EMBED ** -0.5

    # fused qkv weight stored stacked (3, D, D) so q/k/v are indexed (not
    # lane-sliced) inside the kernel; attention scale folded into q only.
    qkv_w = p['qkv_w'].reshape(VIT_DIM, 3, VIT_DIM).transpose(1, 0, 2)
    qkv_b = p['qkv_b'].reshape(3, 1, VIT_DIM)
    qkv_w = qkv_w.at[0].multiply(enc_scale)
    qkv_b = qkv_b.at[0].multiply(enc_scale)

    attn_names = ('sa', 't2i', 'i2t', 'final')
    attn_w = jnp.stack([jnp.stack([p[a]['wq'], p[a]['wk'], p[a]['wv'], p[a]['wo']])
                        for a in attn_names])                            # (4,4,E,E)
    attn_b = jnp.stack([jnp.stack([p[a]['bq'], p[a]['bk'], p[a]['bv'], p[a]['bo']])
                        for a in attn_names])[:, :, None, :]             # (4,4,1,E)
    attn_w = attn_w.at[:, 0].multiply(dec_scale)                         # scale -> q proj only
    attn_b = attn_b.at[:, 0].multiply(dec_scale)

    hq = NUM_MASK_TOKENS - 1

    # constant 0/1 selectors extracting mask-token-0 (SAM) and HQ-token rows
    sel_sam = np.zeros((B, B * NT), np.float32)
    sel_hq = np.zeros((B, B * NT), np.float32)
    for bi in range(B):
        sel_sam[bi, bi * NT + 1] = 1.0                    # mask token 0
        sel_hq[bi, bi * NT + NUM_MASK_TOKENS] = 1.0       # HQ token

    # dense positional encoding of the image-embedding grid, tiled over batch
    coords_1d = (np.arange(GRID, dtype=np.float32) + 0.5) / GRID
    gy, gx = np.meshgrid(coords_1d, coords_1d, indexing='ij')
    grid_coords = jnp.asarray(np.stack([gx, gy], axis=-1), jnp.float32)
    image_pe = pe_encoding(grid_coords, p['pe_gauss']).reshape(GG, EMBED)
    pos_src = jnp.tile(image_pe, (B, 1))                                 # (B*GG, E)

    kern = {
        # encoder
        'pos': jnp.tile(p['pos_embed'].reshape(GG, VIT_DIM), (B, 1)),
        'patch_w': p['patch_w'], 'patch_b': row(p['patch_b']),
        'ln1_g': row(p['ln1_g']), 'ln1_b': row(p['ln1_b']),
        'qkv_w': qkv_w, 'qkv_b': qkv_b,
        'proj_w': p['proj_w'], 'proj_b': row(p['proj_b']),
        'ln2_g': row(p['ln2_g']), 'ln2_b': row(p['ln2_b']),
        'mlp_w1': p['mlp_w1'], 'mlp_b1': row(p['mlp_b1']),
        'mlp_w2': p['mlp_w2'], 'mlp_b2': row(p['mlp_b2']),
        'neck_w': p['neck_w'],
        'neck_ln_g': row(p['neck_ln_g']), 'neck_ln_b': row(p['neck_ln_b']),
        # decoder
        'dense': row(p['no_mask_embed']),
        'pos_src': pos_src,
        'attn_w': attn_w, 'attn_b': attn_b,
        'norm_g': jnp.stack([p['n1_g'], p['n2_g'], p['n3_g'], p['n4_g'], p['nf_g']])[:, None, :],
        'norm_b': jnp.stack([p['n1_b'], p['n2_b'], p['n3_b'], p['n4_b'], p['nf_b']])[:, None, :],
        'dmlp_w1': p['dmlp_w1'], 'dmlp_b1': row(p['dmlp_b1']),
        'dmlp_w2': p['dmlp_w2'], 'dmlp_b2': row(p['dmlp_b2']),
        'up1_w': p['up1_w'], 'up1_b': row(p['up1_b']),
        'up_ln_g': row(p['up_ln_g']), 'up_ln_b': row(p['up_ln_b']),
        'up2_w': p['up2_w'], 'up2_b': row(p['up2_b']),
        'hq_enc_w': p['hq_enc_w'], 'hq_enc_b': row(p['hq_enc_b']),
        'hq_vit_w': p['hq_vit_w'], 'hq_vit_b': row(p['hq_vit_b']),
        'hq_mask_w': p['hq_mask_w'], 'hq_mask_b': row(p['hq_mask_b']),
        # only mask tokens 0 (SAM) and 4 (HQ) reach the returned mask
        'hyp_w1': jnp.stack([p['hyp_w1_0'], p[f'hyp_w1_{hq}']]),
        'hyp_b1': jnp.stack([p['hyp_b1_0'], p[f'hyp_b1_{hq}']])[:, None, :],
        'hyp_w2': jnp.stack([p['hyp_w2_0'], p[f'hyp_w2_{hq}']]),
        'hyp_b2': jnp.stack([p['hyp_b2_0'], p[f'hyp_b2_{hq}']])[:, None, :],
        'sel_sam': jnp.asarray(sel_sam), 'sel_hq': jnp.asarray(sel_hq),
    }

    output_tokens = jnp.concatenate(
        [p['iou_token'].reshape(1, EMBED), p['mask_tokens']], axis=0)    # (6, E)
    misc = {
        'pe_gauss': p['pe_gauss'],
        'pt_emb_2': p['pt_emb_2'], 'pt_emb_3': p['pt_emb_3'],
        'output_tokens_tiled': jnp.tile(output_tokens[None], (B, 1, 1)),  # (B, 6, E)
    }
    return {'kern': kern, 'misc': misc}


# ------------------------------ forward --------------------------------------
def samhq_forward(pp, img, queries):
    misc = pp['misc']
    bx = img.shape[0]

    # ---- im2col in plain JAX, everything else in one fused kernel
    x = jnp.transpose(img, (0, 2, 3, 1))                      # NHWC
    x = x.reshape(bx, GRID, PATCH, GRID, PATCH, CIN)
    patches = jnp.transpose(x, (0, 1, 3, 2, 4, 5)).reshape(bx * GG, PATCH * PATCH * CIN)

    # ---- prompt encoder (boxes) in plain JAX (a few hundred FLOPs)
    corners = (queries.astype(jnp.float32) + 0.5).reshape(bx, 2, 2) / float(IMG)
    corner_emb = pe_encoding(corners, misc['pe_gauss'])        # (B, 2, EMBED)
    corner_emb = corner_emb.at[:, 0, :].add(misc['pt_emb_2'])
    corner_emb = corner_emb.at[:, 1, :].add(misc['pt_emb_3'])

    # decoder tokens: [iou, 5 mask tokens, 2 box-corner embeddings] per batch
    tokens = jnp.concatenate([misc['output_tokens_tiled'], corner_emb],
                             axis=1).reshape(bx * NT, EMBED)

    # ---- single fused encoder+decoder kernel; low-res mask at GRID resolution
    # TODO(synk): iou_prediction_head omitted (iou_predictions not returned).
    low_grid = samhq_kernel_call(pp['kern'], patches, tokens)  # (B, GG)

    # deferred nearest 4x upsample (commutes with the per-pixel decoder head)
    low = low_grid.reshape(bx, 1, GRID, GRID)
    low = jnp.repeat(jnp.repeat(low, 4, axis=2), 4, axis=3)    # (B, 1, UP, UP) NCHW
    return low


# -------------------------------- main ---------------------------------------
if __name__ == "__main__":
    key = jax.random.PRNGKey(0)
    k_param, k_img, k_box = jax.random.split(key, 3)

    raw_params = make_params(k_param)
    params = pack_params(raw_params)
    img = jax.random.normal(k_img, (B, CIN, IMG, IMG), dtype=jnp.float32)
    queries = jax.random.uniform(k_box, (B, 4), minval=0.0, maxval=float(IMG),
                                 dtype=jnp.float32)            # boxes (x1,y1,x2,y2)

    fwd = jax.jit(samhq_forward)
    low_res_masks = fwd(params, img, queries)
    jax.block_until_ready(low_res_masks)

    assert low_res_masks.shape == (B, 1, UP, UP)
    assert bool(jnp.all(jnp.isfinite(low_res_masks)))
    print("KERNEL_OK")
</pallas_src>

<mosaic_0001>
module attributes {stable_mosaic.version = 11 : i64} {
  func.func @_samhq_kernel(%arg0: memref<32x192xf32, #tpu.memory_space<vmem>>, %arg1: memref<16x32xf32, #tpu.memory_space<vmem>>, %arg2: memref<32x32xf32, #tpu.memory_space<vmem>>, %arg3: memref<192x32xf32, #tpu.memory_space<vmem>>, %arg4: memref<1x32xf32, #tpu.memory_space<vmem>>, %arg5: memref<1x32xf32, #tpu.memory_space<vmem>>, %arg6: memref<1x32xf32, #tpu.memory_space<vmem>>, %arg7: memref<3x32x32xf32, #tpu.memory_space<vmem>>, %arg8: memref<3x1x32xf32, #tpu.memory_space<vmem>>, %arg9: memref<32x32xf32, #tpu.memory_space<vmem>>, %arg10: memref<1x32xf32, #tpu.memory_space<vmem>>, %arg11: memref<1x32xf32, #tpu.memory_space<vmem>>, %arg12: memref<1x32xf32, #tpu.memory_space<vmem>>, %arg13: memref<32x64xf32, #tpu.memory_space<vmem>>, %arg14: memref<1x64xf32, #tpu.memory_space<vmem>>, %arg15: memref<64x32xf32, #tpu.memory_space<vmem>>, %arg16: memref<1x32xf32, #tpu.memory_space<vmem>>, %arg17: memref<32x32xf32, #tpu.memory_space<vmem>>, %arg18: memref<1x32xf32, #tpu.memory_space<vmem>>, %arg19: memref<1x32xf32, #tpu.memory_space<vmem>>, %arg20: memref<1x32xf32, #tpu.memory_space<vmem>>, %arg21: memref<32x32xf32, #tpu.memory_space<vmem>>, %arg22: memref<4x4x32x32xf32, #tpu.memory_space<vmem>>, %arg23: memref<4x4x1x32xf32, #tpu.memory_space<vmem>>, %arg24: memref<5x1x32xf32, #tpu.memory_space<vmem>>, %arg25: memref<5x1x32xf32, #tpu.memory_space<vmem>>, %arg26: memref<32x64xf32, #tpu.memory_space<vmem>>, %arg27: memref<1x64xf32, #tpu.memory_space<vmem>>, %arg28: memref<64x32xf32, #tpu.memory_space<vmem>>, %arg29: memref<1x32xf32, #tpu.memory_space<vmem>>, %arg30: memref<32x8xf32, #tpu.memory_space<vmem>>, %arg31: memref<1x8xf32, #tpu.memory_space<vmem>>, %arg32: memref<1x8xf32, #tpu.memory_space<vmem>>, %arg33: memref<1x8xf32, #tpu.memory_space<vmem>>, %arg34: memref<8x4xf32, #tpu.memory_space<vmem>>, %arg35: memref<1x4xf32, #tpu.memory_space<vmem>>, %arg36: memref<32x4xf32, #tpu.memory_space<vmem>>, %arg37: memref<1x4xf32, #tpu.memory_space<vmem>>, %arg38: memref<32x4xf32, #tpu.memory_space<vmem>>, %arg39: memref<1x4xf32, #tpu.memory_space<vmem>>, %arg40: memref<4x4xf32, #tpu.memory_space<vmem>>, %arg41: memref<1x4xf32, #tpu.memory_space<vmem>>, %arg42: memref<2x32x32xf32, #tpu.memory_space<vmem>>, %arg43: memref<2x1x32xf32, #tpu.memory_space<vmem>>, %arg44: memref<2x32x4xf32, #tpu.memory_space<vmem>>, %arg45: memref<2x1x4xf32, #tpu.memory_space<vmem>>, %arg46: memref<2x16xf32, #tpu.memory_space<vmem>>, %arg47: memref<2x16xf32, #tpu.memory_space<vmem>>, %arg48: memref<2x16xf32, #tpu.memory_space<vmem>>) attributes {dimension_semantics = [], scalar_prefetch = 0 : i64, scratch_operands = 0 : i64, tpu.core_type = #tpu.core_type<tc>} {
    %c0 = arith.constant 0 : index
    %c0_0 = arith.constant 0 : index
    %0 = vector.load %arg0[%c0, %c0_0] : memref<32x192xf32, #tpu.memory_space<vmem>>, vector<32x192xf32>
    %c0_1 = arith.constant 0 : index
    %c0_2 = arith.constant 0 : index
    %1 = vector.load %arg3[%c0_1, %c0_2] : memref<192x32xf32, #tpu.memory_space<vmem>>, vector<192x32xf32>
    %cst = arith.constant dense<0.000000e+00> : vector<32x32xf32>
    %2 = tpu.matmul %0, %1, %cst {dimension_numbers = #tpu.dot_dimension_numbers<[1], [0], [0], [1], [0, 0, 1, 1], [], []>} : vector<32x192xf32>, vector<192x32xf32>, vector<32x32xf32> -> vector<32x32xf32>
    %c0_3 = arith.constant 0 : index
    %c0_4 = arith.constant 0 : index
    %3 = vector.load %arg4[%c0_3, %c0_4] : memref<1x32xf32, #tpu.memory_space<vmem>>, vector<1x32xf32>
    %4 = vector.broadcast %3 : vector<1x32xf32> to vector<32x32xf32>
    %5 = arith.addf %2, %4 : vector<32x32xf32>
    %c0_5 = arith.constant 0 : index
    %c0_6 = arith.constant 0 : index
    %6 = vector.load %arg2[%c0_5, %c0_6] : memref<32x32xf32, #tpu.memory_space<vmem>>, vector<32x32xf32>
    %7 = arith.addf %5, %6 : vector<32x32xf32>
    %c0_7 = arith.constant 0 : index
    %c0_8 = arith.constant 0 : index
    %8 = vector.load %arg5[%c0_7, %c0_8] : memref<1x32xf32, #tpu.memory_space<vmem>>, vector<1x32xf32>
    %c0_9 = arith.constant 0 : index
    %c0_10 = arith.constant 0 : index
    %9 = vector.load %arg6[%c0_9, %c0_10] : memref<1x32xf32, #tpu.memory_space<vmem>>, vector<1x32xf32>
    %cst_11 = arith.constant dense<0.000000e+00> : vector<32xf32>
    %10 = vector.multi_reduction <add>, %7, %cst_11 [1] : vector<32x32xf32> to vector<32xf32>
    %11 = vector.shape_cast %10 : vector<32xf32> to vector<32x1xf32>
    %cst_12 = arith.constant 3.200000e+01 : f32
    %12 = vector.broadcast %cst_12 : f32 to vector<32x1xf32>
    %13 = arith.divf %11, %12 : vector<32x1xf32>
    %14 = vector.broadcast %13 : vector<32x1xf32> to vector<32x32xf32>
    %15 = arith.subf %7, %14 : vector<32x32xf32>
    %16 = arith.mulf %15, %15 : vector<32x32xf32>
    %cst_13 = arith.constant dense<0.000000e+00> : vector<32xf32>
    %17 = vector.multi_reduction <add>, %16, %cst_13 [1] : vector<32x32xf32> to vector<32xf32>
    %18 = vector.shape_cast %17 : vector<32xf32> to vector<32x1xf32>
    %cst_14 = arith.constant 3.200000e+01 : f32
    %19 = vector.broadcast %cst_14 : f32 to vector<32x1xf32>
    %20 = arith.divf %18, %19 : vector<32x1xf32>
    %21 = vector.broadcast %13 : vector<32x1xf32> to vector<32x32xf32>
    %22 = arith.subf %7, %21 : vector<32x32xf32>
    %cst_15 = arith.constant 9.99999997E-7 : f32
    %23 = vector.broadcast %cst_15 : f32 to vector<32x1xf32>
    %24 = arith.addf %20, %23 : vector<32x1xf32>
    %25 = math.rsqrt %24 : vector<32x1xf32>
    %26 = vector.broadcast %25 : vector<32x1xf32> to vector<32x32xf32>
    %27 = arith.mulf %22, %26 : vector<32x32xf32>
    %28 = vector.broadcast %8 : vector<1x32xf32> to vector<32x32xf32>
    %29 = arith.mulf %27, %28 : vector<32x32xf32>
    %30 = vector.broadcast %9 : vector<1x32xf32> to vector<32x32xf32>
    %31 = arith.addf %29, %30 : vector<32x32xf32>
    %c0_16 = arith.constant 0 : index
    %c0_17 = arith.constant 0 : index
    %c0_18 = arith.constant 0 : index
    %32 = vector.load %arg7[%c0_16, %c0_17, %c0_18] : memref<3x32x32xf32, #tpu.memory_space<vmem>>, vector<1x32x32xf32>
    %33 = vector.shape_cast %32 : vector<1x32x32xf32> to vector<32x32xf32>
    %cst_19 = arith.constant dense<0.000000e+00> : vector<32x32xf32>
    %34 = tpu.matmul %31, %33, %cst_19 {dimension_numbers = #tpu.dot_dimension_numbers<[1], [0], [0], [1], [0, 0, 1, 1], [], []>} : vector<32x32xf32>, vector<32x32xf32>, vector<32x32xf32> -> vector<32x32xf32>
    %c0_20 = arith.constant 0 : index
    %c0_21 = arith.constant 0 : index
    %c0_22 = arith.constant 0 : index
    %35 = vector.load %arg8[%c0_20, %c0_21, %c0_22] : memref<3x1x32xf32, #tpu.memory_space<vmem>>, vector<1x1x32xf32>
    %36 = vector.shape_cast %35 : vector<1x1x32xf32> to vector<1x32xf32>
    %37 = vector.broadcast %36 : vector<1x32xf32> to vector<32x32xf32>
    %38 = arith.addf %34, %37 : vector<32x32xf32>
    %c1 = arith.constant 1 : index
    %c0_23 = arith.constant 0 : index
    %c0_24 = arith.constant 0 : index
    %39 = vector.load %arg7[%c1, %c0_23, %c0_24] : memref<3x32x32xf32, #tpu.memory_space<vmem>>, vector<1x32x32xf32>
    %40 = vector.shape_cast %39 : vector<1x32x32xf32> to vector<32x32xf32>
    %cst_25 = arith.constant dense<0.000000e+00> : vector<32x32xf32>
    %41 = tpu.matmul %31, %40, %cst_25 {dimension_numbers = #tpu.dot_dimension_numbers<[1], [0], [0], [1], [0, 0, 1, 1], [], []>} : vector<32x32xf32>, vector<32x32xf32>, vector<32x32xf32> -> vector<32x32xf32>
    %c1_26 = arith.constant 1 : index
    %c0_27 = arith.constant 0 : index
    %c0_28 = arith.constant 0 : index
    %42 = vector.load %arg8[%c1_26, %c0_27, %c0_28] : memref<3x1x32xf32, #tpu.memory_space<vmem>>, vector<1x1x32xf32>
    %43 = vector.shape_cast %42 : vector<1x1x32xf32> to vector<1x32xf32>
    %44 = vector.broadcast %43 : vector<1x32xf32> to vector<32x32xf32>
    %45 = arith.addf %41, %44 : vector<32x32xf32>
    %c2 = arith.constant 2 : index
    %c0_29 = arith.constant 0 : index
    %c0_30 = arith.constant 0 : index
    %46 = vector.load %arg7[%c2, %c0_29, %c0_30] : memref<3x32x32xf32, #tpu.memory_space<vmem>>, vector<1x32x32xf32>
    %47 = vector.shape_cast %46 : vector<1x32x32xf32> to vector<32x32xf32>
    %cst_31 = arith.constant dense<0.000000e+00> : vector<32x32xf32>
    %48 = tpu.matmul %31, %47, %cst_31 {dimension_numbers = #tpu.dot_dimension_numbers<[1], [0], [0], [1], [0, 0, 1, 1], [], []>} : vector<32x32xf32>, vector<32x32xf32>, vector<32x32xf32> -> vector<32x32xf32>
    %c2_32 = arith.constant 2 : index
    %c0_33 = arith.constant 0 : index
    %c0_34 = arith.constant 0 : index
    %49 = vector.load %arg8[%c2_32, %c0_33, %c0_34] : memref<3x1x32xf32, #tpu.memory_space<vmem>>, vector<1x1x32xf32>
    %50 = vector.shape_cast %49 : vector<1x1x32xf32> to vector<1x32xf32>
    %51 = vector.broadcast %50 : vector<1x32xf32> to vector<32x32xf32>
    %52 = arith.addf %48, %51 : vector<32x32xf32>
    %53 = vector.shape_cast %38 : vector<32x32xf32> to vector<2x16x32xf32>
    %54 = vector.shape_cast %45 : vector<32x32xf32> to vector<2x16x32xf32>
    %55 = vector.shape_cast %52 : vector<32x32xf32> to vector<2x16x32xf32>
    "tpu.trace_start"() <{level = 10 : i32, message = "bqd,bkd->bqk"}> : () -> ()
    %cst_35 = arith.constant dense<0.000000e+00> : vector<2x16x16xf32>
    %56 = tpu.matmul %53, %54, %cst_35 {dimension_numbers = #tpu.dot_dimension_numbers<[2], [2], [1], [1], [0, 0, 0, 1, 1, 1], [0], [0]>} : vector<2x16x32xf32>, vector<2x16x32xf32>, vector<2x16x16xf32> -> vector<2x16x16xf32>
    "tpu.trace_stop"() : () -> ()
    %cst_36 = arith.constant dense<0xFF800000> : vector<2x16xf32>
    %57 = vector.multi_reduction <maximumf>, %56, %cst_36 [2] : vector<2x16x16xf32> to vector<2x16xf32>
    %58 = vector.shape_cast %57 : vector<2x16xf32> to vector<2x16x1xf32>
    %59 = vector.broadcast %58 : vector<2x16x1xf32> to vector<2x16x16xf32>
    %60 = arith.subf %56, %59 : vector<2x16x16xf32>
    %61 = math.exp %60 : vector<2x16x16xf32>
    %cst_37 = arith.constant dense<0.000000e+00> : vector<2x16xf32>
    %62 = vector.multi_reduction <add>, %61, %cst_37 [2] : vector<2x16x16xf32> to vector<2x16xf32>
    %63 = vector.shape_cast %62 : vector<2x16xf32> to vector<2x16x1xf32>
    %64 = tpu.reciprocal %63 {approx = true} : vector<2x16x1xf32> -> vector<2x16x1xf32>
    %65 = vector.broadcast %64 : vector<2x16x1xf32> to vector<2x16x16xf32>
    %66 = arith.mulf %61, %65 : vector<2x16x16xf32>
    "tpu.trace_start"() <{level = 10 : i32, message = "bqk,bkd->bqd"}> : () -> ()
    %cst_38 = arith.constant dense<0.000000e+00> : vector<2x16x32xf32>
    %67 = tpu.matmul %66, %55, %cst_38 {dimension_numbers = #tpu.dot_dimension_numbers<[2], [1], [1], [2], [0, 0, 0, 1, 1, 2], [0], [0]>} : vector<2x16x16xf32>, vector<2x16x32xf32>, vector<2x16x32xf32> -> vector<2x16x32xf32>
    "tpu.trace_stop"() : () -> ()
    %68 = vector.shape_cast %67 : vector<2x16x32xf32> to vector<32x32xf32>
    %c0_39 = arith.constant 0 : index
    %c0_40 = arith.constant 0 : index
    %69 = vector.load %arg9[%c0_39, %c0_40] : memref<32x32xf32, #tpu.memory_space<vmem>>, vector<32x32xf32>
    %cst_41 = arith.constant dense<0.000000e+00> : vector<32x32xf32>
    %70 = tpu.matmul %68, %69, %cst_41 {dimension_numbers = #tpu.dot_dimension_numbers<[1], [0], [0], [1], [0, 0, 1, 1], [], []>} : vector<32x32xf32>, vector<32x32xf32>, vector<32x32xf32> -> vector<32x32xf32>
    %c0_42 = arith.constant 0 : index
    %c0_43 = arith.constant 0 : index
    %71 = vector.load %arg10[%c0_42, %c0_43] : memref<1x32xf32, #tpu.memory_space<vmem>>, vector<1x32xf32>
    %72 = vector.broadcast %71 : vector<1x32xf32> to vector<32x32xf32>
    %73 = arith.addf %70, %72 : vector<32x32xf32>
    %74 = arith.addf %7, %73 : vector<32x32xf32>
    %c0_44 = arith.constant 0 : index
    %c0_45 = arith.constant 0 : index
    %75 = vector.load %arg11[%c0_44, %c0_45] : memref<1x32xf32, #tpu.memory_space<vmem>>, vector<1x32xf32>
    %c0_46 = arith.constant 0 : index
    %c0_47 = arith.constant 0 : index
    %76 = vector.load %arg12[%c0_46, %c0_47] : memref<1x32xf32, #tpu.memory_space<vmem>>, vector<1x32xf32>
    %cst_48 = arith.constant dense<0.000000e+00> : vector<32xf32>
    %77 = vector.multi_reduction <add>, %74, %cst_48 [1] : vector<32x32xf32> to vector<32xf32>
    %78 = vector.shape_cast %77 : vector<32xf32> to vector<32x1xf32>
    %cst_49 = arith.constant 3.200000e+01 : f32
    %79 = vector.broadcast %cst_49 : f32 to vector<32x1xf32>
    %80 = arith.divf %78, %79 : vector<32x1xf32>
    %81 = vector.broadcast %80 : vector<32x1xf32> to vector<32x32xf32>
    %82 = arith.subf %74, %81 : vector<32x32xf32>
    %83 = arith.mulf %82, %82 : vector<32x32xf32>
    %cst_50 = arith.constant dense<0.000000e+00> : vector<32xf32>
    %84 = vector.multi_reduction <add>, %83, %cst_50 [1] : vector<32x32xf32> to vector<32xf32>
    %85 = vector.shape_cast %84 : vector<32xf32> to vector<32x1xf32>
    %cst_51 = arith.constant 3.200000e+01 : f32
    %86 = vector.broadcast %cst_51 : f32 to vector<32x1xf32>
    %87 = arith.divf %85, %86 : vector<32x1xf32>
    %88 = vector.broadcast %80 : vector<32x1xf32> to vector<32x32xf32>
    %89 = arith.subf %74, %88 : vector<32x32xf32>
    %cst_52 = arith.constant 9.99999997E-7 : f32
    %90 = vector.broadcast %cst_52 : f32 to vector<32x1xf32>
    %91 = arith.addf %87, %90 : vector<32x1xf32>
    %92 = math.rsqrt %91 : vector<32x1xf32>
    %93 = vector.broadcast %92 : vector<32x1xf32> to vector<32x32xf32>
    %94 = arith.mulf %89, %93 : vector<32x32xf32>
    %95 = vector.broadcast %75 : vector<1x32xf32> to vector<32x32xf32>
    %96 = arith.mulf %94, %95 : vector<32x32xf32>
    %97 = vector.broadcast %76 : vector<1x32xf32> to vector<32x32xf32>
    %98 = arith.addf %96, %97 : vector<32x32xf32>
    %c0_53 = arith.constant 0 : index
    %c0_54 = arith.constant 0 : index
    %99 = vector.load %arg13[%c0_53, %c0_54] : memref<32x64xf32, #tpu.memory_space<vmem>>, vector<32x64xf32>
    %cst_55 = arith.constant dense<0.000000e+00> : vector<32x64xf32>
    %100 = tpu.matmul %98, %99, %cst_55 {dimension_numbers = #tpu.dot_dimension_numbers<[1], [0], [0], [1], [0, 0, 1, 1], [], []>} : vector<32x32xf32>, vector<32x64xf32>, vector<32x64xf32> -> vector<32x64xf32>
    %c0_56 = arith.constant 0 : index
    %c0_57 = arith.constant 0 : index
    %101 = vector.load %arg14[%c0_56, %c0_57] : memref<1x64xf32, #tpu.memory_space<vmem>>, vector<1x64xf32>
    %102 = vector.broadcast %101 : vector<1x64xf32> to vector<32x64xf32>
    %103 = arith.addf %100, %102 : vector<32x64xf32>
    %104 = arith.mulf %103, %103 : vector<32x64xf32>
    %105 = arith.mulf %103, %104 : vector<32x64xf32>
    %cst_58 = arith.constant 4.471500e-02 : f32
    %106 = vector.broadcast %cst_58 : f32 to vector<32x64xf32>
    %107 = arith.mulf %106, %105 : vector<32x64xf32>
    %108 = arith.addf %103, %107 : vector<32x64xf32>
    %cst_59 = arith.constant 0.797884583 : f32
    %109 = vector.broadcast %cst_59 : f32 to vector<32x64xf32>
    %110 = arith.mulf %109, %108 : vector<32x64xf32>
    %111 = math.tanh %110 : vector<32x64xf32>
    %cst_60 = arith.constant 1.000000e+00 : f32
    %112 = vector.broadcast %cst_60 : f32 to vector<32x64xf32>
    %113 = arith.addf %112, %111 : vector<32x64xf32>
    %cst_61 = arith.constant 5.000000e-01 : f32
    %114 = vector.broadcast %cst_61 : f32 to vector<32x64xf32>
    %115 = arith.mulf %114, %113 : vector<32x64xf32>
    %116 = arith.mulf %103, %115 : vector<32x64xf32>
    %c0_62 = arith.constant 0 : index
    %c0_63 = arith.constant 0 : index
    %117 = vector.load %arg15[%c0_62, %c0_63] : memref<64x32xf32, #tpu.memory_space<vmem>>, vector<64x32xf32>
    %cst_64 = arith.constant dense<0.000000e+00> : vector<32x32xf32>
    %118 = tpu.matmul %116, %117, %cst_64 {dimension_numbers = #tpu.dot_dimension_numbers<[1], [0], [0], [1], [0, 0, 1, 1], [], []>} : vector<32x64xf32>, vector<64x32xf32>, vector<32x32xf32> -> vector<32x32xf32>
    %c0_65 = arith.constant 0 : index
    %c0_66 = arith.constant 0 : index
    %119 = vector.load %arg16[%c0_65, %c0_66] : memref<1x32xf32, #tpu.memory_space<vmem>>, vector<1x32xf32>
    %120 = vector.broadcast %119 : vector<1x32xf32> to vector<32x32xf32>
    %121 = arith.addf %118, %120 : vector<32x32xf32>
    %122 = arith.addf %74, %121 : vector<32x32xf32>
    %c0_67 = arith.constant 0 : index
    %c0_68 = arith.constant 0 : index
    %123 = vector.load %arg17[%c0_67, %c0_68] : memref<32x32xf32, #tpu.memory_space<vmem>>, vector<32x32xf32>
    %cst_69 = arith.constant dense<0.000000e+00> : vector<32x32xf32>
    %124 = tpu.matmul %122, %123, %cst_69 {dimension_numbers = #tpu.dot_dimension_numbers<[1], [0], [0], [1], [0, 0, 1, 1], [], []>} : vector<32x32xf32>, vector<32x32xf32>, vector<32x32xf32> -> vector<32x32xf32>
    %c0_70 = arith.constant 0 : index
    %c0_71 = arith.constant 0 : index
    %125 = vector.load %arg18[%c0_70, %c0_71] : memref<1x32xf32, #tpu.memory_space<vmem>>, vector<1x32xf32>
    %c0_72 = arith.constant 0 : index
    %c0_73 = arith.constant 0 : index
    %126 = vector.load %arg19[%c0_72, %c0_73] : memref<1x32xf32, #tpu.memory_space<vmem>>, vector<1x32xf32>
    %cst_74 = arith.constant dense<0.000000e+00> : vector<32xf32>
    %127 = vector.multi_reduction <add>, %124, %cst_74 [1] : vector<32x32xf32> to vector<32xf32>
    %128 = vector.shape_cast %127 : vector<32xf32> to vector<32x1xf32>
    %cst_75 = arith.constant 3.200000e+01 : f32
    %129 = vector.broadcast %cst_75 : f32 to vector<32x1xf32>
    %130 = arith.divf %128, %129 : vector<32x1xf32>
    %131 = vector.broadcast %130 : vector<32x1xf32> to vector<32x32xf32>
    %132 = arith.subf %124, %131 : vector<32x32xf32>
    %133 = arith.mulf %132, %132 : vector<32x32xf32>
    %cst_76 = arith.constant dense<0.000000e+00> : vector<32xf32>
    %134 = vector.multi_reduction <add>, %133, %cst_76 [1] : vector<32x32xf32> to vector<32xf32>
    %135 = vector.shape_cast %134 : vector<32xf32> to vector<32x1xf32>
    %cst_77 = arith.constant 3.200000e+01 : f32
    %136 = vector.broadcast %cst_77 : f32 to vector<32x1xf32>
    %137 = arith.divf %135, %136 : vector<32x1xf32>
    %138 = vector.broadcast %130 : vector<32x1xf32> to vector<32x32xf32>
    %139 = arith.subf %124, %138 : vector<32x32xf32>
    %cst_78 = arith.constant 9.99999997E-7 : f32
    %140 = vector.broadcast %cst_78 : f32 to vector<32x1xf32>
    %141 = arith.addf %137, %140 : vector<32x1xf32>
    %142 = math.rsqrt %141 : vector<32x1xf32>
    %143 = vector.broadcast %142 : vector<32x1xf32> to vector<32x32xf32>
    %144 = arith.mulf %139, %143 : vector<32x32xf32>
    %145 = vector.broadcast %125 : vector<1x32xf32> to vector<32x32xf32>
    %146 = arith.mulf %144, %145 : vector<32x32xf32>
    %147 = vector.broadcast %126 : vector<1x32xf32> to vector<32x32xf32>
    %148 = arith.addf %146, %147 : vector<32x32xf32>
    %c0_79 = arith.constant 0 : index
    %c0_80 = arith.constant 0 : index
    %149 = vector.load %arg1[%c0_79, %c0_80] : memref<16x32xf32, #tpu.memory_space<vmem>>, vector<16x32xf32>
    %c0_81 = arith.constant 0 : index
    %c0_82 = arith.constant 0 : index
    %150 = vector.load %arg20[%c0_81, %c0_82] : memref<1x32xf32, #tpu.memory_space<vmem>>, vector<1x32xf32>
    %151 = vector.broadcast %150 : vector<1x32xf32> to vector<32x32xf32>
    %152 = arith.addf %148, %151 : vector<32x32xf32>
    %c0_83 = arith.constant 0 : index
    %c0_84 = arith.constant 0 : index
    %153 = vector.load %arg21[%c0_83, %c0_84] : memref<32x32xf32, #tpu.memory_space<vmem>>, vector<32x32xf32>
    %c0_85 = arith.constant 0 : index
    %c0_86 = arith.constant 0 : index
    %c0_87 = arith.constant 0 : index
    %c0_88 = arith.constant 0 : index
    %154 = vector.load %arg22[%c0_85, %c0_86, %c0_87, %c0_88] : memref<4x4x32x32xf32, #tpu.memory_space<vmem>>, vector<1x1x32x32xf32>
    %155 = vector.shape_cast %154 : vector<1x1x32x32xf32> to vector<32x32xf32>
    %cst_89 = arith.constant dense<0.000000e+00> : vector<16x32xf32>
    %156 = tpu.matmul %149, %155, %cst_89 {dimension_numbers = #tpu.dot_dimension_numbers<[1], [0], [0], [1], [0, 0, 1, 1], [], []>} : vector<16x32xf32>, vector<32x32xf32>, vector<16x32xf32> -> vector<16x32xf32>
    %c0_90 = arith.constant 0 : index
    %c0_91 = arith.constant 0 : index
    %c0_92 = arith.constant 0 : index
    %c0_93 = arith.constant 0 : index
    %157 = vector.load %arg23[%c0_90, %c0_91, %c0_92, %c0_93] : memref<4x4x1x32xf32, #tpu.memory_space<vmem>>, vector<1x1x1x32xf32>
    %158 = vector.shape_cast %157 : vector<1x1x1x32xf32> to vector<1x32xf32>
    %159 = vector.broadcast %158 : vector<1x32xf32> to vector<16x32xf32>
    %160 = arith.addf %156, %159 : vector<16x32xf32>
    %c0_94 = arith.constant 0 : index
    %c1_95 = arith.constant 1 : index
    %c0_96 = arith.constant 0 : index
    %c0_97 = arith.constant 0 : index
    %161 = vector.load %arg22[%c0_94, %c1_95, %c0_96, %c0_97] : memref<4x4x32x32xf32, #tpu.memory_space<vmem>>, vector<1x1x32x32xf32>
    %162 = vector.shape_cast %161 : vector<1x1x32x32xf32> to vector<32x32xf32>
    %cst_98 = arith.constant dense<0.000000e+00> : vector<16x32xf32>
    %163 = tpu.matmul %149, %162, %cst_98 {dimension_numbers = #tpu.dot_dimension_numbers<[1], [0], [0], [1], [0, 0, 1, 1], [], []>} : vector<16x32xf32>, vector<32x32xf32>, vector<16x32xf32> -> vector<16x32xf32>
    %c0_99 = arith.constant 0 : index
    %c1_100 = arith.constant 1 : index
    %c0_101 = arith.constant 0 : index
    %c0_102 = arith.constant 0 : index
    %164 = vector.load %arg23[%c0_99, %c1_100, %c0_101, %c0_102] : memref<4x4x1x32xf32, #tpu.memory_space<vmem>>, vector<1x1x1x32xf32>
    %165 = vector.shape_cast %164 : vector<1x1x1x32xf32> to vector<1x32xf32>
    %166 = vector.broadcast %165 : vector<1x32xf32> to vector<16x32xf32>
    %167 = arith.addf %163, %166 : vector<16x32xf32>
    %c0_103 = arith.constant 0 : index
    %c2_104 = arith.constant 2 : index
    %c0_105 = arith.constant 0 : index
    %c0_106 = arith.constant 0 : index
    %168 = vector.load %arg22[%c0_103, %c2_104, %c0_105, %c0_106] : memref<4x4x32x32xf32, #tpu.memory_space<vmem>>, vector<1x1x32x32xf32>
    %169 = vector.shape_cast %168 : vector<1x1x32x32xf32> to vector<32x32xf32>
    %cst_107 = arith.constant dense<0.000000e+00> : vector<16x32xf32>
    %170 = tpu.matmul %149, %169, %cst_107 {dimension_numbers = #tpu.dot_dimension_numbers<[1], [0], [0], [1], [0, 0, 1, 1], [], []>} : vector<16x32xf32>, vector<32x32xf32>, vector<16x32xf32> -> vector<16x32xf32>
    %c0_108 = arith.constant 0 : index
    %c2_109 = arith.constant 2 : index
    %c0_110 = arith.constant 0 : index
    %c0_111 = arith.constant 0 : index
    %171 = vector.load %arg23[%c0_108, %c2_109, %c0_110, %c0_111] : memref<4x4x1x32xf32, #tpu.memory_space<vmem>>, vector<1x1x1x32xf32>
    %172 = vector.shape_cast %171 : vector<1x1x1x32xf32> to vector<1x32xf32>
    %173 = vector.broadcast %172 : vector<1x32xf32> to vector<16x32xf32>
    %174 = arith.addf %170, %173 : vector<16x32xf32>
    %175 = vector.shape_cast %160 : vector<16x32xf32> to vector<2x8x32xf32>
    %176 = vector.shape_cast %167 : vector<16x32xf32> to vector<2x8x32xf32>
    %177 = vector.shape_cast %174 : vector<16x32xf32> to vector<2x8x32xf32>
    "tpu.trace_start"() <{level = 10 : i32, message = "bqd,bkd->bqk"}> : () -> ()
    %cst_112 = arith.constant dense<0.000000e+00> : vector<2x8x8xf32>
    %178 = tpu.matmul %175, %176, %cst_112 {dimension_numbers = #tpu.dot_dimension_numbers<[2], [2], [1], [1], [0, 0, 0, 1, 1, 1], [0], [0]>} : vector<2x8x32xf32>, vector<2x8x32xf32>, vector<2x8x8xf32> -> vector<2x8x8xf32>
    "tpu.trace_stop"() : () -> ()
    %cst_113 = arith.constant dense<0xFF800000> : vector<2x8xf32>
    %179 = vector.multi_reduction <maximumf>, %178, %cst_113 [2] : vector<2x8x8xf32> to vector<2x8xf32>
    %180 = vector.shape_cast %179 : vector<2x8xf32> to vector<2x8x1xf32>
    %181 = vector.broadcast %180 : vector<2x8x1xf32> to vector<2x8x8xf32>
    %182 = arith.subf %178, %181 : vector<2x8x8xf32>
    %183 = math.exp %182 : vector<2x8x8xf32>
    %cst_114 = arith.constant dense<0.000000e+00> : vector<2x8xf32>
    %184 = vector.multi_reduction <add>, %183, %cst_114 [2] : vector<2x8x8xf32> to vector<2x8xf32>
    %185 = vector.shape_cast %184 : vector<2x8xf32> to vector<2x8x1xf32>
    %186 = tpu.reciprocal %185 {approx = true} : vector<2x8x1xf32> -> vector<2x8x1xf32>
    %187 = vector.broadcast %186 : vector<2x8x1xf32> to vector<2x8x8xf32>
    %188 = arith.mulf %183, %187 : vector<2x8x8xf32>
    "tpu.trace_start"() <{level = 10 : i32, message = "bqk,bkd->bqd"}> : () -> ()
    %cst_115 = arith.constant dense<0.000000e+00> : vector<2x8x32xf32>
    %189 = tpu.matmul %188, %177, %cst_115 {dimension_numbers = #tpu.dot_dimension_numbers<[2], [1], [1], [2], [0, 0, 0, 1, 1, 2], [0], [0]>} : vector<2x8x8xf32>, vector<2x8x32xf32>, vector<2x8x32xf32> -> vector<2x8x32xf32>
    "tpu.trace_stop"() : () -> ()
    %190 = vector.shape_cast %189 : vector<2x8x32xf32> to vector<16x32xf32>
    %c0_116 = arith.constant 0 : index
    %c3 = arith.constant 3 : index
    %c0_117 = arith.constant 0 : index
    %c0_118 = arith.constant 0 : index
    %191 = vector.load %arg22[%c0_116, %c3, %c0_117, %c0_118] : memref<4x4x32x32xf32, #tpu.memory_space<vmem>>, vector<1x1x32x32xf32>
    %192 = vector.shape_cast %191 : vector<1x1x32x32xf32> to vector<32x32xf32>
    %cst_119 = arith.constant dense<0.000000e+00> : vector<16x32xf32>
    %193 = tpu.matmul %190, %192, %cst_119 {dimension_numbers = #tpu.dot_dimension_numbers<[1], [0], [0], [1], [0, 0, 1, 1], [], []>} : vector<16x32xf32>, vector<32x32xf32>, vector<16x32xf32> -> vector<16x32xf32>
    %c0_120 = arith.constant 0 : index
    %c3_121 = arith.constant 3 : index
    %c0_122 = arith.constant 0 : index
    %c0_123 = arith.constant 0 : index
    %194 = vector.load %arg23[%c0_120, %c3_121, %c0_122, %c0_123] : memref<4x4x1x32xf32, #tpu.memory_space<vmem>>, vector<1x1x1x32xf32>
    %195 = vector.shape_cast %194 : vector<1x1x1x32xf32> to vector<1x32xf32>
    %196 = vector.broadcast %195 : vector<1x32xf32> to vector<16x32xf32>
    %197 = arith.addf %193, %196 : vector<16x32xf32>
    %c0_124 = arith.constant 0 : index
    %c0_125 = arith.constant 0 : index
    %c0_126 = arith.constant 0 : index
    %198 = vector.load %arg24[%c0_124, %c0_125, %c0_126] : memref<5x1x32xf32, #tpu.memory_space<vmem>>, vector<1x1x32xf32>
    %199 = vector.shape_cast %198 : vector<1x1x32xf32> to vector<1x32xf32>
    %c0_127 = arith.constant 0 : index
    %c0_128 = arith.constant 0 : index
    %c0_129 = arith.constant 0 : index
    %200 = vector.load %arg25[%c0_127, %c0_128, %c0_129] : memref<5x1x32xf32, #tpu.memory_space<vmem>>, vector<1x1x32xf32>
    %201 = vector.shape_cast %200 : vector<1x1x32xf32> to vector<1x32xf32>
    %cst_130 = arith.constant dense<0.000000e+00> : vector<16xf32>
    %202 = vector.multi_reduction <add>, %197, %cst_130 [1] : vector<16x32xf32> to vector<16xf32>
    %203 = vector.shape_cast %202 : vector<16xf32> to vector<16x1xf32>
    %cst_131 = arith.constant 3.200000e+01 : f32
    %204 = vector.broadcast %cst_131 : f32 to vector<16x1xf32>
    %205 = arith.divf %203, %204 : vector<16x1xf32>
    %206 = vector.broadcast %205 : vector<16x1xf32> to vector<16x32xf32>
    %207 = arith.subf %197, %206 : vector<16x32xf32>
    %208 = arith.mulf %207, %207 : vector<16x32xf32>
    %cst_132 = arith.constant dense<0.000000e+00> : vector<16xf32>
    %209 = vector.multi_reduction <add>, %208, %cst_132 [1] : vector<16x32xf32> to vector<16xf32>
    %210 = vector.shape_cast %209 : vector<16xf32> to vector<16x1xf32>
    %cst_133 = arith.constant 3.200000e+01 : f32
    %211 = vector.broadcast %cst_133 : f32 to vector<16x1xf32>
    %212 = arith.divf %210, %211 : vector<16x1xf32>
    %213 = vector.broadcast %205 : vector<16x1xf32> to vector<16x32xf32>
    %214 = arith.subf %197, %213 : vector<16x32xf32>
    %cst_134 = arith.constant 9.99999997E-7 : f32
    %215 = vector.broadcast %cst_134 : f32 to vector<16x1xf32>
    %216 = arith.addf %212, %215 : vector<16x1xf32>
    %217 = math.rsqrt %216 : vector<16x1xf32>
    %218 = vector.broadcast %217 : vector<16x1xf32> to vector<16x32xf32>
    %219 = arith.mulf %214, %218 : vector<16x32xf32>
    %220 = vector.broadcast %199 : vector<1x32xf32> to vector<16x32xf32>
    %221 = arith.mulf %219, %220 : vector<16x32xf32>
    %222 = vector.broadcast %201 : vector<1x32xf32> to vector<16x32xf32>
    %223 = arith.addf %221, %222 : vector<16x32xf32>
    %224 = arith.addf %223, %149 : vector<16x32xf32>
    %225 = arith.addf %152, %153 : vector<32x32xf32>
    %c1_135 = arith.constant 1 : index
    %c0_136 = arith.constant 0 : index
    %c0_137 = arith.constant 0 : index
    %c0_138 = arith.constant 0 : index
    %226 = vector.load %arg22[%c1_135, %c0_136, %c0_137, %c0_138] : memref<4x4x32x32xf32, #tpu.memory_space<vmem>>, vector<1x1x32x32xf32>
    %227 = vector.shape_cast %226 : vector<1x1x32x32xf32> to vector<32x32xf32>
    %cst_139 = arith.constant dense<0.000000e+00> : vector<16x32xf32>
    %228 = tpu.matmul %224, %227, %cst_139 {dimension_numbers = #tpu.dot_dimension_numbers<[1], [0], [0], [1], [0, 0, 1, 1], [], []>} : vector<16x32xf32>, vector<32x32xf32>, vector<16x32xf32> -> vector<16x32xf32>
    %c1_140 = arith.constant 1 : index
    %c0_141 = arith.constant 0 : index
    %c0_142 = arith.constant 0 : index
    %c0_143 = arith.constant 0 : index
    %229 = vector.load %arg23[%c1_140, %c0_141, %c0_142, %c0_143] : memref<4x4x1x32xf32, #tpu.memory_space<vmem>>, vector<1x1x1x32xf32>
    %230 = vector.shape_cast %229 : vector<1x1x1x32xf32> to vector<1x32xf32>
    %231 = vector.broadcast %230 : vector<1x32xf32> to vector<16x32xf32>
    %232 = arith.addf %228, %231 : vector<16x32xf32>
    %c1_144 = arith.constant 1 : index
    %c1_145 = arith.constant 1 : index
    %c0_146 = arith.constant 0 : index
    %c0_147 = arith.constant 0 : index
    %233 = vector.load %arg22[%c1_144, %c1_145, %c0_146, %c0_147] : memref<4x4x32x32xf32, #tpu.memory_space<vmem>>, vector<1x1x32x32xf32>
    %234 = vector.shape_cast %233 : vector<1x1x32x32xf32> to vector<32x32xf32>
    %cst_148 = arith.constant dense<0.000000e+00> : vector<32x32xf32>
    %235 = tpu.matmul %225, %234, %cst_148 {dimension_numbers = #tpu.dot_dimension_numbers<[1], [0], [0], [1], [0, 0, 1, 1], [], []>} : vector<32x32xf32>, vector<32x32xf32>, vector<32x32xf32> -> vector<32x32xf32>
    %c1_149 = arith.constant 1 : index
    %c1_150 = arith.constant 1 : index
    %c0_151 = arith.constant 0 : index
    %c0_152 = arith.constant 0 : index
    %236 = vector.load %arg23[%c1_149, %c1_150, %c0_151, %c0_152] : memref<4x4x1x32xf32, #tpu.memory_space<vmem>>, vector<1x1x1x32xf32>
    %237 = vector.shape_cast %236 : vector<1x1x1x32xf32> to vector<1x32xf32>
    %238 = vector.broadcast %237 : vector<1x32xf32> to vector<32x32xf32>
    %239 = arith.addf %235, %238 : vector<32x32xf32>
    %c1_153 = arith.constant 1 : index
    %c2_154 = arith.constant 2 : index
    %c0_155 = arith.constant 0 : index
    %c0_156 = arith.constant 0 : index
    %240 = vector.load %arg22[%c1_153, %c2_154, %c0_155, %c0_156] : memref<4x4x32x32xf32, #tpu.memory_space<vmem>>, vector<1x1x32x32xf32>
    %241 = vector.shape_cast %240 : vector<1x1x32x32xf32> to vector<32x32xf32>
    %cst_157 = arith.constant dense<0.000000e+00> : vector<32x32xf32>
    %242 = tpu.matmul %152, %241, %cst_157 {dimension_numbers = #tpu.dot_dimension_numbers<[1], [0], [0], [1], [0, 0, 1, 1], [], []>} : vector<32x32xf32>, vector<32x32xf32>, vector<32x32xf32> -> vector<32x32xf32>
    %c1_158 = arith.constant 1 : index
    %c2_159 = arith.constant 2 : index
    %c0_160 = arith.constant 0 : index
    %c0_161 = arith.constant 0 : index
    %243 = vector.load %arg23[%c1_158, %c2_159, %c0_160, %c0_161] : memref<4x4x1x32xf32, #tpu.memory_space<vmem>>, vector<1x1x1x32xf32>
    %244 = vector.shape_cast %243 : vector<1x1x1x32xf32> to vector<1x32xf32>
    %245 = vector.broadcast %244 : vector<1x32xf32> to vector<32x32xf32>
    %246 = arith.addf %242, %245 : vector<32x32xf32>
    %247 = vector.shape_cast %232 : vector<16x32xf32> to vector<2x8x32xf32>
    %248 = vector.shape_cast %239 : vector<32x32xf32> to vector<2x16x32xf32>
    %249 = vector.shape_cast %246 : vector<32x32xf32> to vector<2x16x32xf32>
    "tpu.trace_start"() <{level = 10 : i32, message = "bqd,bkd->bqk"}> : () -> ()
    %cst_162 = arith.constant dense<0.000000e+00> : vector<2x8x16xf32>
    %250 = tpu.matmul %247, %248, %cst_162 {dimension_numbers = #tpu.dot_dimension_numbers<[2], [2], [1], [1], [0, 0, 0, 1, 1, 1], [0], [0]>} : vector<2x8x32xf32>, vector<2x16x32xf32>, vector<2x8x16xf32> -> vector<2x8x16xf32>
    "tpu.trace_stop"() : () -> ()
    %cst_163 = arith.constant dense<0xFF800000> : vector<2x8xf32>
    %251 = vector.multi_reduction <maximumf>, %250, %cst_163 [2] : vector<2x8x16xf32> to vector<2x8xf32>
    %252 = vector.shape_cast %251 : vector<2x8xf32> to vector<2x8x1xf32>
    %253 = vector.broadcast %252 : vector<2x8x1xf32> to vector<2x8x16xf32>
    %254 = arith.subf %250, %253 : vector<2x8x16xf32>
    %255 = math.exp %254 : vector<2x8x16xf32>
    %cst_164 = arith.constant dense<0.000000e+00> : vector<2x8xf32>
    %256 = vector.multi_reduction <add>, %255, %cst_164 [2] : vector<2x8x16xf32> to vector<2x8xf32>
    %257 = vector.shape_cast %256 : vector<2x8xf32> to vector<2x8x1xf32>
    %258 = tpu.reciprocal %257 {approx = true} : vector<2x8x1xf32> -> vector<2x8x1xf32>
    %259 = vector.broadcast %258 : vector<2x8x1xf32> to vector<2x8x16xf32>
    %260 = arith.mulf %255, %259 : vector<2x8x16xf32>
    "tpu.trace_start"() <{level = 10 : i32, message = "bqk,bkd->bqd"}> : () -> ()
    %cst_165 = arith.constant dense<0.000000e+00> : vector<2x8x32xf32>
    %261 = tpu.matmul %260, %249, %cst_165 {dimension_numbers = #tpu.dot_dimension_numbers<[2], [1], [1], [2], [0, 0, 0, 1, 1, 2], [0], [0]>} : vector<2x8x16xf32>, vector<2x16x32xf32>, vector<2x8x32xf32> -> vector<2x8x32xf32>
    "tpu.trace_stop"() : () -> ()
    %262 = vector.shape_cast %261 : vector<2x8x32xf32> to vector<16x32xf32>
    %c1_166 = arith.constant 1 : index
    %c3_167 = arith.constant 3 : index
    %c0_168 = arith.constant 0 : index
    %c0_169 = arith.constant 0 : index
    %263 = vector.load %arg22[%c1_166, %c3_167, %c0_168, %c0_169] : memref<4x4x32x32xf32, #tpu.memory_space<vmem>>, vector<1x1x32x32xf32>
    %264 = vector.shape_cast %263 : vector<1x1x32x32xf32> to vector<32x32xf32>
    %cst_170 = arith.constant dense<0.000000e+00> : vector<16x32xf32>
    %265 = tpu.matmul %262, %264, %cst_170 {dimension_numbers = #tpu.dot_dimension_numbers<[1], [0], [0], [1], [0, 0, 1, 1], [], []>} : vector<16x32xf32>, vector<32x32xf32>, vector<16x32xf32> -> vector<16x32xf32>
    %c1_171 = arith.constant 1 : index
    %c3_172 = arith.constant 3 : index
    %c0_173 = arith.constant 0 : index
    %c0_174 = arith.constant 0 : index
    %266 = vector.load %arg23[%c1_171, %c3_172, %c0_173, %c0_174] : memref<4x4x1x32xf32, #tpu.memory_space<vmem>>, vector<1x1x1x32xf32>
    %267 = vector.shape_cast %266 : vector<1x1x1x32xf32> to vector<1x32xf32>
    %268 = vector.broadcast %267 : vector<1x32xf32> to vector<16x32xf32>
    %269 = arith.addf %265, %268 : vector<16x32xf32>
    %270 = arith.addf %223, %269 : vector<16x32xf32>
    %c1_175 = arith.constant 1 : index
    %c0_176 = arith.constant 0 : index
    %c0_177 = arith.constant 0 : index
    %271 = vector.load %arg24[%c1_175, %c0_176, %c0_177] : memref<5x1x32xf32, #tpu.memory_space<vmem>>, vector<1x1x32xf32>
    %272 = vector.shape_cast %271 : vector<1x1x32xf32> to vector<1x32xf32>
    %c1_178 = arith.constant 1 : index
    %c0_179 = arith.constant 0 : index
    %c0_180 = arith.constant 0 : index
    %273 = vector.load %arg25[%c1_178, %c0_179, %c0_180] : memref<5x1x32xf32, #tpu.memory_space<vmem>>, vector<1x1x32xf32>
    %274 = vector.shape_cast %273 : vector<1x1x32xf32> to vector<1x32xf32>
    %cst_181 = arith.constant dense<0.000000e+00> : vector<16xf32>
    %275 = vector.multi_reduction <add>, %270, %cst_181 [1] : vector<16x32xf32> to vector<16xf32>
    %276 = vector.shape_cast %275 : vector<16xf32> to vector<16x1xf32>
    %cst_182 = arith.constant 3.200000e+01 : f32
    %277 = vector.broadcast %cst_182 : f32 to vector<16x1xf32>
    %278 = arith.divf %276, %277 : vector<16x1xf32>
    %279 = vector.broadcast %278 : vector<16x1xf32> to vector<16x32xf32>
    %280 = arith.subf %270, %279 : vector<16x32xf32>
    %281 = arith.mulf %280, %280 : vector<16x32xf32>
    %cst_183 = arith.constant dense<0.000000e+00> : vector<16xf32>
    %282 = vector.multi_reduction <add>, %281, %cst_183 [1] : vector<16x32xf32> to vector<16xf32>
    %283 = vector.shape_cast %282 : vector<16xf32> to vector<16x1xf32>
    %cst_184 = arith.constant 3.200000e+01 : f32
    %284 = vector.broadcast %cst_184 : f32 to vector<16x1xf32>
    %285 = arith.divf %283, %284 : vector<16x1xf32>
    %286 = vector.broadcast %278 : vector<16x1xf32> to vector<16x32xf32>
    %287 = arith.subf %270, %286 : vector<16x32xf32>
    %cst_185 = arith.constant 9.99999997E-7 : f32
    %288 = vector.broadcast %cst_185 : f32 to vector<16x1xf32>
    %289 = arith.addf %285, %288 : vector<16x1xf32>
    %290 = math.rsqrt %289 : vector<16x1xf32>
    %291 = vector.broadcast %290 : vector<16x1xf32> to vector<16x32xf32>
    %292 = arith.mulf %287, %291 : vector<16x32xf32>
    %293 = vector.broadcast %272 : vector<1x32xf32> to vector<16x32xf32>
    %294 = arith.mulf %292, %293 : vector<16x32xf32>
    %295 = vector.broadcast %274 : vector<1x32xf32> to vector<16x32xf32>
    %296 = arith.addf %294, %295 : vector<16x32xf32>
    %c0_186 = arith.constant 0 : index
    %c0_187 = arith.constant 0 : index
    %297 = vector.load %arg26[%c0_186, %c0_187] : memref<32x64xf32, #tpu.memory_space<vmem>>, vector<32x64xf32>
    %cst_188 = arith.constant dense<0.000000e+00> : vector<16x64xf32>
    %298 = tpu.matmul %296, %297, %cst_188 {dimension_numbers = #tpu.dot_dimension_numbers<[1], [0], [0], [1], [0, 0, 1, 1], [], []>} : vector<16x32xf32>, vector<32x64xf32>, vector<16x64xf32> -> vector<16x64xf32>
    %c0_189 = arith.constant 0 : index
    %c0_190 = arith.constant 0 : index
    %299 = vector.load %arg27[%c0_189, %c0_190] : memref<1x64xf32, #tpu.memory_space<vmem>>, vector<1x64xf32>
    %300 = vector.broadcast %299 : vector<1x64xf32> to vector<16x64xf32>
    %301 = arith.addf %298, %300 : vector<16x64xf32>
    %cst_191 = arith.constant 0.000000e+00 : f32
    %302 = vector.broadcast %cst_191 : f32 to vector<16x64xf32>
    %303 = arith.maximumf %301, %302 : vector<16x64xf32>
    %c0_192 = arith.constant 0 : index
    %c0_193 = arith.constant 0 : index
    %304 = vector.load %arg28[%c0_192, %c0_193] : memref<64x32xf32, #tpu.memory_space<vmem>>, vector<64x32xf32>
    %cst_194 = arith.constant dense<0.000000e+00> : vector<16x32xf32>
    %305 = tpu.matmul %303, %304, %cst_194 {dimension_numbers = #tpu.dot_dimension_numbers<[1], [0], [0], [1], [0, 0, 1, 1], [], []>} : vector<16x64xf32>, vector<64x32xf32>, vector<16x32xf32> -> vector<16x32xf32>
    %c0_195 = arith.constant 0 : index
    %c0_196 = arith.constant 0 : index
    %306 = vector.load %arg29[%c0_195, %c0_196] : memref<1x32xf32, #tpu.memory_space<vmem>>, vector<1x32xf32>
    %307 = vector.broadcast %306 : vector<1x32xf32> to vector<16x32xf32>
    %308 = arith.addf %305, %307 : vector<16x32xf32>
    %309 = arith.addf %296, %308 : vector<16x32xf32>
    %c2_197 = arith.constant 2 : index
    %c0_198 = arith.constant 0 : index
    %c0_199 = arith.constant 0 : index
    %310 = vector.load %arg24[%c2_197, %c0_198, %c0_199] : memref<5x1x32xf32, #tpu.memory_space<vmem>>, vector<1x1x32xf32>
    %311 = vector.shape_cast %310 : vector<1x1x32xf32> to vector<1x32xf32>
    %c2_200 = arith.constant 2 : index
    %c0_201 = arith.constant 0 : index
    %c0_202 = arith.constant 0 : index
    %312 = vector.load %arg25[%c2_200, %c0_201, %c0_202] : memref<5x1x32xf32, #tpu.memory_space<vmem>>, vector<1x1x32xf32>
    %313 = vector.shape_cast %312 : vector<1x1x32xf32> to vector<1x32xf32>
    %cst_203 = arith.constant dense<0.000000e+00> : vector<16xf32>
    %314 = vector.multi_reduction <add>, %309, %cst_203 [1] : vector<16x32xf32> to vector<16xf32>
    %315 = vector.shape_cast %314 : vector<16xf32> to vector<16x1xf32>
    %cst_204 = arith.constant 3.200000e+01 : f32
    %316 = vector.broadcast %cst_204 : f32 to vector<16x1xf32>
    %317 = arith.divf %315, %316 : vector<16x1xf32>
    %318 = vector.broadcast %317 : vector<16x1xf32> to vector<16x32xf32>
    %319 = arith.subf %309, %318 : vector<16x32xf32>
    %320 = arith.mulf %319, %319 : vector<16x32xf32>
    %cst_205 = arith.constant dense<0.000000e+00> : vector<16xf32>
    %321 = vector.multi_reduction <add>, %320, %cst_205 [1] : vector<16x32xf32> to vector<16xf32>
    %322 = vector.shape_cast %321 : vector<16xf32> to vector<16x1xf32>
    %cst_206 = arith.constant 3.200000e+01 : f32
    %323 = vector.broadcast %cst_206 : f32 to vector<16x1xf32>
    %324 = arith.divf %322, %323 : vector<16x1xf32>
    %325 = vector.broadcast %317 : vector<16x1xf32> to vector<16x32xf32>
    %326 = arith.subf %309, %325 : vector<16x32xf32>
    %cst_207 = arith.constant 9.99999997E-7 : f32
    %327 = vector.broadcast %cst_207 : f32 to vector<16x1xf32>
    %328 = arith.addf %324, %327 : vector<16x1xf32>
    %329 = math.rsqrt %328 : vector<16x1xf32>
    %330 = vector.broadcast %329 : vector<16x1xf32> to vector<16x32xf32>
    %331 = arith.mulf %326, %330 : vector<16x32xf32>
    %332 = vector.broadcast %311 : vector<1x32xf32> to vector<16x32xf32>
    %333 = arith.mulf %331, %332 : vector<16x32xf32>
    %334 = vector.broadcast %313 : vector<1x32xf32> to vector<16x32xf32>
    %335 = arith.addf %333, %334 : vector<16x32xf32>
    %336 = arith.addf %152, %153 : vector<32x32xf32>
    %337 = arith.addf %335, %149 : vector<16x32xf32>
    %c2_208 = arith.constant 2 : index
    %c0_209 = arith.constant 0 : index
    %c0_210 = arith.constant 0 : index
    %c0_211 = arith.constant 0 : index
    %338 = vector.load %arg22[%c2_208, %c0_209, %c0_210, %c0_211] : memref<4x4x32x32xf32, #tpu.memory_space<vmem>>, vector<1x1x32x32xf32>
    %339 = vector.shape_cast %338 : vector<1x1x32x32xf32> to vector<32x32xf32>
    %cst_212 = arith.constant dense<0.000000e+00> : vector<32x32xf32>
    %340 = tpu.matmul %336, %339, %cst_212 {dimension_numbers = #tpu.dot_dimension_numbers<[1], [0], [0], [1], [0, 0, 1, 1], [], []>} : vector<32x32xf32>, vector<32x32xf32>, vector<32x32xf32> -> vector<32x32xf32>
    %c2_213 = arith.constant 2 : index
    %c0_214 = arith.constant 0 : index
    %c0_215 = arith.constant 0 : index
    %c0_216 = arith.constant 0 : index
    %341 = vector.load %arg23[%c2_213, %c0_214, %c0_215, %c0_216] : memref<4x4x1x32xf32, #tpu.memory_space<vmem>>, vector<1x1x1x32xf32>
    %342 = vector.shape_cast %341 : vector<1x1x1x32xf32> to vector<1x32xf32>
    %343 = vector.broadcast %342 : vector<1x32xf32> to vector<32x32xf32>
    %344 = arith.addf %340, %343 : vector<32x32xf32>
    %c2_217 = arith.constant 2 : index
    %c1_218 = arith.constant 1 : index
    %c0_219 = arith.constant 0 : index
    %c0_220 = arith.constant 0 : index
    %345 = vector.load %arg22[%c2_217, %c1_218, %c0_219, %c0_220] : memref<4x4x32x32xf32, #tpu.memory_space<vmem>>, vector<1x1x32x32xf32>
    %346 = vector.shape_cast %345 : vector<1x1x32x32xf32> to vector<32x32xf32>
    %cst_221 = arith.constant dense<0.000000e+00> : vector<16x32xf32>
    %347 = tpu.matmul %337, %346, %cst_221 {dimension_numbers = #tpu.dot_dimension_numbers<[1], [0], [0], [1], [0, 0, 1, 1], [], []>} : vector<16x32xf32>, vector<32x32xf32>, vector<16x32xf32> -> vector<16x32xf32>
    %c2_222 = arith.constant 2 : index
    %c1_223 = arith.constant 1 : index
    %c0_224 = arith.constant 0 : index
    %c0_225 = arith.constant 0 : index
    %348 = vector.load %arg23[%c2_222, %c1_223, %c0_224, %c0_225] : memref<4x4x1x32xf32, #tpu.memory_space<vmem>>, vector<1x1x1x32xf32>
    %349 = vector.shape_cast %348 : vector<1x1x1x32xf32> to vector<1x32xf32>
    %350 = vector.broadcast %349 : vector<1x32xf32> to vector<16x32xf32>
    %351 = arith.addf %347, %350 : vector<16x32xf32>
    %c2_226 = arith.constant 2 : index
    %c2_227 = arith.constant 2 : index
    %c0_228 = arith.constant 0 : index
    %c0_229 = arith.constant 0 : index
    %352 = vector.load %arg22[%c2_226, %c2_227, %c0_228, %c0_229] : memref<4x4x32x32xf32, #tpu.memory_space<vmem>>, vector<1x1x32x32xf32>
    %353 = vector.shape_cast %352 : vector<1x1x32x32xf32> to vector<32x32xf32>
    %cst_230 = arith.constant dense<0.000000e+00> : vector<16x32xf32>
    %354 = tpu.matmul %335, %353, %cst_230 {dimension_numbers = #tpu.dot_dimension_numbers<[1], [0], [0], [1], [0, 0, 1, 1], [], []>} : vector<16x32xf32>, vector<32x32xf32>, vector<16x32xf32> -> vector<16x32xf32>
    %c2_231 = arith.constant 2 : index
    %c2_232 = arith.constant 2 : index
    %c0_233 = arith.constant 0 : index
    %c0_234 = arith.constant 0 : index
    %355 = vector.load %arg23[%c2_231, %c2_232, %c0_233, %c0_234] : memref<4x4x1x32xf32, #tpu.memory_space<vmem>>, vector<1x1x1x32xf32>
    %356 = vector.shape_cast %355 : vector<1x1x1x32xf32> to vector<1x32xf32>
    %357 = vector.broadcast %356 : vector<1x32xf32> to vector<16x32xf32>
    %358 = arith.addf %354, %357 : vector<16x32xf32>
    %359 = vector.shape_cast %344 : vector<32x32xf32> to vector<2x16x32xf32>
    %360 = vector.shape_cast %351 : vector<16x32xf32> to vector<2x8x32xf32>
    %361 = vector.shape_cast %358 : vector<16x32xf32> to vector<2x8x32xf32>
    "tpu.trace_start"() <{level = 10 : i32, message = "bqd,bkd->bqk"}> : () -> ()
    %cst_235 = arith.constant dense<0.000000e+00> : vector<2x16x8xf32>
    %362 = tpu.matmul %359, %360, %cst_235 {dimension_numbers = #tpu.dot_dimension_numbers<[2], [2], [1], [1], [0, 0, 0, 1, 1, 1], [0], [0]>} : vector<2x16x32xf32>, vector<2x8x32xf32>, vector<2x16x8xf32> -> vector<2x16x8xf32>
    "tpu.trace_stop"() : () -> ()
    %cst_236 = arith.constant dense<0xFF800000> : vector<2x16xf32>
    %363 = vector.multi_reduction <maximumf>, %362, %cst_236 [2] : vector<2x16x8xf32> to vector<2x16xf32>
    %364 = vector.shape_cast %363 : vector<2x16xf32> to vector<2x16x1xf32>
    %365 = vector.broadcast %364 : vector<2x16x1xf32> to vector<2x16x8xf32>
    %366 = arith.subf %362, %365 : vector<2x16x8xf32>
    %367 = math.exp %366 : vector<2x16x8xf32>
    %cst_237 = arith.constant dense<0.000000e+00> : vector<2x16xf32>
    %368 = vector.multi_reduction <add>, %367, %cst_237 [2] : vector<2x16x8xf32> to vector<2x16xf32>
    %369 = vector.shape_cast %368 : vector<2x16xf32> to vector<2x16x1xf32>
    %370 = tpu.reciprocal %369 {approx = true} : vector<2x16x1xf32> -> vector<2x16x1xf32>
    %371 = vector.broadcast %370 : vector<2x16x1xf32> to vector<2x16x8xf32>
    %372 = arith.mulf %367, %371 : vector<2x16x8xf32>
    "tpu.trace_start"() <{level = 10 : i32, message = "bqk,bkd->bqd"}> : () -> ()
    %cst_238 = arith.constant dense<0.000000e+00> : vector<2x16x32xf32>
    %373 = tpu.matmul %372, %361, %cst_238 {dimension_numbers = #tpu.dot_dimension_numbers<[2], [1], [1], [2], [0, 0, 0, 1, 1, 2], [0], [0]>} : vector<2x16x8xf32>, vector<2x8x32xf32>, vector<2x16x32xf32> -> vector<2x16x32xf32>
    "tpu.trace_stop"() : () -> ()
    %374 = vector.shape_cast %373 : vector<2x16x32xf32> to vector<32x32xf32>
    %c2_239 = arith.constant 2 : index
    %c3_240 = arith.constant 3 : index
    %c0_241 = arith.constant 0 : index
    %c0_242 = arith.constant 0 : index
    %375 = vector.load %arg22[%c2_239, %c3_240, %c0_241, %c0_242] : memref<4x4x32x32xf32, #tpu.memory_space<vmem>>, vector<1x1x32x32xf32>
    %376 = vector.shape_cast %375 : vector<1x1x32x32xf32> to vector<32x32xf32>
    %cst_243 = arith.constant dense<0.000000e+00> : vector<32x32xf32>
    %377 = tpu.matmul %374, %376, %cst_243 {dimension_numbers = #tpu.dot_dimension_numbers<[1], [0], [0], [1], [0, 0, 1, 1], [], []>} : vector<32x32xf32>, vector<32x32xf32>, vector<32x32xf32> -> vector<32x32xf32>
    %c2_244 = arith.constant 2 : index
    %c3_245 = arith.constant 3 : index
    %c0_246 = arith.constant 0 : index
    %c0_247 = arith.constant 0 : index
    %378 = vector.load %arg23[%c2_244, %c3_245, %c0_246, %c0_247] : memref<4x4x1x32xf32, #tpu.memory_space<vmem>>, vector<1x1x1x32xf32>
    %379 = vector.shape_cast %378 : vector<1x1x1x32xf32> to vector<1x32xf32>
    %380 = vector.broadcast %379 : vector<1x32xf32> to vector<32x32xf32>
    %381 = arith.addf %377, %380 : vector<32x32xf32>
    %382 = arith.addf %152, %381 : vector<32x32xf32>
    %c3_248 = arith.constant 3 : index
    %c0_249 = arith.constant 0 : index
    %c0_250 = arith.constant 0 : index
    %383 = vector.load %arg24[%c3_248, %c0_249, %c0_250] : memref<5x1x32xf32, #tpu.memory_space<vmem>>, vector<1x1x32xf32>
    %384 = vector.shape_cast %383 : vector<1x1x32xf32> to vector<1x32xf32>
    %c3_251 = arith.constant 3 : index
    %c0_252 = arith.constant 0 : index
    %c0_253 = arith.constant 0 : index
    %385 = vector.load %arg25[%c3_251, %c0_252, %c0_253] : memref<5x1x32xf32, #tpu.memory_space<vmem>>, vector<1x1x32xf32>
    %386 = vector.shape_cast %385 : vector<1x1x32xf32> to vector<1x32xf32>
    %cst_254 = arith.constant dense<0.000000e+00> : vector<32xf32>
    %387 = vector.multi_reduction <add>, %382, %cst_254 [1] : vector<32x32xf32> to vector<32xf32>
    %388 = vector.shape_cast %387 : vector<32xf32> to vector<32x1xf32>
    %cst_255 = arith.constant 3.200000e+01 : f32
    %389 = vector.broadcast %cst_255 : f32 to vector<32x1xf32>
    %390 = arith.divf %388, %389 : vector<32x1xf32>
    %391 = vector.broadcast %390 : vector<32x1xf32> to vector<32x32xf32>
    %392 = arith.subf %382, %391 : vector<32x32xf32>
    %393 = arith.mulf %392, %392 : vector<32x32xf32>
    %cst_256 = arith.constant dense<0.000000e+00> : vector<32xf32>
    %394 = vector.multi_reduction <add>, %393, %cst_256 [1] : vector<32x32xf32> to vector<32xf32>
    %395 = vector.shape_cast %394 : vector<32xf32> to vector<32x1xf32>
    %cst_257 = arith.constant 3.200000e+01 : f32
    %396 = vector.broadcast %cst_257 : f32 to vector<32x1xf32>
    %397 = arith.divf %395, %396 : vector<32x1xf32>
    %398 = vector.broadcast %390 : vector<32x1xf32> to vector<32x32xf32>
    %399 = arith.subf %382, %398 : vector<32x32xf32>
    %cst_258 = arith.constant 9.99999997E-7 : f32
    %400 = vector.broadcast %cst_258 : f32 to vector<32x1xf32>
    %401 = arith.addf %397, %400 : vector<32x1xf32>
    %402 = math.rsqrt %401 : vector<32x1xf32>
    %403 = vector.broadcast %402 : vector<32x1xf32> to vector<32x32xf32>
    %404 = arith.mulf %399, %403 : vector<32x32xf32>
    %405 = vector.broadcast %384 : vector<1x32xf32> to vector<32x32xf32>
    %406 = arith.mulf %404, %405 : vector<32x32xf32>
    %407 = vector.broadcast %386 : vector<1x32xf32> to vector<32x32xf32>
    %408 = arith.addf %406, %407 : vector<32x32xf32>
    %409 = arith.addf %335, %149 : vector<16x32xf32>
    %410 = arith.addf %408, %153 : vector<32x32xf32>
    %c3_259 = arith.constant 3 : index
    %c0_260 = arith.constant 0 : index
    %c0_261 = arith.constant 0 : index
    %c0_262 = arith.constant 0 : index
    %411 = vector.load %arg22[%c3_259, %c0_260, %c0_261, %c0_262] : memref<4x4x32x32xf32, #tpu.memory_space<vmem>>, vector<1x1x32x32xf32>
    %412 = vector.shape_cast %411 : vector<1x1x32x32xf32> to vector<32x32xf32>
    %cst_263 = arith.constant dense<0.000000e+00> : vector<16x32xf32>
    %413 = tpu.matmul %409, %412, %cst_263 {dimension_numbers = #tpu.dot_dimension_numbers<[1], [0], [0], [1], [0, 0, 1, 1], [], []>} : vector<16x32xf32>, vector<32x32xf32>, vector<16x32xf32> -> vector<16x32xf32>
    %c3_264 = arith.constant 3 : index
    %c0_265 = arith.constant 0 : index
    %c0_266 = arith.constant 0 : index
    %c0_267 = arith.constant 0 : index
    %414 = vector.load %arg23[%c3_264, %c0_265, %c0_266, %c0_267] : memref<4x4x1x32xf32, #tpu.memory_space<vmem>>, vector<1x1x1x32xf32>
    %415 = vector.shape_cast %414 : vector<1x1x1x32xf32> to vector<1x32xf32>
    %416 = vector.broadcast %415 : vector<1x32xf32> to vector<16x32xf32>
    %417 = arith.addf %413, %416 : vector<16x32xf32>
    %c3_268 = arith.constant 3 : index
    %c1_269 = arith.constant 1 : index
    %c0_270 = arith.constant 0 : index
    %c0_271 = arith.constant 0 : index
    %418 = vector.load %arg22[%c3_268, %c1_269, %c0_270, %c0_271] : memref<4x4x32x32xf32, #tpu.memory_space<vmem>>, vector<1x1x32x32xf32>
    %419 = vector.shape_cast %418 : vector<1x1x32x32xf32> to vector<32x32xf32>
    %cst_272 = arith.constant dense<0.000000e+00> : vector<32x32xf32>
    %420 = tpu.matmul %410, %419, %cst_272 {dimension_numbers = #tpu.dot_dimension_numbers<[1], [0], [0], [1], [0, 0, 1, 1], [], []>} : vector<32x32xf32>, vector<32x32xf32>, vector<32x32xf32> -> vector<32x32xf32>
    %c3_273 = arith.constant 3 : index
    %c1_274 = arith.constant 1 : index
    %c0_275 = arith.constant 0 : index
    %c0_276 = arith.constant 0 : index
    %421 = vector.load %arg23[%c3_273, %c1_274, %c0_275, %c0_276] : memref<4x4x1x32xf32, #tpu.memory_space<vmem>>, vector<1x1x1x32xf32>
    %422 = vector.shape_cast %421 : vector<1x1x1x32xf32> to vector<1x32xf32>
    %423 = vector.broadcast %422 : vector<1x32xf32> to vector<32x32xf32>
    %424 = arith.addf %420, %423 : vector<32x32xf32>
    %c3_277 = arith.constant 3 : index
    %c2_278 = arith.constant 2 : index
    %c0_279 = arith.constant 0 : index
    %c0_280 = arith.constant 0 : index
    %425 = vector.load %arg22[%c3_277, %c2_278, %c0_279, %c0_280] : memref<4x4x32x32xf32, #tpu.memory_space<vmem>>, vector<1x1x32x32xf32>
    %426 = vector.shape_cast %425 : vector<1x1x32x32xf32> to vector<32x32xf32>
    %cst_281 = arith.constant dense<0.000000e+00> : vector<32x32xf32>
    %427 = tpu.matmul %408, %426, %cst_281 {dimension_numbers = #tpu.dot_dimension_numbers<[1], [0], [0], [1], [0, 0, 1, 1], [], []>} : vector<32x32xf32>, vector<32x32xf32>, vector<32x32xf32> -> vector<32x32xf32>
    %c3_282 = arith.constant 3 : index
    %c2_283 = arith.constant 2 : index
    %c0_284 = arith.constant 0 : index
    %c0_285 = arith.constant 0 : index
    %428 = vector.load %arg23[%c3_282, %c2_283, %c0_284, %c0_285] : memref<4x4x1x32xf32, #tpu.memory_space<vmem>>, vector<1x1x1x32xf32>
    %429 = vector.shape_cast %428 : vector<1x1x1x32xf32> to vector<1x32xf32>
    %430 = vector.broadcast %429 : vector<1x32xf32> to vector<32x32xf32>
    %431 = arith.addf %427, %430 : vector<32x32xf32>
    %432 = vector.shape_cast %417 : vector<16x32xf32> to vector<2x8x32xf32>
    %433 = vector.shape_cast %424 : vector<32x32xf32> to vector<2x16x32xf32>
    %434 = vector.shape_cast %431 : vector<32x32xf32> to vector<2x16x32xf32>
    "tpu.trace_start"() <{level = 10 : i32, message = "bqd,bkd->bqk"}> : () -> ()
    %cst_286 = arith.constant dense<0.000000e+00> : vector<2x8x16xf32>
    %435 = tpu.matmul %432, %433, %cst_286 {dimension_numbers = #tpu.dot_dimension_numbers<[2], [2], [1], [1], [0, 0, 0, 1, 1, 1], [0], [0]>} : vector<2x8x32xf32>, vector<2x16x32xf32>, vector<2x8x16xf32> -> vector<2x8x16xf32>
    "tpu.trace_stop"() : () -> ()
    %cst_287 = arith.constant dense<0xFF800000> : vector<2x8xf32>
    %436 = vector.multi_reduction <maximumf>, %435, %cst_287 [2] : vector<2x8x16xf32> to vector<2x8xf32>
    %437 = vector.shape_cast %436 : vector<2x8xf32> to vector<2x8x1xf32>
    %438 = vector.broadcast %437 : vector<2x8x1xf32> to vector<2x8x16xf32>
    %439 = arith.subf %435, %438 : vector<2x8x16xf32>
    %440 = math.exp %439 : vector<2x8x16xf32>
    %cst_288 = arith.constant dense<0.000000e+00> : vector<2x8xf32>
    %441 = vector.multi_reduction <add>, %440, %cst_288 [2] : vector<2x8x16xf32> to vector<2x8xf32>
    %442 = vector.shape_cast %441 : vector<2x8xf32> to vector<2x8x1xf32>
    %443 = tpu.reciprocal %442 {approx = true} : vector<2x8x1xf32> -> vector<2x8x1xf32>
    %444 = vector.broadcast %443 : vector<2x8x1xf32> to vector<2x8x16xf32>
    %445 = arith.mulf %440, %444 : vector<2x8x16xf32>
    "tpu.trace_start"() <{level = 10 : i32, message = "bqk,bkd->bqd"}> : () -> ()
    %cst_289 = arith.constant dense<0.000000e+00> : vector<2x8x32xf32>
    %446 = tpu.matmul %445, %434, %cst_289 {dimension_numbers = #tpu.dot_dimension_numbers<[2], [1], [1], [2], [0, 0, 0, 1, 1, 2], [0], [0]>} : vector<2x8x16xf32>, vector<2x16x32xf32>, vector<2x8x32xf32> -> vector<2x8x32xf32>
    "tpu.trace_stop"() : () -> ()
    %447 = vector.shape_cast %446 : vector<2x8x32xf32> to vector<16x32xf32>
    %c3_290 = arith.constant 3 : index
    %c3_291 = arith.constant 3 : index
    %c0_292 = arith.constant 0 : index
    %c0_293 = arith.constant 0 : index
    %448 = vector.load %arg22[%c3_290, %c3_291, %c0_292, %c0_293] : memref<4x4x32x32xf32, #tpu.memory_space<vmem>>, vector<1x1x32x32xf32>
    %449 = vector.shape_cast %448 : vector<1x1x32x32xf32> to vector<32x32xf32>
    %cst_294 = arith.constant dense<0.000000e+00> : vector<16x32xf32>
    %450 = tpu.matmul %447, %449, %cst_294 {dimension_numbers = #tpu.dot_dimension_numbers<[1], [0], [0], [1], [0, 0, 1, 1], [], []>} : vector<16x32xf32>, vector<32x32xf32>, vector<16x32xf32> -> vector<16x32xf32>
    %c3_295 = arith.constant 3 : index
    %c3_296 = arith.constant 3 : index
    %c0_297 = arith.constant 0 : index
    %c0_298 = arith.constant 0 : index
    %451 = vector.load %arg23[%c3_295, %c3_296, %c0_297, %c0_298] : memref<4x4x1x32xf32, #tpu.memory_space<vmem>>, vector<1x1x1x32xf32>
    %452 = vector.shape_cast %451 : vector<1x1x1x32xf32> to vector<1x32xf32>
    %453 = vector.broadcast %452 : vector<1x32xf32> to vector<16x32xf32>
    %454 = arith.addf %450, %453 : vector<16x32xf32>
    %455 = arith.addf %335, %454 : vector<16x32xf32>
    %c4 = arith.constant 4 : index
    %c0_299 = arith.constant 0 : index
    %c0_300 = arith.constant 0 : index
    %456 = vector.load %arg24[%c4, %c0_299, %c0_300] : memref<5x1x32xf32, #tpu.memory_space<vmem>>, vector<1x1x32xf32>
    %457 = vector.shape_cast %456 : vector<1x1x32xf32> to vector<1x32xf32>
    %c4_301 = arith.constant 4 : index
    %c0_302 = arith.constant 0 : index
    %c0_303 = arith.constant 0 : index
    %458 = vector.load %arg25[%c4_301, %c0_302, %c0_303] : memref<5x1x32xf32, #tpu.memory_space<vmem>>, vector<1x1x32xf32>
    %459 = vector.shape_cast %458 : vector<1x1x32xf32> to vector<1x32xf32>
    %cst_304 = arith.constant dense<0.000000e+00> : vector<16xf32>
    %460 = vector.multi_reduction <add>, %455, %cst_304 [1] : vector<16x32xf32> to vector<16xf32>
    %461 = vector.shape_cast %460 : vector<16xf32> to vector<16x1xf32>
    %cst_305 = arith.constant 3.200000e+01 : f32
    %462 = vector.broadcast %cst_305 : f32 to vector<16x1xf32>
    %463 = arith.divf %461, %462 : vector<16x1xf32>
    %464 = vector.broadcast %463 : vector<16x1xf32> to vector<16x32xf32>
    %465 = arith.subf %455, %464 : vector<16x32xf32>
    %466 = arith.mulf %465, %465 : vector<16x32xf32>
    %cst_306 = arith.constant dense<0.000000e+00> : vector<16xf32>
    %467 = vector.multi_reduction <add>, %466, %cst_306 [1] : vector<16x32xf32> to vector<16xf32>
    %468 = vector.shape_cast %467 : vector<16xf32> to vector<16x1xf32>
    %cst_307 = arith.constant 3.200000e+01 : f32
    %469 = vector.broadcast %cst_307 : f32 to vector<16x1xf32>
    %470 = arith.divf %468, %469 : vector<16x1xf32>
    %471 = vector.broadcast %463 : vector<16x1xf32> to vector<16x32xf32>
    %472 = arith.subf %455, %471 : vector<16x32xf32>
    %cst_308 = arith.constant 9.99999997E-7 : f32
    %473 = vector.broadcast %cst_308 : f32 to vector<16x1xf32>
    %474 = arith.addf %470, %473 : vector<16x1xf32>
    %475 = math.rsqrt %474 : vector<16x1xf32>
    %476 = vector.broadcast %475 : vector<16x1xf32> to vector<16x32xf32>
    %477 = arith.mulf %472, %476 : vector<16x32xf32>
    %478 = vector.broadcast %457 : vector<1x32xf32> to vector<16x32xf32>
    %479 = arith.mulf %477, %478 : vector<16x32xf32>
    %480 = vector.broadcast %459 : vector<1x32xf32> to vector<16x32xf32>
    %481 = arith.addf %479, %480 : vector<16x32xf32>
    %c0_309 = arith.constant 0 : index
    %c0_310 = arith.constant 0 : index
    %482 = vector.load %arg30[%c0_309, %c0_310] : memref<32x8xf32, #tpu.memory_space<vmem>>, vector<32x8xf32>
    %cst_311 = arith.constant dense<0.000000e+00> : vector<32x8xf32>
    %483 = tpu.matmul %408, %482, %cst_311 {dimension_numbers = #tpu.dot_dimension_numbers<[1], [0], [0], [1], [0, 0, 1, 1], [], []>} : vector<32x32xf32>, vector<32x8xf32>, vector<32x8xf32> -> vector<32x8xf32>
    %c0_312 = arith.constant 0 : index
    %c0_313 = arith.constant 0 : index
    %484 = vector.load %arg31[%c0_312, %c0_313] : memref<1x8xf32, #tpu.memory_space<vmem>>, vector<1x8xf32>
    %485 = vector.broadcast %484 : vector<1x8xf32> to vector<32x8xf32>
    %486 = arith.addf %483, %485 : vector<32x8xf32>
    %c0_314 = arith.constant 0 : index
    %c0_315 = arith.constant 0 : index
    %487 = vector.load %arg32[%c0_314, %c0_315] : memref<1x8xf32, #tpu.memory_space<vmem>>, vector<1x8xf32>
    %c0_316 = arith.constant 0 : index
    %c0_317 = arith.constant 0 : index
    %488 = vector.load %arg33[%c0_316, %c0_317] : memref<1x8xf32, #tpu.memory_space<vmem>>, vector<1x8xf32>
    %cst_318 = arith.constant dense<0.000000e+00> : vector<32xf32>
    %489 = vector.multi_reduction <add>, %486, %cst_318 [1] : vector<32x8xf32> to vector<32xf32>
    %490 = vector.shape_cast %489 : vector<32xf32> to vector<32x1xf32>
    %cst_319 = arith.constant 8.000000e+00 : f32
    %491 = vector.broadcast %cst_319 : f32 to vector<32x1xf32>
    %492 = arith.divf %490, %491 : vector<32x1xf32>
    %493 = vector.broadcast %492 : vector<32x1xf32> to vector<32x8xf32>
    %494 = arith.subf %486, %493 : vector<32x8xf32>
    %495 = arith.mulf %494, %494 : vector<32x8xf32>
    %cst_320 = arith.constant dense<0.000000e+00> : vector<32xf32>
    %496 = vector.multi_reduction <add>, %495, %cst_320 [1] : vector<32x8xf32> to vector<32xf32>
    %497 = vector.shape_cast %496 : vector<32xf32> to vector<32x1xf32>
    %cst_321 = arith.constant 8.000000e+00 : f32
    %498 = vector.broadcast %cst_321 : f32 to vector<32x1xf32>
    %499 = arith.divf %497, %498 : vector<32x1xf32>
    %500 = vector.broadcast %492 : vector<32x1xf32> to vector<32x8xf32>
    %501 = arith.subf %486, %500 : vector<32x8xf32>
    %cst_322 = arith.constant 9.99999997E-7 : f32
    %502 = vector.broadcast %cst_322 : f32 to vector<32x1xf32>
    %503 = arith.addf %499, %502 : vector<32x1xf32>
    %504 = math.rsqrt %503 : vector<32x1xf32>
    %505 = vector.broadcast %504 : vector<32x1xf32> to vector<32x8xf32>
    %506 = arith.mulf %501, %505 : vector<32x8xf32>
    %507 = vector.broadcast %487 : vector<1x8xf32> to vector<32x8xf32>
    %508 = arith.mulf %506, %507 : vector<32x8xf32>
    %509 = vector.broadcast %488 : vector<1x8xf32> to vector<32x8xf32>
    %510 = arith.addf %508, %509 : vector<32x8xf32>
    %511 = arith.mulf %510, %510 : vector<32x8xf32>
    %512 = arith.mulf %510, %511 : vector<32x8xf32>
    %cst_323 = arith.constant 4.471500e-02 : f32
    %513 = vector.broadcast %cst_323 : f32 to vector<32x8xf32>
    %514 = arith.mulf %513, %512 : vector<32x8xf32>
    %515 = arith.addf %510, %514 : vector<32x8xf32>
    %cst_324 = arith.constant 0.797884583 : f32
    %516 = vector.broadcast %cst_324 : f32 to vector<32x8xf32>
    %517 = arith.mulf %516, %515 : vector<32x8xf32>
    %518 = math.tanh %517 : vector<32x8xf32>
    %cst_325 = arith.constant 1.000000e+00 : f32
    %519 = vector.broadcast %cst_325 : f32 to vector<32x8xf32>
    %520 = arith.addf %519, %518 : vector<32x8xf32>
    %cst_326 = arith.constant 5.000000e-01 : f32
    %521 = vector.broadcast %cst_326 : f32 to vector<32x8xf32>
    %522 = arith.mulf %521, %520 : vector<32x8xf32>
    %523 = arith.mulf %510, %522 : vector<32x8xf32>
    %c0_327 = arith.constant 0 : index
    %c0_328 = arith.constant 0 : index
    %524 = vector.load %arg34[%c0_327, %c0_328] : memref<8x4xf32, #tpu.memory_space<vmem>>, vector<8x4xf32>
    %cst_329 = arith.constant dense<0.000000e+00> : vector<32x4xf32>
    %525 = tpu.matmul %523, %524, %cst_329 {dimension_numbers = #tpu.dot_dimension_numbers<[1], [0], [0], [1], [0, 0, 1, 1], [], []>} : vector<32x8xf32>, vector<8x4xf32>, vector<32x4xf32> -> vector<32x4xf32>
    %c0_330 = arith.constant 0 : index
    %c0_331 = arith.constant 0 : index
    %526 = vector.load %arg35[%c0_330, %c0_331] : memref<1x4xf32, #tpu.memory_space<vmem>>, vector<1x4xf32>
    %527 = vector.broadcast %526 : vector<1x4xf32> to vector<32x4xf32>
    %528 = arith.addf %525, %527 : vector<32x4xf32>
    %529 = arith.mulf %528, %528 : vector<32x4xf32>
    %530 = arith.mulf %528, %529 : vector<32x4xf32>
    %cst_332 = arith.constant 4.471500e-02 : f32
    %531 = vector.broadcast %cst_332 : f32 to vector<32x4xf32>
    %532 = arith.mulf %531, %530 : vector<32x4xf32>
    %533 = arith.addf %528, %532 : vector<32x4xf32>
    %cst_333 = arith.constant 0.797884583 : f32
    %534 = vector.broadcast %cst_333 : f32 to vector<32x4xf32>
    %535 = arith.mulf %534, %533 : vector<32x4xf32>
    %536 = math.tanh %535 : vector<32x4xf32>
    %cst_334 = arith.constant 1.000000e+00 : f32
    %537 = vector.broadcast %cst_334 : f32 to vector<32x4xf32>
    %538 = arith.addf %537, %536 : vector<32x4xf32>
    %cst_335 = arith.constant 5.000000e-01 : f32
    %539 = vector.broadcast %cst_335 : f32 to vector<32x4xf32>
    %540 = arith.mulf %539, %538 : vector<32x4xf32>
    %541 = arith.mulf %528, %540 : vector<32x4xf32>
    %c0_336 = arith.constant 0 : index
    %c0_337 = arith.constant 0 : index
    %542 = vector.load %arg36[%c0_336, %c0_337] : memref<32x4xf32, #tpu.memory_space<vmem>>, vector<32x4xf32>
    %cst_338 = arith.constant dense<0.000000e+00> : vector<32x4xf32>
    %543 = tpu.matmul %148, %542, %cst_338 {dimension_numbers = #tpu.dot_dimension_numbers<[1], [0], [0], [1], [0, 0, 1, 1], [], []>} : vector<32x32xf32>, vector<32x4xf32>, vector<32x4xf32> -> vector<32x4xf32>
    %c0_339 = arith.constant 0 : index
    %c0_340 = arith.constant 0 : index
    %544 = vector.load %arg37[%c0_339, %c0_340] : memref<1x4xf32, #tpu.memory_space<vmem>>, vector<1x4xf32>
    %545 = vector.broadcast %544 : vector<1x4xf32> to vector<32x4xf32>
    %546 = arith.addf %543, %545 : vector<32x4xf32>
    %c0_341 = arith.constant 0 : index
    %c0_342 = arith.constant 0 : index
    %547 = vector.load %arg38[%c0_341, %c0_342] : memref<32x4xf32, #tpu.memory_space<vmem>>, vector<32x4xf32>
    %cst_343 = arith.constant dense<0.000000e+00> : vector<32x4xf32>
    %548 = tpu.matmul %122, %547, %cst_343 {dimension_numbers = #tpu.dot_dimension_numbers<[1], [0], [0], [1], [0, 0, 1, 1], [], []>} : vector<32x32xf32>, vector<32x4xf32>, vector<32x4xf32> -> vector<32x4xf32>
    %c0_344 = arith.constant 0 : index
    %c0_345 = arith.constant 0 : index
    %549 = vector.load %arg39[%c0_344, %c0_345] : memref<1x4xf32, #tpu.memory_space<vmem>>, vector<1x4xf32>
    %550 = vector.broadcast %549 : vector<1x4xf32> to vector<32x4xf32>
    %551 = arith.addf %548, %550 : vector<32x4xf32>
    %552 = arith.addf %546, %551 : vector<32x4xf32>
    %c0_346 = arith.constant 0 : index
    %c0_347 = arith.constant 0 : index
    %553 = vector.load %arg40[%c0_346, %c0_347] : memref<4x4xf32, #tpu.memory_space<vmem>>, vector<4x4xf32>
    %cst_348 = arith.constant dense<0.000000e+00> : vector<32x4xf32>
    %554 = tpu.matmul %541, %553, %cst_348 {dimension_numbers = #tpu.dot_dimension_numbers<[1], [0], [0], [1], [0, 0, 1, 1], [], []>} : vector<32x4xf32>, vector<4x4xf32>, vector<32x4xf32> -> vector<32x4xf32>
    %c0_349 = arith.constant 0 : index
    %c0_350 = arith.constant 0 : index
    %555 = vector.load %arg41[%c0_349, %c0_350] : memref<1x4xf32, #tpu.memory_space<vmem>>, vector<1x4xf32>
    %556 = vector.broadcast %555 : vector<1x4xf32> to vector<32x4xf32>
    %557 = arith.addf %554, %556 : vector<32x4xf32>
    %558 = arith.addf %557, %552 : vector<32x4xf32>
    %c0_351 = arith.constant 0 : index
    %c0_352 = arith.constant 0 : index
    %559 = vector.load %arg46[%c0_351, %c0_352] : memref<2x16xf32, #tpu.memory_space<vmem>>, vector<2x16xf32>
    %cst_353 = arith.constant dense<0.000000e+00> : vector<2x32xf32>
    %560 = tpu.matmul %559, %481, %cst_353 {dimension_numbers = #tpu.dot_dimension_numbers<[1], [0], [0], [1], [0, 0, 1, 1], [], []>} : vector<2x16xf32>, vector<16x32xf32>, vector<2x32xf32> -> vector<2x32xf32>
    %c0_354 = arith.constant 0 : index
    %c0_355 = arith.constant 0 : index
    %561 = vector.load %arg47[%c0_354, %c0_355] : memref<2x16xf32, #tpu.memory_space<vmem>>, vector<2x16xf32>
    %cst_356 = arith.constant dense<0.000000e+00> : vector<2x32xf32>
    %562 = tpu.matmul %561, %481, %cst_356 {dimension_numbers = #tpu.dot_dimension_numbers<[1], [0], [0], [1], [0, 0, 1, 1], [], []>} : vector<2x16xf32>, vector<16x32xf32>, vector<2x32xf32> -> vector<2x32xf32>
    %c0_357 = arith.constant 0 : index
    %c0_358 = arith.constant 0 : index
    %c0_359 = arith.constant 0 : index
    %563 = vector.load %arg42[%c0_357, %c0_358, %c0_359] : memref<2x32x32xf32, #tpu.memory_space<vmem>>, vector<1x32x32xf32>
    %564 = vector.shape_cast %563 : vector<1x32x32xf32> to vector<32x32xf32>
    %cst_360 = arith.constant dense<0.000000e+00> : vector<2x32xf32>
    %565 = tpu.matmul %560, %564, %cst_360 {dimension_numbers = #tpu.dot_dimension_numbers<[1], [0], [0], [1], [0, 0, 1, 1], [], []>} : vector<2x32xf32>, vector<32x32xf32>, vector<2x32xf32> -> vector<2x32xf32>
    %c0_361 = arith.constant 0 : index
    %c0_362 = arith.constant 0 : index
    %c0_363 = arith.constant 0 : index
    %566 = vector.load %arg43[%c0_361, %c0_362, %c0_363] : memref<2x1x32xf32, #tpu.memory_space<vmem>>, vector<1x1x32xf32>
    %567 = vector.shape_cast %566 : vector<1x1x32xf32> to vector<1x32xf32>
    %568 = vector.broadcast %567 : vector<1x32xf32> to vector<2x32xf32>
    %569 = arith.addf %565, %568 : vector<2x32xf32>
    %cst_364 = arith.constant 0.000000e+00 : f32
    %570 = vector.broadcast %cst_364 : f32 to vector<2x32xf32>
    %571 = arith.maximumf %569, %570 : vector<2x32xf32>
    %c0_365 = arith.constant 0 : index
    %c0_366 = arith.constant 0 : index
    %c0_367 = arith.constant 0 : index
    %572 = vector.load %arg44[%c0_365, %c0_366, %c0_367] : memref<2x32x4xf32, #tpu.memory_space<vmem>>, vector<1x32x4xf32>
    %573 = vector.shape_cast %572 : vector<1x32x4xf32> to vector<32x4xf32>
    %cst_368 = arith.constant dense<0.000000e+00> : vector<2x4xf32>
    %574 = tpu.matmul %571, %573, %cst_368 {dimension_numbers = #tpu.dot_dimension_numbers<[1], [0], [0], [1], [0, 0, 1, 1], [], []>} : vector<2x32xf32>, vector<32x4xf32>, vector<2x4xf32> -> vector<2x4xf32>
    %c0_369 = arith.constant 0 : index
    %c0_370 = arith.constant 0 : index
    %c0_371 = arith.constant 0 : index
    %575 = vector.load %arg45[%c0_369, %c0_370, %c0_371] : memref<2x1x4xf32, #tpu.memory_space<vmem>>, vector<1x1x4xf32>
    %576 = vector.shape_cast %575 : vector<1x1x4xf32> to vector<1x4xf32>
    %577 = vector.broadcast %576 : vector<1x4xf32> to vector<2x4xf32>
    %578 = arith.addf %574, %577 : vector<2x4xf32>
    %c1_372 = arith.constant 1 : index
    %c0_373 = arith.constant 0 : index
    %c0_374 = arith.constant 0 : index
    %579 = vector.load %arg42[%c1_372, %c0_373, %c0_374] : memref<2x32x32xf32, #tpu.memory_space<vmem>>, vector<1x32x32xf32>
    %580 = vector.shape_cast %579 : vector<1x32x32xf32> to vector<32x32xf32>
    %cst_375 = arith.constant dense<0.000000e+00> : vector<2x32xf32>
    %581 = tpu.matmul %562, %580, %cst_375 {dimension_numbers = #tpu.dot_dimension_numbers<[1], [0], [0], [1], [0, 0, 1, 1], [], []>} : vector<2x32xf32>, vector<32x32xf32>, vector<2x32xf32> -> vector<2x32xf32>
    %c1_376 = arith.constant 1 : index
    %c0_377 = arith.constant 0 : index
    %c0_378 = arith.constant 0 : index
    %582 = vector.load %arg43[%c1_376, %c0_377, %c0_378] : memref<2x1x32xf32, #tpu.memory_space<vmem>>, vector<1x1x32xf32>
    %583 = vector.shape_cast %582 : vector<1x1x32xf32> to vector<1x32xf32>
    %584 = vector.broadcast %583 : vector<1x32xf32> to vector<2x32xf32>
    %585 = arith.addf %581, %584 : vector<2x32xf32>
    %cst_379 = arith.constant 0.000000e+00 : f32
    %586 = vector.broadcast %cst_379 : f32 to vector<2x32xf32>
    %587 = arith.maximumf %585, %586 : vector<2x32xf32>
    %c1_380 = arith.constant 1 : index
    %c0_381 = arith.constant 0 : index
    %c0_382 = arith.constant 0 : index
    %588 = vector.load %arg44[%c1_380, %c0_381, %c0_382] : memref<2x32x4xf32, #tpu.memory_space<vmem>>, vector<1x32x4xf32>
    %589 = vector.shape_cast %588 : vector<1x32x4xf32> to vector<32x4xf32>
    %cst_383 = arith.constant dense<0.000000e+00> : vector<2x4xf32>
    %590 = tpu.matmul %587, %589, %cst_383 {dimension_numbers = #tpu.dot_dimension_numbers<[1], [0], [0], [1], [0, 0, 1, 1], [], []>} : vector<2x32xf32>, vector<32x4xf32>, vector<2x4xf32> -> vector<2x4xf32>
    %c1_384 = arith.constant 1 : index
    %c0_385 = arith.constant 0 : index
    %c0_386 = arith.constant 0 : index
    %591 = vector.load %arg45[%c1_384, %c0_385, %c0_386] : memref<2x1x4xf32, #tpu.memory_space<vmem>>, vector<1x1x4xf32>
    %592 = vector.shape_cast %591 : vector<1x1x4xf32> to vector<1x4xf32>
    %593 = vector.broadcast %592 : vector<1x4xf32> to vector<2x4xf32>
    %594 = arith.addf %590, %593 : vector<2x4xf32>
    %595 = vector.shape_cast %541 : vector<32x4xf32> to vector<2x16x4xf32>
    %596 = vector.shape_cast %558 : vector<32x4xf32> to vector<2x16x4xf32>
    %597 = vector.shape_cast %578 : vector<2x4xf32> to vector<2x1x4xf32>
    %598 = vector.broadcast %597 : vector<2x1x4xf32> to vector<2x16x4xf32>
    %599 = arith.mulf %598, %595 : vector<2x16x4xf32>
    %600 = vector.shape_cast %594 : vector<2x4xf32> to vector<2x1x4xf32>
    %601 = vector.broadcast %600 : vector<2x1x4xf32> to vector<2x16x4xf32>
    %602 = arith.mulf %601, %596 : vector<2x16x4xf32>
    %603 = arith.addf %599, %602 : vector<2x16x4xf32>
    %cst_387 = arith.constant dense<0.000000e+00> : vector<2x16xf32>
    %604 = vector.multi_reduction <add>, %603, %cst_387 [2] : vector<2x16x4xf32> to vector<2x16xf32>
    %c0_388 = arith.constant 0 : index
    %c0_389 = arith.constant 0 : index
    %605 = vector.load %arg48[%c0_388, %c0_389] : memref<2x16xf32, #tpu.memory_space<vmem>>, vector<2x16xf32>
    tpu.vector_store %arg48[%c0_388, %c0_389], %604 {strides = array<i32>} : memref<2x16xf32, #tpu.memory_space<vmem>>, vector<2x16xf32>,
    return
  }
}

</mosaic_0001>

<llo_original>
// kernel: samhq_forward.1
$region0: #{samhq_forward.1}
  #allocation0 [shape = 'u32[]', space=smem, size = 0x4, offset = 0x4, fixed_abs, tag = 'smem constant byte address 0x4 - core index']
  #allocation1 [shape = 'u32[72,128]{1,0:T(1,128)}', space=vmem, size = 0x9000, scoped, tag = 'internal scratch']
  %s0 = inlined_call_operand.smem [shape: u32[49], index: -1, kind: input, shape index: {}]
  %s1 = sld [smem:[%s0]]
  %s2 = scalar_lea.smem %s0, 1
  %s3 = sld [smem:[%s2]]
  %s4 = scalar_lea.smem %s0, 2
  %s5 = sld [smem:[%s4]]
  %s6 = scalar_lea.smem %s0, 3
  %s7 = sld [smem:[%s6]]
  %s8 = scalar_lea.smem %s0, 4
  %s9 = sld [smem:[%s8]]
  %s10 = scalar_lea.smem %s0, 5
  %s11 = sld [smem:[%s10]]
  %s12 = scalar_lea.smem %s0, 6
  %s13 = sld [smem:[%s12]]
  %s14 = scalar_lea.smem %s0, 7
  %s15 = sld [smem:[%s14]]
  %s16 = scalar_lea.smem %s0, 8
  %s17 = sld [smem:[%s16]]
  %s18 = scalar_lea.smem %s0, 9
  %s19 = sld [smem:[%s18]]
  %s20 = scalar_lea.smem %s0, 10
  %s21 = sld [smem:[%s20]]
  %s22 = scalar_lea.smem %s0, 11
  %s23 = sld [smem:[%s22]]
  %s24 = scalar_lea.smem %s0, 12
  %s25 = sld [smem:[%s24]]
  %s26 = scalar_lea.smem %s0, 13
  %s27 = sld [smem:[%s26]]
  %s28 = scalar_lea.smem %s0, 14
  %s29 = sld [smem:[%s28]]
  %s30 = scalar_lea.smem %s0, 15
  %s31 = sld [smem:[%s30]]
  %s32 = scalar_lea.smem %s0, 16
  %s33 = sld [smem:[%s32]]
  %s34 = scalar_lea.smem %s0, 17
  %s35 = sld [smem:[%s34]]
  %s36 = scalar_lea.smem %s0, 18
  %s37 = sld [smem:[%s36]]
  %s38 = scalar_lea.smem %s0, 19
  %s39 = sld [smem:[%s38]]
  %s40 = scalar_lea.smem %s0, 20
  %s41 = sld [smem:[%s40]]
  %s42 = scalar_lea.smem %s0, 21
  %s43 = sld [smem:[%s42]]
  %s44 = scalar_lea.smem %s0, 22
  %s45 = sld [smem:[%s44]]
  %s46 = scalar_lea.smem %s0, 23
  %s47 = sld [smem:[%s46]]
  %s48 = scalar_lea.smem %s0, 24
  %s49 = sld [smem:[%s48]]
  %s50 = scalar_lea.smem %s0, 25
  %s51 = sld [smem:[%s50]]
  %s52 = scalar_lea.smem %s0, 26
  %s53 = sld [smem:[%s52]]
  %s54 = scalar_lea.smem %s0, 27
  %s55 = sld [smem:[%s54]]
  %s56 = scalar_lea.smem %s0, 28
  %s57 = sld [smem:[%s56]]
  %s58 = scalar_lea.smem %s0, 29
  %s59 = sld [smem:[%s58]]
  %s60 = scalar_lea.smem %s0, 30
  %s61 = sld [smem:[%s60]]
  %s62 = scalar_lea.smem %s0, 31
  %s63 = sld [smem:[%s62]]
  %s64 = scalar_lea.smem %s0, 32
  %s65 = sld [smem:[%s64]]
  %s66 = scalar_lea.smem %s0, 33
  %s67 = sld [smem:[%s66]]
  %s68 = scalar_lea.smem %s0, 34
  %s69 = sld [smem:[%s68]]
  %s70 = scalar_lea.smem %s0, 35
  %s71 = sld [smem:[%s70]]
  %s72 = scalar_lea.smem %s0, 36
  %s73 = sld [smem:[%s72]]
  %s74 = scalar_lea.smem %s0, 37
  %s75 = sld [smem:[%s74]]
  %s76 = scalar_lea.smem %s0, 38
  %s77 = sld [smem:[%s76]]
  %s78 = scalar_lea.smem %s0, 39
  %s79 = sld [smem:[%s78]]
  %s80 = scalar_lea.smem %s0, 40
  %s81 = sld [smem:[%s80]]
  %s82 = scalar_lea.smem %s0, 41
  %s83 = sld [smem:[%s82]]
  %s84 = scalar_lea.smem %s0, 42
  %s85 = sld [smem:[%s84]]
  %s86 = scalar_lea.smem %s0, 43
  %s87 = sld [smem:[%s86]]
  %s88 = scalar_lea.smem %s0, 44
  %s89 = sld [smem:[%s88]]
  %s90 = scalar_lea.smem %s0, 45
  %s91 = sld [smem:[%s90]]
  %s92 = scalar_lea.smem %s0, 46
  %s93 = sld [smem:[%s92]]
  %s94 = scalar_lea.smem %s0, 47
  %s95 = sld [smem:[%s94]]
  %s96 = scalar_lea.smem %s0, 48
  %s97 = sld [smem:[%s96]]
  %s98 = sld [smem:[#allocation0]]
  $region226: #{samhq_forward.1} parent=0
    _
  %s100 = ssub.s32 1, %s98
  %s101 = scalar_select 0, %s100, %s98
  $region1: #{samhq_forward.1} parent=0
    #allocation2 [shape = 'u8[512]{0}', space=vmem, size = 0x400, scoped, tag = 'input window, operand 32, single buffered']
    #allocation3 [shape = 's32[1]{0}', space=sflag, size = 0x4, scoped, tag = 'scoped memory for samhq_forward.1']
    #allocation4 [shape = 'u8[512]{0}', space=vmem, size = 0x400, scoped, tag = 'input window, operand 33, single buffered']
    #allocation5 [shape = 's32[1]{0}', space=sflag, size = 0x4, scoped, tag = 'scoped memory for samhq_forward.1']
    #allocation6 [shape = 'u8[512]{0}', space=vmem, size = 0x400, scoped, tag = 'input window, operand 35, single buffered']
    #allocation7 [shape = 'u8[512]{0}', space=vmem, size = 0x400, scoped, tag = 'input window, operand 37, single buffered']
    #allocation8 [shape = 's32[1]{0}', space=sflag, size = 0x4, scoped, tag = 'scoped memory for samhq_forward.1']
    #allocation9 [shape = 'u8[512]{0}', space=vmem, size = 0x400, scoped, tag = 'input window, operand 39, single buffered']
    #allocation10 [shape = 'u8[512]{0}', space=vmem, size = 0x400, scoped, tag = 'input window, operand 41, single buffered']
    #allocation11 [shape = 's32[1]{0}', space=sflag, size = 0x4, scoped, tag = 'scoped memory for samhq_forward.1']
    %102 = vsyncpa [#allocation3], 0
    %103 = vsyncpa [#allocation5], 0
    %104 = vsyncpa [#allocation8], 0
    %105 = vsyncpa [#allocation11], 0
    // Predicated region
    $region2: #{samhq_forward.1} parent=1 // pred_check
      _
    $region3: #{samhq_forward.1} parent=1 // pred_check_branch
      %107 = sbr.rel (0) target = $region5
    $region4: #{samhq_forward.1} parent=1 // pred_region
      _
    $region5: #{samhq_forward.1} parent=1 // pred_fallthru
      _
    // Predicated region
    $region6: #{samhq_forward.1} parent=1 // pred_check
      _
    $region7: #{samhq_forward.1} parent=1 // pred_check_branch
      %109 = sbr.rel (0) target = $region9
    $region8: #{samhq_forward.1} parent=1 // pred_region
      _
    $region9: #{samhq_forward.1} parent=1 // pred_fallthru
      _
    // Predicated region
    $region10: #{samhq_forward.1} parent=1 // pred_check
      _
    $region11: #{samhq_forward.1} parent=1 // pred_check_branch
      %111 = sbr.rel (0) target = $region13
    $region12: #{samhq_forward.1} parent=1 // pred_region
      _
    $region13: #{samhq_forward.1} parent=1 // pred_fallthru
      _
    // Predicated region
    $region14: #{samhq_forward.1} parent=1 // pred_check
      _
    $region15: #{samhq_forward.1} parent=1 // pred_check_branch
      %113 = sbr.rel (0) target = $region17
    $region16: #{samhq_forward.1} parent=1 // pred_region
      _
    $region17: #{samhq_forward.1} parent=1 // pred_fallthru
      _
    // Predicated region
    $region18: #{samhq_forward.1} parent=1 // pred_check
      _
    $region19: #{samhq_forward.1} parent=1 // pred_check_branch
      %115 = sbr.rel (0) target = $region21
    $region20: #{samhq_forward.1} parent=1 // pred_region
      _
    $region21: #{samhq_forward.1} parent=1 // pred_fallthru
      _
    // Predicated region
    $region22: #{samhq_forward.1} parent=1 // pred_check
      _
    $region23: #{samhq_forward.1} parent=1 // pred_check_branch
      %117 = sbr.rel (0) target = $region25
    $region24: #{samhq_forward.1} parent=1 // pred_region
      _
    $region25: #{samhq_forward.1} parent=1 // pred_fallthru
      _
    // Predicated region
    $region26: #{samhq_forward.1} parent=1 // pred_check
      _
    $region27: #{samhq_forward.1} parent=1 // pred_check_branch
      %119 = sbr.rel (0) target = $region29
    $region28: #{samhq_forward.1} parent=1 // pred_region
      _
    $region29: #{samhq_forward.1} parent=1 // pred_fallthru
      _
    // Predicated region
    $region30: #{samhq_forward.1} parent=1 // pred_check
      _
    $region31: #{samhq_forward.1} parent=1 // pred_check_branch
      %121 = sbr.rel (0) target = $region33
    $region32: #{samhq_forward.1} parent=1 // pred_region
      _
    $region33: #{samhq_forward.1} parent=1 // pred_fallthru
      _
    // Predicated region
    $region34: #{samhq_forward.1} parent=1 // pred_check
      _
    $region35: #{samhq_forward.1} parent=1 // pred_check_branch
      %123 = sbr.rel (0) target = $region37
    $region36: #{samhq_forward.1} parent=1 // pred_region
      _
    $region37: #{samhq_forward.1} parent=1 // pred_fallthru
      _
    // Predicated region
    $region38: #{samhq_forward.1} parent=1 // pred_check
      _
    $region39: #{samhq_forward.1} parent=1 // pred_check_branch
      %125 = sbr.rel (0) target = $region41
    $region40: #{samhq_forward.1} parent=1 // pred_region
      _
    $region41: #{samhq_forward.1} parent=1 // pred_fallthru
      _
    // Predicated region
    $region42: #{samhq_forward.1} parent=1 // pred_check
      _
    $region43: #{samhq_forward.1} parent=1 // pred_check_branch
      %127 = sbr.rel (0) target = $region45
    $region44: #{samhq_forward.1} parent=1 // pred_region
      _
    $region45: #{samhq_forward.1} parent=1 // pred_fallthru
      _
    // Predicated region
    $region46: #{samhq_forward.1} parent=1 // pred_check
      _
    $region47: #{samhq_forward.1} parent=1 // pred_check_branch
      %129 = sbr.rel (0) target = $region49
    $region48: #{samhq_forward.1} parent=1 // pred_region
      _
    $region49: #{samhq_forward.1} parent=1 // pred_fallthru
      _
    // Predicated region
    $region50: #{samhq_forward.1} parent=1 // pred_check
      _
    $region51: #{samhq_forward.1} parent=1 // pred_check_branch
      %131 = sbr.rel (0) target = $region53
    $region52: #{samhq_forward.1} parent=1 // pred_region
      _
    $region53: #{samhq_forward.1} parent=1 // pred_fallthru
      _
    // Predicated region
    $region54: #{samhq_forward.1} parent=1 // pred_check
      _
    $region55: #{samhq_forward.1} parent=1 // pred_check_branch
      %133 = sbr.rel (0) target = $region57
    $region56: #{samhq_forward.1} parent=1 // pred_region
      _
    $region57: #{samhq_forward.1} parent=1 // pred_fallthru
      _
    // Predicated region
    $region58: #{samhq_forward.1} parent=1 // pred_check
      _
    $region59: #{samhq_forward.1} parent=1 // pred_check_branch
      %135 = sbr.rel (0) target = $region61
    $region60: #{samhq_forward.1} parent=1 // pred_region
      _
    $region61: #{samhq_forward.1} parent=1 // pred_fallthru
      _
    // Predicated region
    $region62: #{samhq_forward.1} parent=1 // pred_check
      _
    $region63: #{samhq_forward.1} parent=1 // pred_check_branch
      %137 = sbr.rel (0) target = $region65
    $region64: #{samhq_forward.1} parent=1 // pred_region
      _
    $region65: #{samhq_forward.1} parent=1 // pred_fallthru
      _
    // Predicated region
    $region66: #{samhq_forward.1} parent=1 // pred_check
      _
    $region67: #{samhq_forward.1} parent=1 // pred_check_branch
      %139 = sbr.rel (0) target = $region69
    $region68: #{samhq_forward.1} parent=1 // pred_region
      _
    $region69: #{samhq_forward.1} parent=1 // pred_fallthru
      _
    // Predicated region
    $region70: #{samhq_forward.1} parent=1 // pred_check
      _
    $region71: #{samhq_forward.1} parent=1 // pred_check_branch
      %141 = sbr.rel (0) target = $region73
    $region72: #{samhq_forward.1} parent=1 // pred_region
      _
    $region73: #{samhq_forward.1} parent=1 // pred_fallthru
      _
    // Predicated region
    $region74: #{samhq_forward.1} parent=1 // pred_check
      _
    $region75: #{samhq_forward.1} parent=1 // pred_check_branch
      %143 = sbr.rel (0) target = $region77
    $region76: #{samhq_forward.1} parent=1 // pred_region
      _
    $region77: #{samhq_forward.1} parent=1 // pred_fallthru
      _
    // Predicated region
    $region78: #{samhq_forward.1} parent=1 // pred_check
      _
    $region79: #{samhq_forward.1} parent=1 // pred_check_branch
      %145 = sbr.rel (0) target = $region81
    $region80: #{samhq_forward.1} parent=1 // pred_region
      _
    $region81: #{samhq_forward.1} parent=1 // pred_fallthru
      _
    // Predicated region
    $region82: #{samhq_forward.1} parent=1 // pred_check
      _
    $region83: #{samhq_forward.1} parent=1 // pred_check_branch
      %147 = sbr.rel (0) target = $region85
    $region84: #{samhq_forward.1} parent=1 // pred_region
      _
    $region85: #{samhq_forward.1} parent=1 // pred_fallthru
      _
    // Predicated region
    $region86: #{samhq_forward.1} parent=1 // pred_check
      _
    $region87: #{samhq_forward.1} parent=1 // pred_check_branch
      %149 = sbr.rel (0) target = $region89
    $region88: #{samhq_forward.1} parent=1 // pred_region
      _
    $region89: #{samhq_forward.1} parent=1 // pred_fallthru
      _
    // Predicated region
    $region90: #{samhq_forward.1} parent=1 // pred_check
      _
    $region91: #{samhq_forward.1} parent=1 // pred_check_branch
      %151 = sbr.rel (0) target = $region93
    $region92: #{samhq_forward.1} parent=1 // pred_region
      _
    $region93: #{samhq_forward.1} parent=1 // pred_fallthru
      _
    // Predicated region
    $region94: #{samhq_forward.1} parent=1 // pred_check
      _
    $region95: #{samhq_forward.1} parent=1 // pred_check_branch
      %153 = sbr.rel (0) target = $region97
    $region96: #{samhq_forward.1} parent=1 // pred_region
      _
    $region97: #{samhq_forward.1} parent=1 // pred_fallthru
      _
    // Predicated region
    $region98: #{samhq_forward.1} parent=1 // pred_check
      _
    $region99: #{samhq_forward.1} parent=1 // pred_check_branch
      %155 = sbr.rel (0) target = $region101
    $region100: #{samhq_forward.1} parent=1 // pred_region
      _
    $region101: #{samhq_forward.1} parent=1 // pred_fallthru
      _
    // Predicated region
    $region102: #{samhq_forward.1} parent=1 // pred_check
      _
    $region103: #{samhq_forward.1} parent=1 // pred_check_branch
      %157 = sbr.rel (0) target = $region105
    $region104: #{samhq_forward.1} parent=1 // pred_region
      _
    $region105: #{samhq_forward.1} parent=1 // pred_fallthru
      _
    // Predicated region
    $region106: #{samhq_forward.1} parent=1 // pred_check
      _
    $region107: #{samhq_forward.1} parent=1 // pred_check_branch
      %159 = sbr.rel (0) target = $region109
    $region108: #{samhq_forward.1} parent=1 // pred_region
      _
    $region109: #{samhq_forward.1} parent=1 // pred_fallthru
      _
    // Predicated region
    $region110: #{samhq_forward.1} parent=1 // pred_check
      _
    $region111: #{samhq_forward.1} parent=1 // pred_check_branch
      %161 = sbr.rel (0) target = $region113
    $region112: #{samhq_forward.1} parent=1 // pred_region
      _
    $region113: #{samhq_forward.1} parent=1 // pred_fallthru
      _
    // Predicated region
    $region114: #{samhq_forward.1} parent=1 // pred_check
      _
    $region115: #{samhq_forward.1} parent=1 // pred_check_branch
      %163 = sbr.rel (0) target = $region117
    $region116: #{samhq_forward.1} parent=1 // pred_region
      _
    $region117: #{samhq_forward.1} parent=1 // pred_fallthru
      _
    // Predicated region
    $region118: #{samhq_forward.1} parent=1 // pred_check
      _
    $region119: #{samhq_forward.1} parent=1 // pred_check_branch
      %165 = sbr.rel (0) target = $region121
    $region120: #{samhq_forward.1} parent=1 // pred_region
      _
    $region121: #{samhq_forward.1} parent=1 // pred_fallthru
      _
    // Predicated region
    $region122: #{samhq_forward.1} parent=1 // pred_check
      _
    $region123: #{samhq_forward.1} parent=1 // pred_check_branch
      %167 = sbr.rel (0) target = $region125
    $region124: #{samhq_forward.1} parent=1 // pred_region
      _
    $region125: #{samhq_forward.1} parent=1 // pred_fallthru
      _
    // Predicated region
    $region126: #{samhq_forward.1} parent=1 // pred_check
      _
    $region127: #{samhq_forward.1} parent=1 // pred_check_branch
      %169 = sbr.rel (0) target = $region129
    $region128: #{samhq_forward.1} parent=1 // pred_region
      _
    $region129: #{samhq_forward.1} parent=1 // pred_fallthru
      _
    // Predicated region
    $region130: #{samhq_forward.1} parent=1 // pred_check
      _
    $region131: #{samhq_forward.1} parent=1 // pred_check_branch
      %171 = sbr.rel (0) target = $region133
    $region132: #{samhq_forward.1} parent=1 // pred_region
      %173 = vsyncadd [#allocation3], 0
      %s175 = sshll.u32 %s65, 4
      %s176 = int_to_ptr.hbm [resolvable:$true] %s175
      %s177 = sshll.u32 [#allocation2], 4
      %s178 = int_to_ptr.vmem [resolvable:$true] %s177
      %180 = dma.hbm_to_vmem [thread:$0]  %s176, 16, %s178, [#allocation3]
    $region133: #{samhq_forward.1} parent=1 // pred_fallthru
      _
    // Predicated region
    $region134: #{samhq_forward.1} parent=1 // pred_check
      _
    $region135: #{samhq_forward.1} parent=1 // pred_check_branch
      %182 = sbr.rel (0) target = $region137
    $region136: #{samhq_forward.1} parent=1 // pred_region
      %184 = vsyncadd [#allocation5], 0
      %s186 = sshll.u32 %s67, 4
      %s187 = int_to_ptr.hbm [resolvable:$true] %s186
      %s188 = sshll.u32 [#allocation4], 4
      %s189 = int_to_ptr.vmem [resolvable:$true] %s188
      %191 = dma.hbm_to_vmem [thread:$0]  %s187, 16, %s189, [#allocation5]
    $region137: #{samhq_forward.1} parent=1 // pred_fallthru
      _
    // Predicated region
    $region138: #{samhq_forward.1} parent=1 // pred_check
      _
    $region139: #{samhq_forward.1} parent=1 // pred_check_branch
      %193 = sbr.rel (0) target = $region141
    $region140: #{samhq_forward.1} parent=1 // pred_region
      _
    $region141: #{samhq_forward.1} parent=1 // pred_fallthru
      _
    // Predicated region
    $region142: #{samhq_forward.1} parent=1 // pred_check
      _
    $region143: #{samhq_forward.1} parent=1 // pred_check_branch
      %195 = sbr.rel (0) target = $region145
    $region144: #{samhq_forward.1} parent=1 // pred_region
      %197 = vsyncadd [#allocation5], 0
      %s199 = sshll.u32 %s71, 4
      %s200 = int_to_ptr.hbm [resolvable:$true] %s199
      %s201 = sshll.u32 [#allocation6], 4
      %s202 = int_to_ptr.vmem [resolvable:$true] %s201
      %204 = dma.hbm_to_vmem [thread:$0]  %s200, 16, %s202, [#allocation5]
    $region145: #{samhq_forward.1} parent=1 // pred_fallthru
      _
    // Predicated region
    $region146: #{samhq_forward.1} parent=1 // pred_check
      _
    $region147: #{samhq_forward.1} parent=1 // pred_check_branch
      %206 = sbr.rel (0) target = $region149
    $region148: #{samhq_forward.1} parent=1 // pred_region
      _
    $region149: #{samhq_forward.1} parent=1 // pred_fallthru
      _
    // Predicated region
    $region150: #{samhq_forward.1} parent=1 // pred_check
      _
    $region151: #{samhq_forward.1} parent=1 // pred_check_branch
      %208 = sbr.rel (0) target = $region153
    $region152: #{samhq_forward.1} parent=1 // pred_region
      %210 = vsyncadd [#allocation8], 0
      %s212 = sshll.u32 %s75, 4
      %s213 = int_to_ptr.hbm [resolvable:$true] %s212
      %s214 = sshll.u32 [#allocation7], 4
      %s215 = int_to_ptr.vmem [resolvable:$true] %s214
      %217 = dma.hbm_to_vmem [thread:$0]  %s213, 16, %s215, [#allocation8]
    $region153: #{samhq_forward.1} parent=1 // pred_fallthru
      _
    // Predicated region
    $region154: #{samhq_forward.1} parent=1 // pred_check
      _
    $region155: #{samhq_forward.1} parent=1 // pred_check_branch
      %219 = sbr.rel (0) target = $region157
    $region156: #{samhq_forward.1} parent=1 // pred_region
      _
    $region157: #{samhq_forward.1} parent=1 // pred_fallthru
      _
    // Predicated region
    $region158: #{samhq_forward.1} parent=1 // pred_check
      _
    $region159: #{samhq_forward.1} parent=1 // pred_check_branch
      %221 = sbr.rel (0) target = $region161
    $region160: #{samhq_forward.1} parent=1 // pred_region
      %223 = vsyncadd [#allocation8], 0
      %s225 = sshll.u32 %s79, 4
      %s226 = int_to_ptr.hbm [resolvable:$true] %s225
      %s227 = sshll.u32 [#allocation9], 4
      %s228 = int_to_ptr.vmem [resolvable:$true] %s227
      %230 = dma.hbm_to_vmem [thread:$0]  %s226, 16, %s228, [#allocation8]
    $region161: #{samhq_forward.1} parent=1 // pred_fallthru
      _
    // Predicated region
    $region162: #{samhq_forward.1} parent=1 // pred_check
      _
    $region163: #{samhq_forward.1} parent=1 // pred_check_branch
      %232 = sbr.rel (0) target = $region165
    $region164: #{samhq_forward.1} parent=1 // pred_region
      _
    $region165: #{samhq_forward.1} parent=1 // pred_fallthru
      _
    // Predicated region
    $region166: #{samhq_forward.1} parent=1 // pred_check
      _
    $region167: #{samhq_forward.1} parent=1 // pred_check_branch
      %234 = sbr.rel (0) target = $region169
    $region168: #{samhq_forward.1} parent=1 // pred_region
      %236 = vsyncadd [#allocation11], 0
      %s238 = sshll.u32 %s83, 4
      %s239 = int_to_ptr.hbm [resolvable:$true] %s238
      %s240 = sshll.u32 [#allocation10], 4
      %s241 = int_to_ptr.vmem [resolvable:$true] %s240
      %243 = dma.hbm_to_vmem [thread:$0]  %s239, 16, %s241, [#allocation11]
    $region169: #{samhq_forward.1} parent=1 // pred_fallthru
      _
    // Predicated region
    $region170: #{samhq_forward.1} parent=1 // pred_check
      _
    $region171: #{samhq_forward.1} parent=1 // pred_check_branch
      %245 = sbr.rel (0) target = $region173
    $region172: #{samhq_forward.1} parent=1 // pred_region
      _
    $region173: #{samhq_forward.1} parent=1 // pred_fallthru
      _
    // Predicated region
    $region174: #{samhq_forward.1} parent=1 // pred_check
      _
    $region175: #{samhq_forward.1} parent=1 // pred_check_branch
      %247 = sbr.rel (0) target = $region177
    $region176: #{samhq_forward.1} parent=1 // pred_region
      _
    $region177: #{samhq_forward.1} parent=1 // pred_fallthru
      _
    // Predicated region
    $region178: #{samhq_forward.1} parent=1 // pred_check
      _
    $region179: #{samhq_forward.1} parent=1 // pred_check_branch
      %249 = sbr.rel (0) target = $region181
    $region180: #{samhq_forward.1} parent=1 // pred_region
      _
    $region181: #{samhq_forward.1} parent=1 // pred_fallthru
      _
    // Predicated region
    $region182: #{samhq_forward.1} parent=1 // pred_check
      _
    $region183: #{samhq_forward.1} parent=1 // pred_check_branch
      %251 = sbr.rel (0) target = $region185
    $region184: #{samhq_forward.1} parent=1 // pred_region
      _
    $region185: #{samhq_forward.1} parent=1 // pred_fallthru
      _
    // Predicated region
    $region186: #{samhq_forward.1} parent=1 // pred_check
      _
    $region187: #{samhq_forward.1} parent=1 // pred_check_branch
      %253 = sbr.rel (0) target = $region189
    $region188: #{samhq_forward.1} parent=1 // pred_region
      _
    $region189: #{samhq_forward.1} parent=1 // pred_fallthru
      _
    // Predicated region
    $region190: #{samhq_forward.1} parent=1 // pred_check
      _
    $region191: #{samhq_forward.1} parent=1 // pred_check_branch
      %255 = sbr.rel (0) target = $region193
    $region192: #{samhq_forward.1} parent=1 // pred_region
      _
    $region193: #{samhq_forward.1} parent=1 // pred_fallthru
      _
    // Predicated region
    $region194: #{samhq_forward.1} parent=1 // pred_check
      _
    $region195: #{samhq_forward.1} parent=1 // pred_check_branch
      %257 = sbr.rel (0) target = $region197
    $region196: #{samhq_forward.1} parent=1 // pred_region
      %259 = dma.done [#allocation3], 16
    $region197: #{samhq_forward.1} parent=1 // pred_fallthru
      _
    // Predicated region
    $region198: #{samhq_forward.1} parent=1 // pred_check
      _
    $region199: #{samhq_forward.1} parent=1 // pred_check_branch
      %261 = sbr.rel (0) target = $region201
    $region200: #{samhq_forward.1} parent=1 // pred_region
      %263 = dma.done [#allocation5], 16
    $region201: #{samhq_forward.1} parent=1 // pred_fallthru
      _
    // Predicated region
    $region202: #{samhq_forward.1} parent=1 // pred_check
      _
    $region203: #{samhq_forward.1} parent=1 // pred_check_branch
      %265 = sbr.rel (0) target = $region205
    $region204: #{samhq_forward.1} parent=1 // pred_region
      %267 = dma.done [#allocation5], 16
    $region205: #{samhq_forward.1} parent=1 // pred_fallthru
      _
    // Predicated region
    $region206: #{samhq_forward.1} parent=1 // pred_check
      _
    $region207: #{samhq_forward.1} parent=1 // pred_check_branch
      %269 = sbr.rel (0) target = $region209
    $region208: #{samhq_forward.1} parent=1 // pred_region
      %271 = dma.done [#allocation8], 16
    $region209: #{samhq_forward.1} parent=1 // pred_fallthru
      _
    // Predicated region
    $region210: #{samhq_forward.1} parent=1 // pred_check
      _
    $region211: #{samhq_forward.1} parent=1 // pred_check_branch
      %273 = sbr.rel (0) target = $region213
    $region212: #{samhq_forward.1} parent=1 // pred_region
      %275 = dma.done [#allocation8], 16
    $region213: #{samhq_forward.1} parent=1 // pred_fallthru
      _
    // Predicated region
    $region214: #{samhq_forward.1} parent=1 // pred_check
      _
    $region215: #{samhq_forward.1} parent=1 // pred_check_branch
      %277 = sbr.rel (0) target = $region217
    $region216: #{samhq_forward.1} parent=1 // pred_region
      %279 = dma.done [#allocation11], 16
    $region217: #{samhq_forward.1} parent=1 // pred_fallthru
      _
    %v280 = vld [vmem:[%s1] sm:$0xff]
    %v281 = vld [vmem:[%s1 + $0x8] sm:$0xff]
    %v282 = vld [vmem:[%s1 + $0x10] sm:$0xff]
    %v283 = vld [vmem:[%s1 + $0x18] sm:$0xff]
    %v284 = vld [vmem:[%s1 + $0x20] sm:$0xff]
    %v285 = vld [vmem:[%s1 + $0x28] sm:$0xff]
    %v286 = vld [vmem:[%s1 + $0x30] sm:$0xff]
    %v287 = vld [vmem:[%s1 + $0x38] sm:$0xff]
    %v288 = vld [vmem:[%s7] sm:$0xff]
    %v289 = vld [vmem:[%s7 + $0x8] sm:$0xff]
    %v290 = vld [vmem:[%s7 + $0x10] sm:$0xff]
    %v291 = vld [vmem:[%s7 + $0x18] sm:$0xff]
    %v292 = vld [vmem:[%s7 + $0x20] sm:$0xff]
    %v293 = vld [vmem:[%s7 + $0x28] sm:$0xff]
    %v294 = vld [vmem:[%s7 + $0x30] sm:$0xff]
    %v295 = vld [vmem:[%s7 + $0x38] sm:$0xff]
    %v296 = vld [vmem:[%s7 + $0x40] sm:$0xff]
    %v297 = vld [vmem:[%s7 + $0x48] sm:$0xff]
    %v298 = vld [vmem:[%s7 + $0x50] sm:$0xff]
    %v299 = vld [vmem:[%s7 + $0x58] sm:$0xff]
    %v300 = vld [vmem:[%s7 + $0x60] sm:$0xff]
    %v301 = vld [vmem:[%s7 + $0x68] sm:$0xff]
    %v302 = vld [vmem:[%s7 + $0x70] sm:$0xff]
    %v303 = vld [vmem:[%s7 + $0x78] sm:$0xff]
    %v304 = vld [vmem:[%s7 + $0x80] sm:$0xff]
    %v305 = vld [vmem:[%s7 + $0x88] sm:$0xff]
    %v306 = vld [vmem:[%s7 + $0x90] sm:$0xff]
    %v307 = vld [vmem:[%s7 + $0x98] sm:$0xff]
    %v308 = vld [vmem:[%s7 + $0xa0] sm:$0xff]
    %v309 = vld [vmem:[%s7 + $0xa8] sm:$0xff]
    %v310 = vld [vmem:[%s7 + $0xb0] sm:$0xff]
    %v311 = vld [vmem:[%s7 + $0xb8] sm:$0xff]
    %v312 = vld [vmem:[%s9] sm:$0x1]
    %v314 = vperm.slane %v312, 0
    %vm316 = vcmask 523264
    %v318 = vsel %vm316, %v281, 0
    %v321 = vsel %vm316, %v283, 0
    %v324 = vsel %vm316, %v285, 0
    %v327 = vsel %vm316, %v287, 0
    %329 = vmatpush.msra.mxu0 %v303
    %330 = vmatpush.msra.mxu0 %v302
    %331 = vmatpush.msra.mxu0 %v301
    %332 = vmatpush.msra.mxu0 %v300
    %333 = vmatpush.msra.mxu0 %v299
    %334 = vmatpush.msra.mxu0 %v298
    %335 = vmatpush.msra.mxu0 %v297
    %336 = vmatpush.msra.mxu0 %v296
    %337 = vmatpush.msra.mxu0 %v295
    %338 = vmatpush.msra.mxu0 %v294
    %339 = vmatpush.msra.mxu0 %v293
    %340 = vmatpush.msra.mxu0 %v292
    %341 = vmatpush.msra.mxu0 %v291
    %342 = vmatpush.msra.mxu0 %v290
    %343 = vmatpush.msra.mxu0 %v289
    %344 = vmatpush.msra.mxu0 %v288
    %345 = vmatmul.f32.gmra.mxu0 %v280
    %v346 = vpop.f32.mrf.mxu0
    %v347 = vadd.f32 %v314, %v346
    %348 = vmatmul.f32.gmra.mxu0 %v282
    %v349 = vpop.f32.mrf.mxu0
    %v350 = vadd.f32 %v314, %v349
    %351 = vmatmul.f32.gmra.mxu0 %v284
    %v352 = vpop.f32.mrf.mxu0
    %v353 = vadd.f32 %v314, %v352
    %354 = vmatmul.f32.gmra.mxu0 %v286
    %v355 = vpop.f32.mrf.mxu0
    %v356 = vadd.f32 %v314, %v355
    %357 = vdwg.mxu0
    %358 = vmatpush.msra.mxu0 0.0
    %359 = vmatpush.msra.mxu0 0.0
    %360 = vmatpush.msra.mxu0 0.0
    %361 = vmatpush.msra.mxu0 0.0
    %362 = vmatpush.msra.mxu0 0.0
    %363 = vmatpush.msra.mxu0 0.0
    %364 = vmatpush.msra.mxu0 0.0
    %365 = vmatpush.msra.mxu0 0.0
    %366 = vmatpush.msra.mxu0 %v311
    %367 = vmatpush.msra.mxu0 %v310
    %368 = vmatpush.msra.mxu0 %v309
    %369 = vmatpush.msra.mxu0 %v308
    %370 = vmatpush.msra.mxu0 %v307
    %371 = vmatpush.msra.mxu0 %v306
    %372 = vmatpush.msra.mxu0 %v305
    %373 = vmatpush.msra.mxu0 %v304
    %374 = vmatmul.f32.gmra.mxu0 %v318
    %v375 = vpop.f32.mrf.mxu0
    %v376 = vadd.f32 %v347, %v375
    %377 = vmatmul.f32.gmra.mxu0 %v321
    %v378 = vpop.f32.mrf.mxu0
    %v379 = vadd.f32 %v350, %v378
    %380 = vmatmul.f32.gmra.mxu0 %v324
    %v381 = vpop.f32.mrf.mxu0
    %v382 = vadd.f32 %v353, %v381
    %383 = vmatmul.f32.gmra.mxu0 %v327
    %v384 = vpop.f32.mrf.mxu0
    %v385 = vadd.f32 %v356, %v384
    %386 = vdwg.mxu0
    %v387 = vld [vmem:[%s5] sm:$0xff]
    %v388 = vld [vmem:[%s5 + $0x8] sm:$0xff]
    %v389 = vld [vmem:[%s5 + $0x10] sm:$0xff]
    %v390 = vld [vmem:[%s5 + $0x18] sm:$0xff]
    %v391 = vadd.f32 %v376, %v387
    %v392 = vadd.f32 %v379, %v388
    %v393 = vadd.f32 %v382, %v389
    %v394 = vadd.f32 %v385, %v390
    %v395 = vld [vmem:[%s11] sm:$0x1]
    %v396 = vld [vmem:[%s13] sm:$0x1]
    %vm397 = vcmask 261120
    %v398 = vsel %vm397, %v391, 0.0
    %399 = vadd.xlane.f32.xlu0 %v398
    %v400 = vpop.xlane.xlu0 %399
    %v401 = vsel %vm397, %v392, 0.0
    %402 = vadd.xlane.f32.xlu0 %v401
    %v403 = vpop.xlane.xlu0 %402
    %v404 = vsel %vm397, %v393, 0.0
    %405 = vadd.xlane.f32.xlu0 %v404
    %v406 = vpop.xlane.xlu0 %405
    %v407 = vsel %vm397, %v394, 0.0
    %408 = vadd.xlane.f32.xlu0 %v407
    %v409 = vpop.xlane.xlu0 %408
    %v410 = vrcp.pop 32.0
    %v411 = vmul.f32 32.0, %v410
    %v412 = vsub.f32 1.0, %v411
    %v413 = vmul.f32 %v410, %v412
    %v414 = vadd.f32 %v410, %v413
    %vm415 = vweird.f32 %v410
    %v416 = vsel %vm415, %v410, %v414
    %v417 = vmul.f32 %v400, %v416
    %v418 = vmul.f32 %v403, %v416
    %v419 = vmul.f32 %v406, %v416
    %v420 = vmul.f32 %v409, %v416
    %v421 = vsub.f32 %v391, %v417
    %v422 = vsub.f32 %v392, %v418
    %v423 = vsub.f32 %v393, %v419
    %v424 = vsub.f32 %v394, %v420
    %v425 = vmul.f32 %v421, %v421
    %v426 = vmul.f32 %v422, %v422
    %v427 = vmul.f32 %v423, %v423
    %v428 = vmul.f32 %v424, %v424
    %v429 = vsel %vm397, %v425, 0.0
    %430 = vadd.xlane.f32.xlu0 %v429
    %v431 = vpop.xlane.xlu0 %430
    %v432 = vsel %vm397, %v426, 0.0
    %433 = vadd.xlane.f32.xlu0 %v432
    %v434 = vpop.xlane.xlu0 %433
    %v435 = vsel %vm397, %v427, 0.0
    %436 = vadd.xlane.f32.xlu0 %v435
    %v437 = vpop.xlane.xlu0 %436
    %v438 = vsel %vm397, %v428, 0.0
    %439 = vadd.xlane.f32.xlu0 %v438
    %v440 = vpop.xlane.xlu0 %439
    %v441 = vmul.f32 %v431, %v416
    %v442 = vmul.f32 %v434, %v416
    %v443 = vmul.f32 %v437, %v416
    %v444 = vmul.f32 %v440, %v416
    %v445 = vadd.f32 %v441, 1e-06
    %v446 = vadd.f32 %v442, 1e-06
    %v447 = vadd.f32 %v443, 1e-06
    %v448 = vadd.f32 %v444, 1e-06
    %v449 = vrsqrt.pop %v445
    %v450 = vmul.f32 %v449, %v445
    %v451 = vmul.f32 %v450, %v449
    %v452 = vmul.f32 0.5, %v451
    %v453 = vsub.f32 1.5, %v452
    %v454 = vmul.f32 %v449, %v453
    %vm455 = vweird.f32 %v445
    %vm456 = vweird.f32 %v449
    %vm457 = vmor %vm455, %vm456
    %v458 = vsel %vm457, %v449, %v454
    %v459 = vrsqrt.pop %v446
    %v460 = vmul.f32 %v459, %v446
    %v461 = vmul.f32 %v460, %v459
    %v462 = vmul.f32 0.5, %v461
    %v463 = vsub.f32 1.5, %v462
    %v464 = vmul.f32 %v459, %v463
    %vm465 = vweird.f32 %v446
    %vm466 = vweird.f32 %v459
    %vm467 = vmor %vm465, %vm466
    %v468 = vsel %vm467, %v459, %v464
    %v469 = vrsqrt.pop %v447
    %v470 = vmul.f32 %v469, %v447
    %v471 = vmul.f32 %v470, %v469
    %v472 = vmul.f32 0.5, %v471
    %v473 = vsub.f32 1.5, %v472
    %v474 = vmul.f32 %v469, %v473
    %vm475 = vweird.f32 %v447
    %vm476 = vweird.f32 %v469
    %vm477 = vmor %vm475, %vm476
    %v478 = vsel %vm477, %v469, %v474
    %v479 = vrsqrt.pop %v448
    %v480 = vmul.f32 %v479, %v448
    %v481 = vmul.f32 %v480, %v479
    %v482 = vmul.f32 0.5, %v481
    %v483 = vsub.f32 1.5, %v482
    %v484 = vmul.f32 %v479, %v483
    %vm485 = vweird.f32 %v448
    %vm486 = vweird.f32 %v479
    %vm487 = vmor %vm485, %vm486
    %v488 = vsel %vm487, %v479, %v484
    %v489 = vmul.f32 %v421, %v458
    %v490 = vmul.f32 %v422, %v468
    %v491 = vmul.f32 %v423, %v478
    %v492 = vmul.f32 %v424, %v488
    %v494 = vperm.slane %v395, 0
    %v496 = vmul.f32 %v489, %v494
    %v497 = vmul.f32 %v490, %v494
    %v498 = vmul.f32 %v491, %v494
    %v499 = vmul.f32 %v492, %v494
    %v501 = vperm.slane %v396, 0
    %v503 = vadd.f32 %v496, %v501
    %v504 = vadd.f32 %v497, %v501
    %v505 = vadd.f32 %v498, %v501
    %v506 = vadd.f32 %v499, %v501
    %v507 = vld [vmem:[%s15] sm:$0xff]
    %v508 = vld [vmem:[%s15 + $0x8] sm:$0xff]
    %v509 = vld [vmem:[%s15 + $0x10] sm:$0xff]
    %v510 = vld [vmem:[%s15 + $0x18] sm:$0xff]
    %v511 = vld [vmem:[%s17] sm:$0x1]
    %v513 = vperm.slane %v511, 0
    %v516 = vsel %vm397, %v503, 0
    %v519 = vsel %vm397, %v504, 0
    %v522 = vsel %vm397, %v505, 0
    %v525 = vsel %vm397, %v506, 0
    %527 = vmatpush.msra.mxu0 0.0
    %528 = vmatpush.msra.mxu0 0.0
    %529 = vmatpush.msra.mxu0 0.0
    %530 = vmatpush.msra.mxu0 0.0
    %531 = vmatpush.msra.mxu0 0.0
    %532 = vmatpush.msra.mxu0 0.0
    %533 = vmatpush.msra.mxu0 0.0
    %534 = vmatpush.msra.mxu0 0.0
    %535 = vmatpush.msra.mxu0 0.0
    %536 = vmatpush.msra.mxu0 0.0
    %537 = vmatpush.msra.mxu0 0.0
    %538 = vmatpush.msra.mxu0 0.0
    %539 = vmatpush.msra.mxu0 %v510
    %540 = vmatpush.msra.mxu0 %v509
    %541 = vmatpush.msra.mxu0 %v508
    %542 = vmatpush.msra.mxu0 %v507
    %543 = vmatmul.f32.gmra.mxu0 %v516
    %v544 = vpop.f32.mrf.mxu0
    %v545 = vadd.f32 %v513, %v544
    %546 = vmatmul.f32.gmra.mxu0 %v519
    %v547 = vpop.f32.mrf.mxu0
    %v548 = vadd.f32 %v513, %v547
    %549 = vmatmul.f32.gmra.mxu0 %v522
    %v550 = vpop.f32.mrf.mxu0
    %v551 = vadd.f32 %v513, %v550
    %552 = vmatmul.f32.gmra.mxu0 %v525
    %v553 = vpop.f32.mrf.mxu0
    %v554 = vadd.f32 %v513, %v553
    %555 = vdwg.mxu0
    %s556 = scalar_lea.vmem %s15, 32
    %v557 = vld [vmem:[%s556] sm:$0xff]
    %v558 = vld [vmem:[%s556 + $0x8] sm:$0xff]
    %v559 = vld [vmem:[%s556 + $0x10] sm:$0xff]
    %v560 = vld [vmem:[%s556 + $0x18] sm:$0xff]
    %s561 = scalar_lea.vmem %s17, 1
    %v562 = vld [vmem:[%s561] sm:$0x1]
    %v564 = vperm.slane %v562, 0
    %566 = vmatpush.msra.mxu0 0.0
    %567 = vmatpush.msra.mxu0 0.0
    %568 = vmatpush.msra.mxu0 0.0
    %569 = vmatpush.msra.mxu0 0.0
    %570 = vmatpush.msra.mxu0 0.0
    %571 = vmatpush.msra.mxu0 0.0
    %572 = vmatpush.msra.mxu0 0.0
    %573 = vmatpush.msra.mxu0 0.0
    %574 = vmatpush.msra.mxu0 0.0
    %575 = vmatpush.msra.mxu0 0.0
    %576 = vmatpush.msra.mxu0 0.0
    %577 = vmatpush.msra.mxu0 0.0
    %578 = vmatpush.msra.mxu0 %v560
    %579 = vmatpush.msra.mxu0 %v559
    %580 = vmatpush.msra.mxu0 %v558
    %581 = vmatpush.msra.mxu0 %v557
    %582 = vmatmul.f32.gmra.mxu0 %v516
    %v583 = vpop.f32.mrf.mxu0
    %v584 = vadd.f32 %v564, %v583
    %585 = vmatmul.f32.gmra.mxu0 %v519
    %v586 = vpop.f32.mrf.mxu0
    %v587 = vadd.f32 %v564, %v586
    %588 = vmatmul.f32.gmra.mxu0 %v522
    %v589 = vpop.f32.mrf.mxu0
    %v590 = vadd.f32 %v564, %v589
    %591 = vmatmul.f32.gmra.mxu0 %v525
    %v592 = vpop.f32.mrf.mxu0
    %v593 = vadd.f32 %v564, %v592
    %594 = vdwg.mxu0
    %s595 = scalar_lea.vmem %s15, 64
    %v596 = vld [vmem:[%s595] sm:$0xff]
    %v597 = vld [vmem:[%s595 + $0x8] sm:$0xff]
    %v598 = vld [vmem:[%s595 + $0x10] sm:$0xff]
    %v599 = vld [vmem:[%s595 + $0x18] sm:$0xff]
    %s600 = scalar_lea.vmem %s17, 2
    %v601 = vld [vmem:[%s600] sm:$0x1]
    %v603 = vperm.slane %v601, 0
    %605 = vmatpush.msra.mxu0 0.0
    %606 = vmatpush.msra.mxu0 0.0
    %607 = vmatpush.msra.mxu0 0.0
    %608 = vmatpush.msra.mxu0 0.0
    %609 = vmatpush.msra.mxu0 0.0
    %610 = vmatpush.msra.mxu0 0.0
    %611 = vmatpush.msra.mxu0 0.0
    %612 = vmatpush.msra.mxu0 0.0
    %613 = vmatpush.msra.mxu0 0.0
    %614 = vmatpush.msra.mxu0 0.0
    %615 = vmatpush.msra.mxu0 0.0
    %616 = vmatpush.msra.mxu0 0.0
    %617 = vmatpush.msra.mxu0 %v599
    %618 = vmatpush.msra.mxu0 %v598
    %619 = vmatpush.msra.mxu0 %v597
    %620 = vmatpush.msra.mxu0 %v596
    %621 = vmatmul.f32.gmra.mxu0 %v516
    %v622 = vpop.f32.mrf.mxu0
    %v623 = vadd.f32 %v603, %v622
    %624 = vmatmul.f32.gmra.mxu0 %v519
    %v625 = vpop.f32.mrf.mxu0
    %v626 = vadd.f32 %v603, %v625
    %627 = vmatmul.f32.gmra.mxu0 %v522
    %v628 = vpop.f32.mrf.mxu0
    %v629 = vadd.f32 %v603, %v628
    %630 = vmatmul.f32.gmra.mxu0 %v525
    %v631 = vpop.f32.mrf.mxu0
    %v632 = vadd.f32 %v603, %v631
    %633 = vdwg.mxu0
    %v635 = vsel %vm397, %v545, 0
    %v638 = vsel %vm397, %v548, 0
    %v641 = vsel %vm397, %v584, 0
    %v644 = vsel %vm397, %v587, 0
    %646 = vmatpush.xpose.msra.mxu0 0.0
    %647 = vmatpush.xpose.msra.mxu0 0.0
    %648 = vmatpush.xpose.msra.mxu0 0.0
    %649 = vmatpush.xpose.msra.mxu0 0.0
    %650 = vmatpush.xpose.msra.mxu0 0.0
    %651 = vmatpush.xpose.msra.mxu0 0.0
    %652 = vmatpush.xpose.msra.mxu0 0.0
    %653 = vmatpush.xpose.msra.mxu0 0.0
    %654 = vmatpush.xpose.msra.mxu0 0.0
    %655 = vmatpush.xpose.msra.mxu0 0.0
    %656 = vmatpush.xpose.msra.mxu0 0.0
    %657 = vmatpush.xpose.msra.mxu0 0.0
    %658 = vmatpush.xpose.msra.mxu0 0.0
    %659 = vmatpush.xpose.msra.mxu0 0.0
    %660 = vmatpush.xpose.msra.mxu0 %v644
    %661 = vmatpush.xpose.msra.mxu0 %v641
    %662 = vmatmul.f32.gmra.mxu0 %v635
    %v663 = vpop.f32.mrf.mxu0
    %v664 = vadd.f32 0.0, %v663
    %665 = vmatmul.f32.gmra.mxu0 %v638
    %v666 = vpop.f32.mrf.mxu0
    %v667 = vadd.f32 0.0, %v666
    %668 = vdwg.mxu0
    %v670 = vsel %vm397, %v551, 0
    %v673 = vsel %vm397, %v554, 0
    %v676 = vsel %vm397, %v590, 0
    %v679 = vsel %vm397, %v593, 0
    %681 = vmatpush.xpose.msra.mxu0 0.0
    %682 = vmatpush.xpose.msra.mxu0 0.0
    %683 = vmatpush.xpose.msra.mxu0 0.0
    %684 = vmatpush.xpose.msra.mxu0 0.0
    %685 = vmatpush.xpose.msra.mxu0 0.0
    %686 = vmatpush.xpose.msra.mxu0 0.0
    %687 = vmatpush.xpose.msra.mxu0 0.0
    %688 = vmatpush.xpose.msra.mxu0 0.0
    %689 = vmatpush.xpose.msra.mxu0 0.0
    %690 = vmatpush.xpose.msra.mxu0 0.0
    %691 = vmatpush.xpose.msra.mxu0 0.0
    %692 = vmatpush.xpose.msra.mxu0 0.0
    %693 = vmatpush.xpose.msra.mxu0 0.0
    %694 = vmatpush.xpose.msra.mxu0 0.0
    %695 = vmatpush.xpose.msra.mxu0 %v679
    %696 = vmatpush.xpose.msra.mxu0 %v676
    %697 = vmatmul.f32.gmra.mxu0 %v670
    %v698 = vpop.f32.mrf.mxu0
    %v699 = vadd.f32 0.0, %v698
    %700 = vmatmul.f32.gmra.mxu0 %v673
    %v701 = vpop.f32.mrf.mxu0
    %v702 = vadd.f32 0.0, %v701
    %703 = vdwg.mxu0
    %vm704 = vcmask 130048
    %v705 = vsel %vm704, %v664, -inf
    %706 = vmax.xlane.f32.xlu0 %v705
    %v707 = vpop.xlane.xlu0 %706
    %v708 = vsel %vm704, %v667, -inf
    %709 = vmax.xlane.f32.xlu0 %v708
    %v710 = vpop.xlane.xlu0 %709
    %v711 = vsel %vm704, %v699, -inf
    %712 = vmax.xlane.f32.xlu0 %v711
    %v713 = vpop.xlane.xlu0 %712
    %v714 = vsel %vm704, %v702, -inf
    %715 = vmax.xlane.f32.xlu0 %v714
    %v716 = vpop.xlane.xlu0 %715
    %v717 = vsub.f32 %v664, %v707
    %v718 = vsub.f32 %v667, %v710
    %v719 = vsub.f32 %v699, %v713
    %v720 = vsub.f32 %v702, %v716
    %v721 = vmul.f32 %v717, 1.442695
    %v722 = vpow.pop %v721
    %v723 = vmul.f32 %v718, 1.442695
    %v724 = vpow.pop %v723
    %v725 = vmul.f32 %v719, 1.442695
    %v726 = vpow.pop %v725
    %v727 = vmul.f32 %v720, 1.442695
    %v728 = vpow.pop %v727
    %v729 = vsel %vm704, %v722, 0.0
    %730 = vadd.xlane.f32.xlu0 %v729
    %v731 = vpop.xlane.xlu0 %730
    %v732 = vsel %vm704, %v724, 0.0
    %733 = vadd.xlane.f32.xlu0 %v732
    %v734 = vpop.xlane.xlu0 %733
    %v735 = vsel %vm704, %v726, 0.0
    %736 = vadd.xlane.f32.xlu0 %v735
    %v737 = vpop.xlane.xlu0 %736
    %v738 = vsel %vm704, %v728, 0.0
    %739 = vadd.xlane.f32.xlu0 %v738
    %v740 = vpop.xlane.xlu0 %739
    %v741 = vrcp.pop %v731
    %v742 = vrcp.pop %v734
    %v743 = vrcp.pop %v737
    %v744 = vrcp.pop %v740
    %v745 = vmul.f32 %v722, %v741
    %v746 = vmul.f32 %v724, %v742
    %v747 = vmul.f32 %v726, %v743
    %v748 = vmul.f32 %v728, %v744
    %v750 = vsel %vm704, %v745, 0
    %v753 = vsel %vm704, %v746, 0
    %755 = vmatpush.msra.mxu0 0.0
    %756 = vmatpush.msra.mxu0 0.0
    %757 = vmatpush.msra.mxu0 0.0
    %758 = vmatpush.msra.mxu0 0.0
    %759 = vmatpush.msra.mxu0 0.0
    %760 = vmatpush.msra.mxu0 0.0
    %761 = vmatpush.msra.mxu0 0.0
    %762 = vmatpush.msra.mxu0 0.0
    %763 = vmatpush.msra.mxu0 0.0
    %764 = vmatpush.msra.mxu0 0.0
    %765 = vmatpush.msra.mxu0 0.0
    %766 = vmatpush.msra.mxu0 0.0
    %767 = vmatpush.msra.mxu0 0.0
    %768 = vmatpush.msra.mxu0 0.0
    %769 = vmatpush.msra.mxu0 %v626
    %770 = vmatpush.msra.mxu0 %v623
    %771 = vmatmul.f32.gmra.mxu0 %v750
    %v772 = vpop.f32.mrf.mxu0
    %v773 = vadd.f32 0.0, %v772
    %774 = vmatmul.f32.gmra.mxu0 %v753
    %v775 = vpop.f32.mrf.mxu0
    %v776 = vadd.f32 0.0, %v775
    %777 = vdwg.mxu0
    %v779 = vsel %vm704, %v747, 0
    %v782 = vsel %vm704, %v748, 0
    %784 = vmatpush.msra.mxu0 0.0
    %785 = vmatpush.msra.mxu0 0.0
    %786 = vmatpush.msra.mxu0 0.0
    %787 = vmatpush.msra.mxu0 0.0
    %788 = vmatpush.msra.mxu0 0.0
    %789 = vmatpush.msra.mxu0 0.0
    %790 = vmatpush.msra.mxu0 0.0
    %791 = vmatpush.msra.mxu0 0.0
    %792 = vmatpush.msra.mxu0 0.0
    %793 = vmatpush.msra.mxu0 0.0
    %794 = vmatpush.msra.mxu0 0.0
    %795 = vmatpush.msra.mxu0 0.0
    %796 = vmatpush.msra.mxu0 0.0
    %797 = vmatpush.msra.mxu0 0.0
    %798 = vmatpush.msra.mxu0 %v632
    %799 = vmatpush.msra.mxu0 %v629
    %800 = vmatmul.f32.gmra.mxu0 %v779
    %v801 = vpop.f32.mrf.mxu0
    %v802 = vadd.f32 0.0, %v801
    %803 = vmatmul.f32.gmra.mxu0 %v782
    %v804 = vpop.f32.mrf.mxu0
    %v805 = vadd.f32 0.0, %v804
    %806 = vdwg.mxu0
    %v807 = vld [vmem:[%s19] sm:$0xff]
    %v808 = vld [vmem:[%s19 + $0x8] sm:$0xff]
    %v809 = vld [vmem:[%s19 + $0x10] sm:$0xff]
    %v810 = vld [vmem:[%s19 + $0x18] sm:$0xff]
    %v811 = vld [vmem:[%s21] sm:$0x1]
    %v813 = vperm.slane %v811, 0
    %v816 = vsel %vm397, %v773, 0
    %v819 = vsel %vm397, %v776, 0
    %v822 = vsel %vm397, %v802, 0
    %v825 = vsel %vm397, %v805, 0
    %827 = vmatpush.msra.mxu0 0.0
    %828 = vmatpush.msra.mxu0 0.0
    %829 = vmatpush.msra.mxu0 0.0
    %830 = vmatpush.msra.mxu0 0.0
    %831 = vmatpush.msra.mxu0 0.0
    %832 = vmatpush.msra.mxu0 0.0
    %833 = vmatpush.msra.mxu0 0.0
    %834 = vmatpush.msra.mxu0 0.0
    %835 = vmatpush.msra.mxu0 0.0
    %836 = vmatpush.msra.mxu0 0.0
    %837 = vmatpush.msra.mxu0 0.0
    %838 = vmatpush.msra.mxu0 0.0
    %839 = vmatpush.msra.mxu0 %v810
    %840 = vmatpush.msra.mxu0 %v809
    %841 = vmatpush.msra.mxu0 %v808
    %842 = vmatpush.msra.mxu0 %v807
    %843 = vmatmul.f32.gmra.mxu0 %v816
    %v844 = vpop.f32.mrf.mxu0
    %v845 = vadd.f32 %v813, %v844
    %846 = vmatmul.f32.gmra.mxu0 %v819
    %v847 = vpop.f32.mrf.mxu0
    %v848 = vadd.f32 %v813, %v847
    %849 = vmatmul.f32.gmra.mxu0 %v822
    %v850 = vpop.f32.mrf.mxu0
    %v851 = vadd.f32 %v813, %v850
    %852 = vmatmul.f32.gmra.mxu0 %v825
    %v853 = vpop.f32.mrf.mxu0
    %v854 = vadd.f32 %v813, %v853
    %855 = vdwg.mxu0
    %v856 = vadd.f32 %v391, %v845
    %v857 = vadd.f32 %v392, %v848
    %v858 = vadd.f32 %v393, %v851
    %v859 = vadd.f32 %v394, %v854
    %v860 = vld [vmem:[%s23] sm:$0x1]
    %v861 = vld [vmem:[%s25] sm:$0x1]
    %v862 = vsel %vm397, %v856, 0.0
    %863 = vadd.xlane.f32.xlu0 %v862
    %v864 = vpop.xlane.xlu0 %863
    %v865 = vsel %vm397, %v857, 0.0
    %866 = vadd.xlane.f32.xlu0 %v865
    %v867 = vpop.xlane.xlu0 %866
    %v868 = vsel %vm397, %v858, 0.0
    %869 = vadd.xlane.f32.xlu0 %v868
    %v870 = vpop.xlane.xlu0 %869
    %v871 = vsel %vm397, %v859, 0.0
    %872 = vadd.xlane.f32.xlu0 %v871
    %v873 = vpop.xlane.xlu0 %872
    %v874 = vmul.f32 %v864, %v416
    %v875 = vmul.f32 %v867, %v416
    %v876 = vmul.f32 %v870, %v416
    %v877 = vmul.f32 %v873, %v416
    %v878 = vsub.f32 %v856, %v874
    %v879 = vsub.f32 %v857, %v875
    %v880 = vsub.f32 %v858, %v876
    %v881 = vsub.f32 %v859, %v877
    %v882 = vmul.f32 %v878, %v878
    %v883 = vmul.f32 %v879, %v879
    %v884 = vmul.f32 %v880, %v880
    %v885 = vmul.f32 %v881, %v881
    %v886 = vsel %vm397, %v882, 0.0
    %887 = vadd.xlane.f32.xlu0 %v886
    %v888 = vpop.xlane.xlu0 %887
    %v889 = vsel %vm397, %v883, 0.0
    %890 = vadd.xlane.f32.xlu0 %v889
    %v891 = vpop.xlane.xlu0 %890
    %v892 = vsel %vm397, %v884, 0.0
    %893 = vadd.xlane.f32.xlu0 %v892
    %v894 = vpop.xlane.xlu0 %893
    %v895 = vsel %vm397, %v885, 0.0
    %896 = vadd.xlane.f32.xlu0 %v895
    %v897 = vpop.xlane.xlu0 %896
    %v898 = vmul.f32 %v888, %v416
    %v899 = vmul.f32 %v891, %v416
    %v900 = vmul.f32 %v894, %v416
    %v901 = vmul.f32 %v897, %v416
    %v902 = vadd.f32 %v898, 1e-06
    %v903 = vadd.f32 %v899, 1e-06
    %v904 = vadd.f32 %v900, 1e-06
    %v905 = vadd.f32 %v901, 1e-06
    %v906 = vrsqrt.pop %v902
    %v907 = vmul.f32 %v906, %v902
    %v908 = vmul.f32 %v907, %v906
    %v909 = vmul.f32 0.5, %v908
    %v910 = vsub.f32 1.5, %v909
    %v911 = vmul.f32 %v906, %v910
    %vm912 = vweird.f32 %v902
    %vm913 = vweird.f32 %v906
    %vm914 = vmor %vm912, %vm913
    %v915 = vsel %vm914, %v906, %v911
    %v916 = vrsqrt.pop %v903
    %v917 = vmul.f32 %v916, %v903
    %v918 = vmul.f32 %v917, %v916
    %v919 = vmul.f32 0.5, %v918
    %v920 = vsub.f32 1.5, %v919
    %v921 = vmul.f32 %v916, %v920
    %vm922 = vweird.f32 %v903
    %vm923 = vweird.f32 %v916
    %vm924 = vmor %vm922, %vm923
    %v925 = vsel %vm924, %v916, %v921
    %v926 = vrsqrt.pop %v904
    %v927 = vmul.f32 %v926, %v904
    %v928 = vmul.f32 %v927, %v926
    %v929 = vmul.f32 0.5, %v928
    %v930 = vsub.f32 1.5, %v929
    %v931 = vmul.f32 %v926, %v930
    %vm932 = vweird.f32 %v904
    %vm933 = vweird.f32 %v926
    %vm934 = vmor %vm932, %vm933
    %v935 = vsel %vm934, %v926, %v931
    %v936 = vrsqrt.pop %v905
    %v937 = vmul.f32 %v936, %v905
    %v938 = vmul.f32 %v937, %v936
    %v939 = vmul.f32 0.5, %v938
    %v940 = vsub.f32 1.5, %v939
    %v941 = vmul.f32 %v936, %v940
    %vm942 = vweird.f32 %v905
    %vm943 = vweird.f32 %v936
    %vm944 = vmor %vm942, %vm943
    %v945 = vsel %vm944, %v936, %v941
    %v946 = vmul.f32 %v878, %v915
    %v947 = vmul.f32 %v879, %v925
    %v948 = vmul.f32 %v880, %v935
    %v949 = vmul.f32 %v881, %v945
    %v951 = vperm.slane %v860, 0
    %v953 = vmul.f32 %v946, %v951
    %v954 = vmul.f32 %v947, %v951
    %v955 = vmul.f32 %v948, %v951
    %v956 = vmul.f32 %v949, %v951
    %v958 = vperm.slane %v861, 0
    %v960 = vadd.f32 %v953, %v958
    %v961 = vadd.f32 %v954, %v958
    %v962 = vadd.f32 %v955, %v958
    %v963 = vadd.f32 %v956, %v958
    %v964 = vld [vmem:[%s27] sm:$0xff]
    %v965 = vld [vmem:[%s27 + $0x8] sm:$0xff]
    %v966 = vld [vmem:[%s27 + $0x10] sm:$0xff]
    %v967 = vld [vmem:[%s27 + $0x18] sm:$0xff]
    %v968 = vld [vmem:[%s29] sm:$0x1]
    %v970 = vperm.slane %v968, 0
    %v973 = vsel %vm397, %v960, 0
    %v976 = vsel %vm397, %v961, 0
    %v979 = vsel %vm397, %v962, 0
    %v982 = vsel %vm397, %v963, 0
    %984 = vmatpush.msra.mxu0 0.0
    %985 = vmatpush.msra.mxu0 0.0
    %986 = vmatpush.msra.mxu0 0.0
    %987 = vmatpush.msra.mxu0 0.0
    %988 = vmatpush.msra.mxu0 0.0
    %989 = vmatpush.msra.mxu0 0.0
    %990 = vmatpush.msra.mxu0 0.0
    %991 = vmatpush.msra.mxu0 0.0
    %992 = vmatpush.msra.mxu0 0.0
    %993 = vmatpush.msra.mxu0 0.0
    %994 = vmatpush.msra.mxu0 0.0
    %995 = vmatpush.msra.mxu0 0.0
    %996 = vmatpush.msra.mxu0 %v967
    %997 = vmatpush.msra.mxu0 %v966
    %998 = vmatpush.msra.mxu0 %v965
    %999 = vmatpush.msra.mxu0 %v964
    %1000 = vmatmul.f32.gmra.mxu0 %v973
    %v1001 = vpop.f32.mrf.mxu0
    %v1002 = vadd.f32 %v970, %v1001
    %1003 = vmatmul.f32.gmra.mxu0 %v976
    %v1004 = vpop.f32.mrf.mxu0
    %v1005 = vadd.f32 %v970, %v1004
    %1006 = vmatmul.f32.gmra.mxu0 %v979
    %v1007 = vpop.f32.mrf.mxu0
    %v1008 = vadd.f32 %v970, %v1007
    %1009 = vmatmul.f32.gmra.mxu0 %v982
    %v1010 = vpop.f32.mrf.mxu0
    %v1011 = vadd.f32 %v970, %v1010
    %1012 = vdwg.mxu0
    %v1013 = vmul.f32 %v1002, %v1002
    %v1014 = vmul.f32 %v1005, %v1005
    %v1015 = vmul.f32 %v1008, %v1008
    %v1016 = vmul.f32 %v1011, %v1011
    %v1017 = vmul.f32 %v1002, %v1013
    %v1018 = vmul.f32 %v1005, %v1014
    %v1019 = vmul.f32 %v1008, %v1015
    %v1020 = vmul.f32 %v1011, %v1016
    %v1021 = vmul.f32 %v1017, 0.044715
    %v1022 = vmul.f32 %v1018, 0.044715
    %v1023 = vmul.f32 %v1019, 0.044715
    %v1024 = vmul.f32 %v1020, 0.044715
    %v1025 = vadd.f32 %v1002, %v1021
    %v1026 = vadd.f32 %v1005, %v1022
    %v1027 = vadd.f32 %v1008, %v1023
    %v1028 = vadd.f32 %v1011, %v1024
    %v1029 = vmul.f32 %v1025, 0.7978846
    %v1030 = vmul.f32 %v1026, 0.7978846
    %v1031 = vmul.f32 %v1027, 0.7978846
    %v1032 = vmul.f32 %v1028, 0.7978846
    %v1033 = vtanh.pop %v1029
    %v1034 = vtanh.pop %v1030
    %v1035 = vtanh.pop %v1031
    %v1036 = vtanh.pop %v1032
    %v1037 = vadd.f32 %v1033, 1.0
    %v1038 = vadd.f32 %v1034, 1.0
    %v1039 = vadd.f32 %v1035, 1.0
    %v1040 = vadd.f32 %v1036, 1.0
    %v1041 = vmul.f32 %v1037, 0.5
    %v1042 = vmul.f32 %v1038, 0.5
    %v1043 = vmul.f32 %v1039, 0.5
    %v1044 = vmul.f32 %v1040, 0.5
    %v1045 = vmul.f32 %v1002, %v1041
    %v1046 = vmul.f32 %v1005, %v1042
    %v1047 = vmul.f32 %v1008, %v1043
    %v1048 = vmul.f32 %v1011, %v1044
    %v1049 = vld [vmem:[%s31] sm:$0xff]
    %v1050 = vld [vmem:[%s31 + $0x8] sm:$0xff]
    %v1051 = vld [vmem:[%s31 + $0x10] sm:$0xff]
    %v1052 = vld [vmem:[%s31 + $0x18] sm:$0xff]
    %v1053 = vld [vmem:[%s31 + $0x20] sm:$0xff]
    %v1054 = vld [vmem:[%s31 + $0x28] sm:$0xff]
    %v1055 = vld [vmem:[%s31 + $0x30] sm:$0xff]
    %v1056 = vld [vmem:[%s31 + $0x38] sm:$0xff]
    %v1057 = vld [vmem:[%s33] sm:$0x1]
    %v1059 = vperm.slane %v1057, 0
    %v1062 = vsel %vm316, %v1045, 0
    %v1065 = vsel %vm316, %v1046, 0
    %v1068 = vsel %vm316, %v1047, 0
    %v1071 = vsel %vm316, %v1048, 0
    %1073 = vmatpush.msra.mxu0 0.0
    %1074 = vmatpush.msra.mxu0 0.0
    %1075 = vmatpush.msra.mxu0 0.0
    %1076 = vmatpush.msra.mxu0 0.0
    %1077 = vmatpush.msra.mxu0 0.0
    %1078 = vmatpush.msra.mxu0 0.0
    %1079 = vmatpush.msra.mxu0 0.0
    %1080 = vmatpush.msra.mxu0 0.0
    %1081 = vmatpush.msra.mxu0 %v1056
    %1082 = vmatpush.msra.mxu0 %v1055
    %1083 = vmatpush.msra.mxu0 %v1054
    %1084 = vmatpush.msra.mxu0 %v1053
    %1085 = vmatpush.msra.mxu0 %v1052
    %1086 = vmatpush.msra.mxu0 %v1051
    %1087 = vmatpush.msra.mxu0 %v1050
    %1088 = vmatpush.msra.mxu0 %v1049
    %1089 = vmatmul.f32.gmra.mxu0 %v1062
    %v1090 = vpop.f32.mrf.mxu0
    %v1091 = vadd.f32 %v1059, %v1090
    %1092 = vmatmul.f32.gmra.mxu0 %v1065
    %v1093 = vpop.f32.mrf.mxu0
    %v1094 = vadd.f32 %v1059, %v1093
    %1095 = vmatmul.f32.gmra.mxu0 %v1068
    %v1096 = vpop.f32.mrf.mxu0
    %v1097 = vadd.f32 %v1059, %v1096
    %1098 = vmatmul.f32.gmra.mxu0 %v1071
    %v1099 = vpop.f32.mrf.mxu0
    %v1100 = vadd.f32 %v1059, %v1099
    %1101 = vdwg.mxu0
    %v1102 = vadd.f32 %v856, %v1091
    %v1103 = vadd.f32 %v857, %v1094
    %v1104 = vadd.f32 %v858, %v1097
    %v1105 = vadd.f32 %v859, %v1100
    %v1106 = vld [vmem:[%s35] sm:$0xff]
    %v1107 = vld [vmem:[%s35 + $0x8] sm:$0xff]
    %v1108 = vld [vmem:[%s35 + $0x10] sm:$0xff]
    %v1109 = vld [vmem:[%s35 + $0x18] sm:$0xff]
    %v1111 = vsel %vm397, %v1102, 0
    %v1114 = vsel %vm397, %v1103, 0
    %v1117 = vsel %vm397, %v1104, 0
    %v1120 = vsel %vm397, %v1105, 0
    %1122 = vmatpush.msra.mxu0 0.0
    %1123 = vmatpush.msra.mxu0 0.0
    %1124 = vmatpush.msra.mxu0 0.0
    %1125 = vmatpush.msra.mxu0 0.0
    %1126 = vmatpush.msra.mxu0 0.0
    %1127 = vmatpush.msra.mxu0 0.0
    %1128 = vmatpush.msra.mxu0 0.0
    %1129 = vmatpush.msra.mxu0 0.0
    %1130 = vmatpush.msra.mxu0 0.0
    %1131 = vmatpush.msra.mxu0 0.0
    %1132 = vmatpush.msra.mxu0 0.0
    %1133 = vmatpush.msra.mxu0 0.0
    %1134 = vmatpush.msra.mxu0 %v1109
    %1135 = vmatpush.msra.mxu0 %v1108
    %1136 = vmatpush.msra.mxu0 %v1107
    %1137 = vmatpush.msra.mxu0 %v1106
    %1138 = vmatmul.f32.gmra.mxu0 %v1111
    %v1139 = vpop.f32.mrf.mxu0
    %v1140 = vadd.f32 0.0, %v1139
    %1141 = vmatmul.f32.gmra.mxu0 %v1114
    %v1142 = vpop.f32.mrf.mxu0
    %v1143 = vadd.f32 0.0, %v1142
    %1144 = vmatmul.f32.gmra.mxu0 %v1117
    %v1145 = vpop.f32.mrf.mxu0
    %v1146 = vadd.f32 0.0, %v1145
    %1147 = vmatmul.f32.gmra.mxu0 %v1120
    %v1148 = vpop.f32.mrf.mxu0
    %v1149 = vadd.f32 0.0, %v1148
    %1150 = vdwg.mxu0
    %v1151 = vld [vmem:[%s37] sm:$0x1]
    %v1152 = vld [vmem:[%s39] sm:$0x1]
    %v1153 = vsel %vm397, %v1140, 0.0
    %1154 = vadd.xlane.f32.xlu0 %v1153
    %v1155 = vpop.xlane.xlu0 %1154
    %v1156 = vsel %vm397, %v1143, 0.0
    %1157 = vadd.xlane.f32.xlu0 %v1156
    %v1158 = vpop.xlane.xlu0 %1157
    %v1159 = vsel %vm397, %v1146, 0.0
    %1160 = vadd.xlane.f32.xlu0 %v1159
    %v1161 = vpop.xlane.xlu0 %1160
    %v1162 = vsel %vm397, %v1149, 0.0
    %1163 = vadd.xlane.f32.xlu0 %v1162
    %v1164 = vpop.xlane.xlu0 %1163
    %v1165 = vmul.f32 %v1155, %v416
    %v1166 = vmul.f32 %v1158, %v416
    %v1167 = vmul.f32 %v1161, %v416
    %v1168 = vmul.f32 %v1164, %v416
    %v1169 = vsub.f32 %v1140, %v1165
    %v1170 = vsub.f32 %v1143, %v1166
    %v1171 = vsub.f32 %v1146, %v1167
    %v1172 = vsub.f32 %v1149, %v1168
    %v1173 = vmul.f32 %v1169, %v1169
    %v1174 = vmul.f32 %v1170, %v1170
    %v1175 = vmul.f32 %v1171, %v1171
    %v1176 = vmul.f32 %v1172, %v1172
    %v1177 = vsel %vm397, %v1173, 0.0
    %1178 = vadd.xlane.f32.xlu0 %v1177
    %v1179 = vpop.xlane.xlu0 %1178
    %v1180 = vsel %vm397, %v1174, 0.0
    %1181 = vadd.xlane.f32.xlu0 %v1180
    %v1182 = vpop.xlane.xlu0 %1181
    %v1183 = vsel %vm397, %v1175, 0.0
    %1184 = vadd.xlane.f32.xlu0 %v1183
    %v1185 = vpop.xlane.xlu0 %1184
    %v1186 = vsel %vm397, %v1176, 0.0
    %1187 = vadd.xlane.f32.xlu0 %v1186
    %v1188 = vpop.xlane.xlu0 %1187
    %v1189 = vmul.f32 %v1179, %v416
    %v1190 = vmul.f32 %v1182, %v416
    %v1191 = vmul.f32 %v1185, %v416
    %v1192 = vmul.f32 %v1188, %v416
    %v1193 = vadd.f32 %v1189, 1e-06
    %v1194 = vadd.f32 %v1190, 1e-06
    %v1195 = vadd.f32 %v1191, 1e-06
    %v1196 = vadd.f32 %v1192, 1e-06
    %v1197 = vrsqrt.pop %v1193
    %v1198 = vmul.f32 %v1197, %v1193
    %v1199 = vmul.f32 %v1198, %v1197
    %v1200 = vmul.f32 0.5, %v1199
    %v1201 = vsub.f32 1.5, %v1200
    %v1202 = vmul.f32 %v1197, %v1201
    %vm1203 = vweird.f32 %v1193
    %vm1204 = vweird.f32 %v1197
    %vm1205 = vmor %vm1203, %vm1204
    %v1206 = vsel %vm1205, %v1197, %v1202
    %v1207 = vrsqrt.pop %v1194
    %v1208 = vmul.f32 %v1207, %v1194
    %v1209 = vmul.f32 %v1208, %v1207
    %v1210 = vmul.f32 0.5, %v1209
    %v1211 = vsub.f32 1.5, %v1210
    %v1212 = vmul.f32 %v1207, %v1211
    %vm1213 = vweird.f32 %v1194
    %vm1214 = vweird.f32 %v1207
    %vm1215 = vmor %vm1213, %vm1214
    %v1216 = vsel %vm1215, %v1207, %v1212
    %v1217 = vrsqrt.pop %v1195
    %v1218 = vmul.f32 %v1217, %v1195
    %v1219 = vmul.f32 %v1218, %v1217
    %v1220 = vmul.f32 0.5, %v1219
    %v1221 = vsub.f32 1.5, %v1220
    %v1222 = vmul.f32 %v1217, %v1221
    %vm1223 = vweird.f32 %v1195
    %vm1224 = vweird.f32 %v1217
    %vm1225 = vmor %vm1223, %vm1224
    %v1226 = vsel %vm1225, %v1217, %v1222
    %v1227 = vrsqrt.pop %v1196
    %v1228 = vmul.f32 %v1227, %v1196
    %v1229 = vmul.f32 %v1228, %v1227
    %v1230 = vmul.f32 0.5, %v1229
    %v1231 = vsub.f32 1.5, %v1230
    %v1232 = vmul.f32 %v1227, %v1231
    %vm1233 = vweird.f32 %v1196
    %vm1234 = vweird.f32 %v1227
    %vm1235 = vmor %vm1233, %vm1234
    %v1236 = vsel %vm1235, %v1227, %v1232
    %v1237 = vmul.f32 %v1169, %v1206
    %v1238 = vmul.f32 %v1170, %v1216
    %v1239 = vmul.f32 %v1171, %v1226
    %v1240 = vmul.f32 %v1172, %v1236
    %v1242 = vperm.slane %v1151, 0
    %v1244 = vmul.f32 %v1237, %v1242
    %v1245 = vmul.f32 %v1238, %v1242
    %v1246 = vmul.f32 %v1239, %v1242
    %v1247 = vmul.f32 %v1240, %v1242
    %v1249 = vperm.slane %v1152, 0
    %v1251 = vadd.f32 %v1244, %v1249
    %v1252 = vadd.f32 %v1245, %v1249
    %v1253 = vadd.f32 %v1246, %v1249
    %v1254 = vadd.f32 %v1247, %v1249
    %v1255 = vld [vmem:[%s3] sm:$0xff]
    %v1256 = vld [vmem:[%s3 + $0x8] sm:$0xff]
    %v1257 = vld [vmem:[%s41] sm:$0x1]
    %v1259 = vperm.slane %v1257, 0
    %v1261 = vadd.f32 %v1251, %v1259
    %v1262 = vadd.f32 %v1252, %v1259
    %v1263 = vadd.f32 %v1253, %v1259
    %v1264 = vadd.f32 %v1254, %v1259
    %v1265 = vld [vmem:[%s43] sm:$0xff]
    %v1266 = vld [vmem:[%s43 + $0x8] sm:$0xff]
    %v1267 = vld [vmem:[%s43 + $0x10] sm:$0xff]
    %v1268 = vld [vmem:[%s43 + $0x18] sm:$0xff]
    %v1269 = vld [vmem:[%s45] sm:$0xff]
    %v1270 = vld [vmem:[%s45 + $0x8] sm:$0xff]
    %v1271 = vld [vmem:[%s45 + $0x10] sm:$0xff]
    %v1272 = vld [vmem:[%s45 + $0x18] sm:$0xff]
    %v1273 = vld [vmem:[%s47] sm:$0x1]
    %v1275 = vperm.slane %v1273, 0
    %v1278 = vsel %vm397, %v1255, 0
    %v1281 = vsel %vm397, %v1256, 0
    %1283 = vmatpush.msra.mxu0 0.0
    %1284 = vmatpush.msra.mxu0 0.0
    %1285 = vmatpush.msra.mxu0 0.0
    %1286 = vmatpush.msra.mxu0 0.0
    %1287 = vmatpush.msra.mxu0 0.0
    %1288 = vmatpush.msra.mxu0 0.0
    %1289 = vmatpush.msra.mxu0 0.0
    %1290 = vmatpush.msra.mxu0 0.0
    %1291 = vmatpush.msra.mxu0 0.0
    %1292 = vmatpush.msra.mxu0 0.0
    %1293 = vmatpush.msra.mxu0 0.0
    %1294 = vmatpush.msra.mxu0 0.0
    %1295 = vmatpush.msra.mxu0 %v1272
    %1296 = vmatpush.msra.mxu0 %v1271
    %1297 = vmatpush.msra.mxu0 %v1270
    %1298 = vmatpush.msra.mxu0 %v1269
    %1299 = vmatmul.f32.gmra.mxu0 %v1278
    %v1300 = vpop.f32.mrf.mxu0
    %v1301 = vadd.f32 %v1275, %v1300
    %1302 = vmatmul.f32.gmra.mxu0 %v1281
    %v1303 = vpop.f32.mrf.mxu0
    %v1304 = vadd.f32 %v1275, %v1303
    %1305 = vdwg.mxu0
    %s1306 = scalar_lea.vmem %s45, 32
    %v1307 = vld [vmem:[%s1306] sm:$0xff]
    %v1308 = vld [vmem:[%s1306 + $0x8] sm:$0xff]
    %v1309 = vld [vmem:[%s1306 + $0x10] sm:$0xff]
    %v1310 = vld [vmem:[%s1306 + $0x18] sm:$0xff]
    %s1311 = scalar_lea.vmem %s47, 1
    %v1312 = vld [vmem:[%s1311] sm:$0x1]
    %v1314 = vperm.slane %v1312, 0
    %1316 = vmatpush.msra.mxu0 0.0
    %1317 = vmatpush.msra.mxu0 0.0
    %1318 = vmatpush.msra.mxu0 0.0
    %1319 = vmatpush.msra.mxu0 0.0
    %1320 = vmatpush.msra.mxu0 0.0
    %1321 = vmatpush.msra.mxu0 0.0
    %1322 = vmatpush.msra.mxu0 0.0
    %1323 = vmatpush.msra.mxu0 0.0
    %1324 = vmatpush.msra.mxu0 0.0
    %1325 = vmatpush.msra.mxu0 0.0
    %1326 = vmatpush.msra.mxu0 0.0
    %1327 = vmatpush.msra.mxu0 0.0
    %1328 = vmatpush.msra.mxu0 %v1310
    %1329 = vmatpush.msra.mxu0 %v1309
    %1330 = vmatpush.msra.mxu0 %v1308
    %1331 = vmatpush.msra.mxu0 %v1307
    %1332 = vmatmul.f32.gmra.mxu0 %v1278
    %v1333 = vpop.f32.mrf.mxu0
    %v1334 = vadd.f32 %v1314, %v1333
    %1335 = vmatmul.f32.gmra.mxu0 %v1281
    %v1336 = vpop.f32.mrf.mxu0
    %v1337 = vadd.f32 %v1314, %v1336
    %1338 = vdwg.mxu0
    %s1339 = scalar_lea.vmem %s45, 64
    %v1340 = vld [vmem:[%s1339] sm:$0xff]
    %v1341 = vld [vmem:[%s1339 + $0x8] sm:$0xff]
    %v1342 = vld [vmem:[%s1339 + $0x10] sm:$0xff]
    %v1343 = vld [vmem:[%s1339 + $0x18] sm:$0xff]
    %s1344 = scalar_lea.vmem %s47, 2
    %v1345 = vld [vmem:[%s1344] sm:$0x1]
    %v1347 = vperm.slane %v1345, 0
    %1349 = vmatpush.msra.mxu0 0.0
    %1350 = vmatpush.msra.mxu0 0.0
    %1351 = vmatpush.msra.mxu0 0.0
    %1352 = vmatpush.msra.mxu0 0.0
    %1353 = vmatpush.msra.mxu0 0.0
    %1354 = vmatpush.msra.mxu0 0.0
    %1355 = vmatpush.msra.mxu0 0.0
    %1356 = vmatpush.msra.mxu0 0.0
    %1357 = vmatpush.msra.mxu0 0.0
    %1358 = vmatpush.msra.mxu0 0.0
    %1359 = vmatpush.msra.mxu0 0.0
    %1360 = vmatpush.msra.mxu0 0.0
    %1361 = vmatpush.msra.mxu0 %v1343
    %1362 = vmatpush.msra.mxu0 %v1342
    %1363 = vmatpush.msra.mxu0 %v1341
    %1364 = vmatpush.msra.mxu0 %v1340
    %1365 = vmatmul.f32.gmra.mxu0 %v1278
    %v1366 = vpop.f32.mrf.mxu0
    %v1367 = vadd.f32 %v1347, %v1366
    %1368 = vmatmul.f32.gmra.mxu0 %v1281
    %v1369 = vpop.f32.mrf.mxu0
    %v1370 = vadd.f32 %v1347, %v1369
    %1371 = vdwg.mxu0
    %v1373 = vsel %vm397, %v1301, 0
    %v1376 = vsel %vm397, %v1334, 0
    %1378 = vmatpush.xpose.msra.mxu0 0.0
    %1379 = vmatpush.xpose.msra.mxu0 0.0
    %1380 = vmatpush.xpose.msra.mxu0 0.0
    %1381 = vmatpush.xpose.msra.mxu0 0.0
    %1382 = vmatpush.xpose.msra.mxu0 0.0
    %1383 = vmatpush.xpose.msra.mxu0 0.0
    %1384 = vmatpush.xpose.msra.mxu0 0.0
    %1385 = vmatpush.xpose.msra.mxu0 0.0
    %1386 = vmatpush.xpose.msra.mxu0 0.0
    %1387 = vmatpush.xpose.msra.mxu0 0.0
    %1388 = vmatpush.xpose.msra.mxu0 0.0
    %1389 = vmatpush.xpose.msra.mxu0 0.0
    %1390 = vmatpush.xpose.msra.mxu0 0.0
    %1391 = vmatpush.xpose.msra.mxu0 0.0
    %1392 = vmatpush.xpose.msra.mxu0 0.0
    %1393 = vmatpush.xpose.msra.mxu0 %v1376
    %1394 = vmatmul.f32.gmra.mxu0 %v1373
    %v1395 = vpop.f32.mrf.mxu0
    %v1396 = vadd.f32 0.0, %v1395
    %1397 = vdwg.mxu0
    %v1399 = vsel %vm397, %v1304, 0
    %v1402 = vsel %vm397, %v1337, 0
    %1404 = vmatpush.xpose.msra.mxu0 0.0
    %1405 = vmatpush.xpose.msra.mxu0 0.0
    %1406 = vmatpush.xpose.msra.mxu0 0.0
    %1407 = vmatpush.xpose.msra.mxu0 0.0
    %1408 = vmatpush.xpose.msra.mxu0 0.0
    %1409 = vmatpush.xpose.msra.mxu0 0.0
    %1410 = vmatpush.xpose.msra.mxu0 0.0
    %1411 = vmatpush.xpose.msra.mxu0 0.0
    %1412 = vmatpush.xpose.msra.mxu0 0.0
    %1413 = vmatpush.xpose.msra.mxu0 0.0
    %1414 = vmatpush.xpose.msra.mxu0 0.0
    %1415 = vmatpush.xpose.msra.mxu0 0.0
    %1416 = vmatpush.xpose.msra.mxu0 0.0
    %1417 = vmatpush.xpose.msra.mxu0 0.0
    %1418 = vmatpush.xpose.msra.mxu0 0.0
    %1419 = vmatpush.xpose.msra.mxu0 %v1402
    %1420 = vmatmul.f32.gmra.mxu0 %v1399
    %v1421 = vpop.f32.mrf.mxu0
    %v1422 = vadd.f32 0.0, %v1421
    %1423 = vdwg.mxu0
    %vm1424 = vcmask 64512
    %v1425 = vsel %vm1424, %v1396, -inf
    %1426 = vmax.xlane.f32.xlu0 %v1425
    %v1427 = vpop.xlane.xlu0 %1426
    %v1428 = vsel %vm1424, %v1422, -inf
    %1429 = vmax.xlane.f32.xlu0 %v1428
    %v1430 = vpop.xlane.xlu0 %1429
    %v1431 = vsub.f32 %v1396, %v1427
    %v1432 = vsub.f32 %v1422, %v1430
    %v1433 = vmul.f32 %v1431, 1.442695
    %v1434 = vpow.pop %v1433
    %v1435 = vmul.f32 %v1432, 1.442695
    %v1436 = vpow.pop %v1435
    %v1437 = vsel %vm1424, %v1434, 0.0
    %1438 = vadd.xlane.f32.xlu0 %v1437
    %v1439 = vpop.xlane.xlu0 %1438
    %v1440 = vsel %vm1424, %v1436, 0.0
    %1441 = vadd.xlane.f32.xlu0 %v1440
    %v1442 = vpop.xlane.xlu0 %1441
    %v1443 = vrcp.pop %v1439
    %v1444 = vrcp.pop %v1442
    %v1445 = vmul.f32 %v1434, %v1443
    %v1446 = vmul.f32 %v1436, %v1444
    %v1448 = vsel %vm1424, %v1445, 0
    %1450 = vmatpush.msra.mxu0 0.0
    %1451 = vmatpush.msra.mxu0 0.0
    %1452 = vmatpush.msra.mxu0 0.0
    %1453 = vmatpush.msra.mxu0 0.0
    %1454 = vmatpush.msra.mxu0 0.0
    %1455 = vmatpush.msra.mxu0 0.0
    %1456 = vmatpush.msra.mxu0 0.0
    %1457 = vmatpush.msra.mxu0 0.0
    %1458 = vmatpush.msra.mxu0 0.0
    %1459 = vmatpush.msra.mxu0 0.0
    %1460 = vmatpush.msra.mxu0 0.0
    %1461 = vmatpush.msra.mxu0 0.0
    %1462 = vmatpush.msra.mxu0 0.0
    %1463 = vmatpush.msra.mxu0 0.0
    %1464 = vmatpush.msra.mxu0 0.0
    %1465 = vmatpush.msra.mxu0 %v1367
    %1466 = vmatmul.f32.gmra.mxu0 %v1448
    %v1467 = vpop.f32.mrf.mxu0
    %v1468 = vadd.f32 0.0, %v1467
    %1469 = vdwg.mxu0
    %v1471 = vsel %vm1424, %v1446, 0
    %1473 = vmatpush.msra.mxu0 0.0
    %1474 = vmatpush.msra.mxu0 0.0
    %1475 = vmatpush.msra.mxu0 0.0
    %1476 = vmatpush.msra.mxu0 0.0
    %1477 = vmatpush.msra.mxu0 0.0
    %1478 = vmatpush.msra.mxu0 0.0
    %1479 = vmatpush.msra.mxu0 0.0
    %1480 = vmatpush.msra.mxu0 0.0
    %1481 = vmatpush.msra.mxu0 0.0
    %1482 = vmatpush.msra.mxu0 0.0
    %1483 = vmatpush.msra.mxu0 0.0
    %1484 = vmatpush.msra.mxu0 0.0
    %1485 = vmatpush.msra.mxu0 0.0
    %1486 = vmatpush.msra.mxu0 0.0
    %1487 = vmatpush.msra.mxu0 0.0
    %1488 = vmatpush.msra.mxu0 %v1370
    %1489 = vmatmul.f32.gmra.mxu0 %v1471
    %v1490 = vpop.f32.mrf.mxu0
    %v1491 = vadd.f32 0.0, %v1490
    %1492 = vdwg.mxu0
    %s1493 = scalar_lea.vmem %s45, 96
    %v1494 = vld [vmem:[%s1493] sm:$0xff]
    %v1495 = vld [vmem:[%s1493 + $0x8] sm:$0xff]
    %v1496 = vld [vmem:[%s1493 + $0x10] sm:$0xff]
    %v1497 = vld [vmem:[%s1493 + $0x18] sm:$0xff]
    %s1498 = scalar_lea.vmem %s47, 3
    %v1499 = vld [vmem:[%s1498] sm:$0x1]
    %v1501 = vperm.slane %v1499, 0
    %v1504 = vsel %vm397, %v1468, 0
    %v1507 = vsel %vm397, %v1491, 0
    %1509 = vmatpush.msra.mxu0 0.0
    %1510 = vmatpush.msra.mxu0 0.0
    %1511 = vmatpush.msra.mxu0 0.0
    %1512 = vmatpush.msra.mxu0 0.0
    %1513 = vmatpush.msra.mxu0 0.0
    %1514 = vmatpush.msra.mxu0 0.0
    %1515 = vmatpush.msra.mxu0 0.0
    %1516 = vmatpush.msra.mxu0 0.0
    %1517 = vmatpush.msra.mxu0 0.0
    %1518 = vmatpush.msra.mxu0 0.0
    %1519 = vmatpush.msra.mxu0 0.0
    %1520 = vmatpush.msra.mxu0 0.0
    %1521 = vmatpush.msra.mxu0 %v1497
    %1522 = vmatpush.msra.mxu0 %v1496
    %1523 = vmatpush.msra.mxu0 %v1495
    %1524 = vmatpush.msra.mxu0 %v1494
    %1525 = vmatmul.f32.gmra.mxu0 %v1504
    %v1526 = vpop.f32.mrf.mxu0
    %v1527 = vadd.f32 %v1501, %v1526
    %1528 = vmatmul.f32.gmra.mxu0 %v1507
    %v1529 = vpop.f32.mrf.mxu0
    %v1530 = vadd.f32 %v1501, %v1529
    %1531 = vdwg.mxu0
    %v1532 = vld [vmem:[%s49] sm:$0x1]
    %v1533 = vld [vmem:[%s51] sm:$0x1]
    %v1534 = vsel %vm397, %v1527, 0.0
    %1535 = vadd.xlane.f32.xlu0 %v1534
    %v1536 = vpop.xlane.xlu0 %1535
    %v1537 = vsel %vm397, %v1530, 0.0
    %1538 = vadd.xlane.f32.xlu0 %v1537
    %v1539 = vpop.xlane.xlu0 %1538
    %v1540 = vmul.f32 %v1536, %v416
    %v1541 = vmul.f32 %v1539, %v416
    %v1542 = vsub.f32 %v1527, %v1540
    %v1543 = vsub.f32 %v1530, %v1541
    %v1544 = vmul.f32 %v1542, %v1542
    %v1545 = vmul.f32 %v1543, %v1543
    %v1546 = vsel %vm397, %v1544, 0.0
    %1547 = vadd.xlane.f32.xlu0 %v1546
    %v1548 = vpop.xlane.xlu0 %1547
    %v1549 = vsel %vm397, %v1545, 0.0
    %1550 = vadd.xlane.f32.xlu0 %v1549
    %v1551 = vpop.xlane.xlu0 %1550
    %v1552 = vmul.f32 %v1548, %v416
    %v1553 = vmul.f32 %v1551, %v416
    %v1554 = vadd.f32 %v1552, 1e-06
    %v1555 = vadd.f32 %v1553, 1e-06
    %v1556 = vrsqrt.pop %v1554
    %v1557 = vmul.f32 %v1556, %v1554
    %v1558 = vmul.f32 %v1557, %v1556
    %v1559 = vmul.f32 0.5, %v1558
    %v1560 = vsub.f32 1.5, %v1559
    %v1561 = vmul.f32 %v1556, %v1560
    %vm1562 = vweird.f32 %v1554
    %vm1563 = vweird.f32 %v1556
    %vm1564 = vmor %vm1562, %vm1563
    %v1565 = vsel %vm1564, %v1556, %v1561
    %v1566 = vrsqrt.pop %v1555
    %v1567 = vmul.f32 %v1566, %v1555
    %v1568 = vmul.f32 %v1567, %v1566
    %v1569 = vmul.f32 0.5, %v1568
    %v1570 = vsub.f32 1.5, %v1569
    %v1571 = vmul.f32 %v1566, %v1570
    %vm1572 = vweird.f32 %v1555
    %vm1573 = vweird.f32 %v1566
    %vm1574 = vmor %vm1572, %vm1573
    %v1575 = vsel %vm1574, %v1566, %v1571
    %v1576 = vmul.f32 %v1542, %v1565
    %v1577 = vmul.f32 %v1543, %v1575
    %v1579 = vperm.slane %v1532, 0
    %v1581 = vmul.f32 %v1576, %v1579
    %v1582 = vmul.f32 %v1577, %v1579
    %v1584 = vperm.slane %v1533, 0
    %v1586 = vadd.f32 %v1581, %v1584
    %v1587 = vadd.f32 %v1582, %v1584
    %v1588 = vadd.f32 %v1586, %v1255
    %v1589 = vadd.f32 %v1587, %v1256
    %v1590 = vadd.f32 %v1261, %v1265
    %v1591 = vadd.f32 %v1262, %v1266
    %v1592 = vadd.f32 %v1263, %v1267
    %v1593 = vadd.f32 %v1264, %v1268
    %s1594 = scalar_lea.vmem %s45, 128
    %v1595 = vld [vmem:[%s1594] sm:$0xff]
    %v1596 = vld [vmem:[%s1594 + $0x8] sm:$0xff]
    %v1597 = vld [vmem:[%s1594 + $0x10] sm:$0xff]
    %v1598 = vld [vmem:[%s1594 + $0x18] sm:$0xff]
    %s1599 = scalar_lea.vmem %s47, 4
    %v1600 = vld [vmem:[%s1599] sm:$0x1]
    %v1602 = vperm.slane %v1600, 0
    %v1605 = vsel %vm397, %v1588, 0
    %v1608 = vsel %vm397, %v1589, 0
    %1610 = vmatpush.msra.mxu0 0.0
    %1611 = vmatpush.msra.mxu0 0.0
    %1612 = vmatpush.msra.mxu0 0.0
    %1613 = vmatpush.msra.mxu0 0.0
    %1614 = vmatpush.msra.mxu0 0.0
    %1615 = vmatpush.msra.mxu0 0.0
    %1616 = vmatpush.msra.mxu0 0.0
    %1617 = vmatpush.msra.mxu0 0.0
    %1618 = vmatpush.msra.mxu0 0.0
    %1619 = vmatpush.msra.mxu0 0.0
    %1620 = vmatpush.msra.mxu0 0.0
    %1621 = vmatpush.msra.mxu0 0.0
    %1622 = vmatpush.msra.mxu0 %v1598
    %1623 = vmatpush.msra.mxu0 %v1597
    %1624 = vmatpush.msra.mxu0 %v1596
    %1625 = vmatpush.msra.mxu0 %v1595
    %1626 = vmatmul.f32.gmra.mxu0 %v1605
    %v1627 = vpop.f32.mrf.mxu0
    %v1628 = vadd.f32 %v1602, %v1627
    %1629 = vmatmul.f32.gmra.mxu0 %v1608
    %v1630 = vpop.f32.mrf.mxu0
    %v1631 = vadd.f32 %v1602, %v1630
    %1632 = vdwg.mxu0
    %s1633 = scalar_lea.vmem %s45, 160
    %v1634 = vld [vmem:[%s1633] sm:$0xff]
    %v1635 = vld [vmem:[%s1633 + $0x8] sm:$0xff]
    %v1636 = vld [vmem:[%s1633 + $0x10] sm:$0xff]
    %v1637 = vld [vmem:[%s1633 + $0x18] sm:$0xff]
    %s1638 = scalar_lea.vmem %s47, 5
    %v1639 = vld [vmem:[%s1638] sm:$0x1]
    %v1641 = vperm.slane %v1639, 0
    %v1644 = vsel %vm397, %v1590, 0
    %v1647 = vsel %vm397, %v1591, 0
    %v1650 = vsel %vm397, %v1592, 0
    %v1653 = vsel %vm397, %v1593, 0
    %1655 = vmatpush.msra.mxu0 0.0
    %1656 = vmatpush.msra.mxu0 0.0
    %1657 = vmatpush.msra.mxu0 0.0
    %1658 = vmatpush.msra.mxu0 0.0
    %1659 = vmatpush.msra.mxu0 0.0
    %1660 = vmatpush.msra.mxu0 0.0
    %1661 = vmatpush.msra.mxu0 0.0
    %1662 = vmatpush.msra.mxu0 0.0
    %1663 = vmatpush.msra.mxu0 0.0
    %1664 = vmatpush.msra.mxu0 0.0
    %1665 = vmatpush.msra.mxu0 0.0
    %1666 = vmatpush.msra.mxu0 0.0
    %1667 = vmatpush.msra.mxu0 %v1637
    %1668 = vmatpush.msra.mxu0 %v1636
    %1669 = vmatpush.msra.mxu0 %v1635
    %1670 = vmatpush.msra.mxu0 %v1634
    %1671 = vmatmul.f32.gmra.mxu0 %v1644
    %v1672 = vpop.f32.mrf.mxu0
    %v1673 = vadd.f32 %v1641, %v1672
    %1674 = vmatmul.f32.gmra.mxu0 %v1647
    %v1675 = vpop.f32.mrf.mxu0
    %v1676 = vadd.f32 %v1641, %v1675
    %1677 = vmatmul.f32.gmra.mxu0 %v1650
    %v1678 = vpop.f32.mrf.mxu0
    %v1679 = vadd.f32 %v1641, %v1678
    %1680 = vmatmul.f32.gmra.mxu0 %v1653
    %v1681 = vpop.f32.mrf.mxu0
    %v1682 = vadd.f32 %v1641, %v1681
    %1683 = vdwg.mxu0
    %s1684 = scalar_lea.vmem %s45, 192
    %v1685 = vld [vmem:[%s1684] sm:$0xff]
    %v1686 = vld [vmem:[%s1684 + $0x8] sm:$0xff]
    %v1687 = vld [vmem:[%s1684 + $0x10] sm:$0xff]
    %v1688 = vld [vmem:[%s1684 + $0x18] sm:$0xff]
    %s1689 = scalar_lea.vmem %s47, 6
    %v1690 = vld [vmem:[%s1689] sm:$0x1]
    %v1692 = vperm.slane %v1690, 0
    %v1695 = vsel %vm397, %v1261, 0
    %v1698 = vsel %vm397, %v1262, 0
    %v1701 = vsel %vm397, %v1263, 0
    %v1704 = vsel %vm397, %v1264, 0
    %1706 = vmatpush.msra.mxu0 0.0
    %1707 = vmatpush.msra.mxu0 0.0
    %1708 = vmatpush.msra.mxu0 0.0
    %1709 = vmatpush.msra.mxu0 0.0
    %1710 = vmatpush.msra.mxu0 0.0
    %1711 = vmatpush.msra.mxu0 0.0
    %1712 = vmatpush.msra.mxu0 0.0
    %1713 = vmatpush.msra.mxu0 0.0
    %1714 = vmatpush.msra.mxu0 0.0
    %1715 = vmatpush.msra.mxu0 0.0
    %1716 = vmatpush.msra.mxu0 0.0
    %1717 = vmatpush.msra.mxu0 0.0
    %1718 = vmatpush.msra.mxu0 %v1688
    %1719 = vmatpush.msra.mxu0 %v1687
    %1720 = vmatpush.msra.mxu0 %v1686
    %1721 = vmatpush.msra.mxu0 %v1685
    %1722 = vmatmul.f32.gmra.mxu0 %v1695
    %v1723 = vpop.f32.mrf.mxu0
    %v1724 = vadd.f32 %v1692, %v1723
    %1725 = vmatmul.f32.gmra.mxu0 %v1698
    %v1726 = vpop.f32.mrf.mxu0
    %v1727 = vadd.f32 %v1692, %v1726
    %1728 = vmatmul.f32.gmra.mxu0 %v1701
    %v1729 = vpop.f32.mrf.mxu0
    %v1730 = vadd.f32 %v1692, %v1729
    %1731 = vmatmul.f32.gmra.mxu0 %v1704
    %v1732 = vpop.f32.mrf.mxu0
    %v1733 = vadd.f32 %v1692, %v1732
    %1734 = vdwg.mxu0
    %v1736 = vsel %vm397, %v1628, 0
    %v1739 = vsel %vm397, %v1673, 0
    %v1742 = vsel %vm397, %v1676, 0
    %1744 = vmatpush.xpose.msra.mxu0 0.0
    %1745 = vmatpush.xpose.msra.mxu0 0.0
    %1746 = vmatpush.xpose.msra.mxu0 0.0
    %1747 = vmatpush.xpose.msra.mxu0 0.0
    %1748 = vmatpush.xpose.msra.mxu0 0.0
    %1749 = vmatpush.xpose.msra.mxu0 0.0
    %1750 = vmatpush.xpose.msra.mxu0 0.0
    %1751 = vmatpush.xpose.msra.mxu0 0.0
    %1752 = vmatpush.xpose.msra.mxu0 0.0
    %1753 = vmatpush.xpose.msra.mxu0 0.0
    %1754 = vmatpush.xpose.msra.mxu0 0.0
    %1755 = vmatpush.xpose.msra.mxu0 0.0
    %1756 = vmatpush.xpose.msra.mxu0 0.0
    %1757 = vmatpush.xpose.msra.mxu0 0.0
    %1758 = vmatpush.xpose.msra.mxu0 %v1742
    %1759 = vmatpush.xpose.msra.mxu0 %v1739
    %1760 = vmatmul.f32.gmra.mxu0 %v1736
    %v1761 = vpop.f32.mrf.mxu0
    %v1762 = vadd.f32 0.0, %v1761
    %1763 = vdwg.mxu0
    %v1765 = vsel %vm397, %v1631, 0
    %v1768 = vsel %vm397, %v1679, 0
    %v1771 = vsel %vm397, %v1682, 0
    %1773 = vmatpush.xpose.msra.mxu0 0.0
    %1774 = vmatpush.xpose.msra.mxu0 0.0
    %1775 = vmatpush.xpose.msra.mxu0 0.0
    %1776 = vmatpush.xpose.msra.mxu0 0.0
    %1777 = vmatpush.xpose.msra.mxu0 0.0
    %1778 = vmatpush.xpose.msra.mxu0 0.0
    %1779 = vmatpush.xpose.msra.mxu0 0.0
    %1780 = vmatpush.xpose.msra.mxu0 0.0
    %1781 = vmatpush.xpose.msra.mxu0 0.0
    %1782 = vmatpush.xpose.msra.mxu0 0.0
    %1783 = vmatpush.xpose.msra.mxu0 0.0
    %1784 = vmatpush.xpose.msra.mxu0 0.0
    %1785 = vmatpush.xpose.msra.mxu0 0.0
    %1786 = vmatpush.xpose.msra.mxu0 0.0
    %1787 = vmatpush.xpose.msra.mxu0 %v1771
    %1788 = vmatpush.xpose.msra.mxu0 %v1768
    %1789 = vmatmul.f32.gmra.mxu0 %v1765
    %v1790 = vpop.f32.mrf.mxu0
    %v1791 = vadd.f32 0.0, %v1790
    %1792 = vdwg.mxu0
    %v1793 = vsel %vm704, %v1762, -inf
    %1794 = vmax.xlane.f32.xlu0 %v1793
    %v1795 = vpop.xlane.xlu0 %1794
    %v1796 = vsel %vm704, %v1791, -inf
    %1797 = vmax.xlane.f32.xlu0 %v1796
    %v1798 = vpop.xlane.xlu0 %1797
    %v1799 = vsub.f32 %v1762, %v1795
    %v1800 = vsub.f32 %v1791, %v1798
    %v1801 = vmul.f32 %v1799, 1.442695
    %v1802 = vpow.pop %v1801
    %v1803 = vmul.f32 %v1800, 1.442695
    %v1804 = vpow.pop %v1803
    %v1805 = vsel %vm704, %v1802, 0.0
    %1806 = vadd.xlane.f32.xlu0 %v1805
    %v1807 = vpop.xlane.xlu0 %1806
    %v1808 = vsel %vm704, %v1804, 0.0
    %1809 = vadd.xlane.f32.xlu0 %v1808
    %v1810 = vpop.xlane.xlu0 %1809
    %v1811 = vrcp.pop %v1807
    %v1812 = vrcp.pop %v1810
    %v1813 = vmul.f32 %v1802, %v1811
    %v1814 = vmul.f32 %v1804, %v1812
    %v1816 = vsel %vm704, %v1813, 0
    %1818 = vmatpush.msra.mxu0 0.0
    %1819 = vmatpush.msra.mxu0 0.0
    %1820 = vmatpush.msra.mxu0 0.0
    %1821 = vmatpush.msra.mxu0 0.0
    %1822 = vmatpush.msra.mxu0 0.0
    %1823 = vmatpush.msra.mxu0 0.0
    %1824 = vmatpush.msra.mxu0 0.0
    %1825 = vmatpush.msra.mxu0 0.0
    %1826 = vmatpush.msra.mxu0 0.0
    %1827 = vmatpush.msra.mxu0 0.0
    %1828 = vmatpush.msra.mxu0 0.0
    %1829 = vmatpush.msra.mxu0 0.0
    %1830 = vmatpush.msra.mxu0 0.0
    %1831 = vmatpush.msra.mxu0 0.0
    %1832 = vmatpush.msra.mxu0 %v1727
    %1833 = vmatpush.msra.mxu0 %v1724
    %1834 = vmatmul.f32.gmra.mxu0 %v1816
    %v1835 = vpop.f32.mrf.mxu0
    %v1836 = vadd.f32 0.0, %v1835
    %1837 = vdwg.mxu0
    %v1839 = vsel %vm704, %v1814, 0
    %1841 = vmatpush.msra.mxu0 0.0
    %1842 = vmatpush.msra.mxu0 0.0
    %1843 = vmatpush.msra.mxu0 0.0
    %1844 = vmatpush.msra.mxu0 0.0
    %1845 = vmatpush.msra.mxu0 0.0
    %1846 = vmatpush.msra.mxu0 0.0
    %1847 = vmatpush.msra.mxu0 0.0
    %1848 = vmatpush.msra.mxu0 0.0
    %1849 = vmatpush.msra.mxu0 0.0
    %1850 = vmatpush.msra.mxu0 0.0
    %1851 = vmatpush.msra.mxu0 0.0
    %1852 = vmatpush.msra.mxu0 0.0
    %1853 = vmatpush.msra.mxu0 0.0
    %1854 = vmatpush.msra.mxu0 0.0
    %1855 = vmatpush.msra.mxu0 %v1733
    %1856 = vmatpush.msra.mxu0 %v1730
    %1857 = vmatmul.f32.gmra.mxu0 %v1839
    %v1858 = vpop.f32.mrf.mxu0
    %v1859 = vadd.f32 0.0, %v1858
    %1860 = vdwg.mxu0
    %s1861 = scalar_lea.vmem %s45, 224
    %v1862 = vld [vmem:[%s1861] sm:$0xff]
    %v1863 = vld [vmem:[%s1861 + $0x8] sm:$0xff]
    %v1864 = vld [vmem:[%s1861 + $0x10] sm:$0xff]
    %v1865 = vld [vmem:[%s1861 + $0x18] sm:$0xff]
    %s1866 = scalar_lea.vmem %s47, 7
    %v1867 = vld [vmem:[%s1866] sm:$0x1]
    %v1869 = vperm.slane %v1867, 0
    %v1872 = vsel %vm397, %v1836, 0
    %v1875 = vsel %vm397, %v1859, 0
    %1877 = vmatpush.msra.mxu0 0.0
    %1878 = vmatpush.msra.mxu0 0.0
    %1879 = vmatpush.msra.mxu0 0.0
    %1880 = vmatpush.msra.mxu0 0.0
    %1881 = vmatpush.msra.mxu0 0.0
    %1882 = vmatpush.msra.mxu0 0.0
    %1883 = vmatpush.msra.mxu0 0.0
    %1884 = vmatpush.msra.mxu0 0.0
    %1885 = vmatpush.msra.mxu0 0.0
    %1886 = vmatpush.msra.mxu0 0.0
    %1887 = vmatpush.msra.mxu0 0.0
    %1888 = vmatpush.msra.mxu0 0.0
    %1889 = vmatpush.msra.mxu0 %v1865
    %1890 = vmatpush.msra.mxu0 %v1864
    %1891 = vmatpush.msra.mxu0 %v1863
    %1892 = vmatpush.msra.mxu0 %v1862
    %1893 = vmatmul.f32.gmra.mxu0 %v1872
    %v1894 = vpop.f32.mrf.mxu0
    %v1895 = vadd.f32 %v1869, %v1894
    %1896 = vmatmul.f32.gmra.mxu0 %v1875
    %v1897 = vpop.f32.mrf.mxu0
    %v1898 = vadd.f32 %v1869, %v1897
    %1899 = vdwg.mxu0
    %v1900 = vadd.f32 %v1586, %v1895
    %v1901 = vadd.f32 %v1587, %v1898
    %s1902 = scalar_lea.vmem %s49, 1
    %v1903 = vld [vmem:[%s1902] sm:$0x1]
    %s1904 = scalar_lea.vmem %s51, 1
    %v1905 = vld [vmem:[%s1904] sm:$0x1]
    %v1906 = vsel %vm397, %v1900, 0.0
    %1907 = vadd.xlane.f32.xlu0 %v1906
    %v1908 = vpop.xlane.xlu0 %1907
    %v1909 = vsel %vm397, %v1901, 0.0
    %1910 = vadd.xlane.f32.xlu0 %v1909
    %v1911 = vpop.xlane.xlu0 %1910
    %v1912 = vmul.f32 %v1908, %v416
    %v1913 = vmul.f32 %v1911, %v416
    %v1914 = vsub.f32 %v1900, %v1912
    %v1915 = vsub.f32 %v1901, %v1913
    %v1916 = vmul.f32 %v1914, %v1914
    %v1917 = vmul.f32 %v1915, %v1915
    %v1918 = vsel %vm397, %v1916, 0.0
    %1919 = vadd.xlane.f32.xlu0 %v1918
    %v1920 = vpop.xlane.xlu0 %1919
    %v1921 = vsel %vm397, %v1917, 0.0
    %1922 = vadd.xlane.f32.xlu0 %v1921
    %v1923 = vpop.xlane.xlu0 %1922
    %v1924 = vmul.f32 %v1920, %v416
    %v1925 = vmul.f32 %v1923, %v416
    %v1926 = vadd.f32 %v1924, 1e-06
    %v1927 = vadd.f32 %v1925, 1e-06
    %v1928 = vrsqrt.pop %v1926
    %v1929 = vmul.f32 %v1928, %v1926
    %v1930 = vmul.f32 %v1929, %v1928
    %v1931 = vmul.f32 0.5, %v1930
    %v1932 = vsub.f32 1.5, %v1931
    %v1933 = vmul.f32 %v1928, %v1932
    %vm1934 = vweird.f32 %v1926
    %vm1935 = vweird.f32 %v1928
    %vm1936 = vmor %vm1934, %vm1935
    %v1937 = vsel %vm1936, %v1928, %v1933
    %v1938 = vrsqrt.pop %v1927
    %v1939 = vmul.f32 %v1938, %v1927
    %v1940 = vmul.f32 %v1939, %v1938
    %v1941 = vmul.f32 0.5, %v1940
    %v1942 = vsub.f32 1.5, %v1941
    %v1943 = vmul.f32 %v1938, %v1942
    %vm1944 = vweird.f32 %v1927
    %vm1945 = vweird.f32 %v1938
    %vm1946 = vmor %vm1944, %vm1945
    %v1947 = vsel %vm1946, %v1938, %v1943
    %v1948 = vmul.f32 %v1914, %v1937
    %v1949 = vmul.f32 %v1915, %v1947
    %v1951 = vperm.slane %v1903, 0
    %v1953 = vmul.f32 %v1948, %v1951
    %v1954 = vmul.f32 %v1949, %v1951
    %v1956 = vperm.slane %v1905, 0
    %v1958 = vadd.f32 %v1953, %v1956
    %v1959 = vadd.f32 %v1954, %v1956
    %v1960 = vld [vmem:[%s53] sm:$0xff]
    %v1961 = vld [vmem:[%s53 + $0x8] sm:$0xff]
    %v1962 = vld [vmem:[%s53 + $0x10] sm:$0xff]
    %v1963 = vld [vmem:[%s53 + $0x18] sm:$0xff]
    %v1964 = vld [vmem:[%s55] sm:$0x1]
    %v1966 = vperm.slane %v1964, 0
    %v1969 = vsel %vm397, %v1958, 0
    %v1972 = vsel %vm397, %v1959, 0
    %1974 = vmatpush.msra.mxu0 0.0
    %1975 = vmatpush.msra.mxu0 0.0
    %1976 = vmatpush.msra.mxu0 0.0
    %1977 = vmatpush.msra.mxu0 0.0
    %1978 = vmatpush.msra.mxu0 0.0
    %1979 = vmatpush.msra.mxu0 0.0
    %1980 = vmatpush.msra.mxu0 0.0
    %1981 = vmatpush.msra.mxu0 0.0
    %1982 = vmatpush.msra.mxu0 0.0
    %1983 = vmatpush.msra.mxu0 0.0
    %1984 = vmatpush.msra.mxu0 0.0
    %1985 = vmatpush.msra.mxu0 0.0
    %1986 = vmatpush.msra.mxu0 %v1963
    %1987 = vmatpush.msra.mxu0 %v1962
    %1988 = vmatpush.msra.mxu0 %v1961
    %1989 = vmatpush.msra.mxu0 %v1960
    %1990 = vmatmul.f32.gmra.mxu0 %v1969
    %v1991 = vpop.f32.mrf.mxu0
    %v1992 = vadd.f32 %v1966, %v1991
    %1993 = vmatmul.f32.gmra.mxu0 %v1972
    %v1994 = vpop.f32.mrf.mxu0
    %v1995 = vadd.f32 %v1966, %v1994
    %1996 = vdwg.mxu0
    %v1997 = vmax.f32 %v1992, 0.0
    %v1998 = vmax.f32 %v1995, 0.0
    %v1999 = vld [vmem:[%s57] sm:$0xff]
    %v2000 = vld [vmem:[%s57 + $0x8] sm:$0xff]
    %v2001 = vld [vmem:[%s57 + $0x10] sm:$0xff]
    %v2002 = vld [vmem:[%s57 + $0x18] sm:$0xff]
    %v2003 = vld [vmem:[%s57 + $0x20] sm:$0xff]
    %v2004 = vld [vmem:[%s57 + $0x28] sm:$0xff]
    %v2005 = vld [vmem:[%s57 + $0x30] sm:$0xff]
    %v2006 = vld [vmem:[%s57 + $0x38] sm:$0xff]
    %v2007 = vld [vmem:[%s59] sm:$0x1]
    %v2009 = vperm.slane %v2007, 0
    %v2012 = vsel %vm316, %v1997, 0
    %v2015 = vsel %vm316, %v1998, 0
    %2017 = vmatpush.msra.mxu0 0.0
    %2018 = vmatpush.msra.mxu0 0.0
    %2019 = vmatpush.msra.mxu0 0.0
    %2020 = vmatpush.msra.mxu0 0.0
    %2021 = vmatpush.msra.mxu0 0.0
    %2022 = vmatpush.msra.mxu0 0.0
    %2023 = vmatpush.msra.mxu0 0.0
    %2024 = vmatpush.msra.mxu0 0.0
    %2025 = vmatpush.msra.mxu0 %v2006
    %2026 = vmatpush.msra.mxu0 %v2005
    %2027 = vmatpush.msra.mxu0 %v2004
    %2028 = vmatpush.msra.mxu0 %v2003
    %2029 = vmatpush.msra.mxu0 %v2002
    %2030 = vmatpush.msra.mxu0 %v2001
    %2031 = vmatpush.msra.mxu0 %v2000
    %2032 = vmatpush.msra.mxu0 %v1999
    %2033 = vmatmul.f32.gmra.mxu0 %v2012
    %v2034 = vpop.f32.mrf.mxu0
    %v2035 = vadd.f32 %v2009, %v2034
    %2036 = vmatmul.f32.gmra.mxu0 %v2015
    %v2037 = vpop.f32.mrf.mxu0
    %v2038 = vadd.f32 %v2009, %v2037
    %2039 = vdwg.mxu0
    %v2040 = vadd.f32 %v1958, %v2035
    %v2041 = vadd.f32 %v1959, %v2038
    %s2042 = scalar_lea.vmem %s49, 2
    %v2043 = vld [vmem:[%s2042] sm:$0x1]
    %s2044 = scalar_lea.vmem %s51, 2
    %v2045 = vld [vmem:[%s2044] sm:$0x1]
    %v2046 = vsel %vm397, %v2040, 0.0
    %2047 = vadd.xlane.f32.xlu0 %v2046
    %v2048 = vpop.xlane.xlu0 %2047
    %v2049 = vsel %vm397, %v2041, 0.0
    %2050 = vadd.xlane.f32.xlu0 %v2049
    %v2051 = vpop.xlane.xlu0 %2050
    %v2052 = vmul.f32 %v2048, %v416
    %v2053 = vmul.f32 %v2051, %v416
    %v2054 = vsub.f32 %v2040, %v2052
    %v2055 = vsub.f32 %v2041, %v2053
    %v2056 = vmul.f32 %v2054, %v2054
    %v2057 = vmul.f32 %v2055, %v2055
    %v2058 = vsel %vm397, %v2056, 0.0
    %2059 = vadd.xlane.f32.xlu0 %v2058
    %v2060 = vpop.xlane.xlu0 %2059
    %v2061 = vsel %vm397, %v2057, 0.0
    %2062 = vadd.xlane.f32.xlu0 %v2061
    %v2063 = vpop.xlane.xlu0 %2062
    %v2064 = vmul.f32 %v2060, %v416
    %v2065 = vmul.f32 %v2063, %v416
    %v2066 = vadd.f32 %v2064, 1e-06
    %v2067 = vadd.f32 %v2065, 1e-06
    %v2068 = vrsqrt.pop %v2066
    %v2069 = vmul.f32 %v2068, %v2066
    %v2070 = vmul.f32 %v2069, %v2068
    %v2071 = vmul.f32 0.5, %v2070
    %v2072 = vsub.f32 1.5, %v2071
    %v2073 = vmul.f32 %v2068, %v2072
    %vm2074 = vweird.f32 %v2066
    %vm2075 = vweird.f32 %v2068
    %vm2076 = vmor %vm2074, %vm2075
    %v2077 = vsel %vm2076, %v2068, %v2073
    %v2078 = vrsqrt.pop %v2067
    %v2079 = vmul.f32 %v2078, %v2067
    %v2080 = vmul.f32 %v2079, %v2078
    %v2081 = vmul.f32 0.5, %v2080
    %v2082 = vsub.f32 1.5, %v2081
    %v2083 = vmul.f32 %v2078, %v2082
    %vm2084 = vweird.f32 %v2067
    %vm2085 = vweird.f32 %v2078
    %vm2086 = vmor %vm2084, %vm2085
    %v2087 = vsel %vm2086, %v2078, %v2083
    %v2088 = vmul.f32 %v2054, %v2077
    %v2089 = vmul.f32 %v2055, %v2087
    %v2091 = vperm.slane %v2043, 0
    %v2093 = vmul.f32 %v2088, %v2091
    %v2094 = vmul.f32 %v2089, %v2091
    %v2096 = vperm.slane %v2045, 0
    %v2098 = vadd.f32 %v2093, %v2096
    %v2099 = vadd.f32 %v2094, %v2096
    %v2100 = vadd.f32 %v2098, %v1255
    %v2101 = vadd.f32 %v2099, %v1256
    %s2102 = scalar_lea.vmem %s45, 256
    %v2103 = vld [vmem:[%s2102] sm:$0xff]
    %v2104 = vld [vmem:[%s2102 + $0x8] sm:$0xff]
    %v2105 = vld [vmem:[%s2102 + $0x10] sm:$0xff]
    %v2106 = vld [vmem:[%s2102 + $0x18] sm:$0xff]
    %s2107 = scalar_lea.vmem %s47, 8
    %v2108 = vld [vmem:[%s2107] sm:$0x1]
    %v2110 = vperm.slane %v2108, 0
    %2112 = vmatpush.msra.mxu0 0.0
    %2113 = vmatpush.msra.mxu0 0.0
    %2114 = vmatpush.msra.mxu0 0.0
    %2115 = vmatpush.msra.mxu0 0.0
    %2116 = vmatpush.msra.mxu0 0.0
    %2117 = vmatpush.msra.mxu0 0.0
    %2118 = vmatpush.msra.mxu0 0.0
    %2119 = vmatpush.msra.mxu0 0.0
    %2120 = vmatpush.msra.mxu0 0.0
    %2121 = vmatpush.msra.mxu0 0.0
    %2122 = vmatpush.msra.mxu0 0.0
    %2123 = vmatpush.msra.mxu0 0.0
    %2124 = vmatpush.msra.mxu0 %v2106
    %2125 = vmatpush.msra.mxu0 %v2105
    %2126 = vmatpush.msra.mxu0 %v2104
    %2127 = vmatpush.msra.mxu0 %v2103
    %2128 = vmatmul.f32.gmra.mxu0 %v1644
    %v2129 = vpop.f32.mrf.mxu0
    %v2130 = vadd.f32 %v2110, %v2129
    %2131 = vmatmul.f32.gmra.mxu0 %v1647
    %v2132 = vpop.f32.mrf.mxu0
    %v2133 = vadd.f32 %v2110, %v2132
    %2134 = vmatmul.f32.gmra.mxu0 %v1650
    %v2135 = vpop.f32.mrf.mxu0
    %v2136 = vadd.f32 %v2110, %v2135
    %2137 = vmatmul.f32.gmra.mxu0 %v1653
    %v2138 = vpop.f32.mrf.mxu0
    %v2139 = vadd.f32 %v2110, %v2138
    %2140 = vdwg.mxu0
    %s2141 = scalar_lea.vmem %s45, 288
    %v2142 = vld [vmem:[%s2141] sm:$0xff]
    %v2143 = vld [vmem:[%s2141 + $0x8] sm:$0xff]
    %v2144 = vld [vmem:[%s2141 + $0x10] sm:$0xff]
    %v2145 = vld [vmem:[%s2141 + $0x18] sm:$0xff]
    %s2146 = scalar_lea.vmem %s47, 9
    %v2147 = vld [vmem:[%s2146] sm:$0x1]
    %v2149 = vperm.slane %v2147, 0
    %v2152 = vsel %vm397, %v2100, 0
    %v2155 = vsel %vm397, %v2101, 0
    %2157 = vmatpush.msra.mxu0 0.0
    %2158 = vmatpush.msra.mxu0 0.0
    %2159 = vmatpush.msra.mxu0 0.0
    %2160 = vmatpush.msra.mxu0 0.0
    %2161 = vmatpush.msra.mxu0 0.0
    %2162 = vmatpush.msra.mxu0 0.0
    %2163 = vmatpush.msra.mxu0 0.0
    %2164 = vmatpush.msra.mxu0 0.0
    %2165 = vmatpush.msra.mxu0 0.0
    %2166 = vmatpush.msra.mxu0 0.0
    %2167 = vmatpush.msra.mxu0 0.0
    %2168 = vmatpush.msra.mxu0 0.0
    %2169 = vmatpush.msra.mxu0 %v2145
    %2170 = vmatpush.msra.mxu0 %v2144
    %2171 = vmatpush.msra.mxu0 %v2143
    %2172 = vmatpush.msra.mxu0 %v2142
    %2173 = vmatmul.f32.gmra.mxu0 %v2152
    %v2174 = vpop.f32.mrf.mxu0
    %v2175 = vadd.f32 %v2149, %v2174
    %2176 = vmatmul.f32.gmra.mxu0 %v2155
    %v2177 = vpop.f32.mrf.mxu0
    %v2178 = vadd.f32 %v2149, %v2177
    %2179 = vdwg.mxu0
    %s2180 = scalar_lea.vmem %s45, 320
    %v2181 = vld [vmem:[%s2180] sm:$0xff]
    %v2182 = vld [vmem:[%s2180 + $0x8] sm:$0xff]
    %v2183 = vld [vmem:[%s2180 + $0x10] sm:$0xff]
    %v2184 = vld [vmem:[%s2180 + $0x18] sm:$0xff]
    %s2185 = scalar_lea.vmem %s47, 10
    %v2186 = vld [vmem:[%s2185] sm:$0x1]
    %v2188 = vperm.slane %v2186, 0
    %v2191 = vsel %vm397, %v2098, 0
    %v2194 = vsel %vm397, %v2099, 0
    %2196 = vmatpush.msra.mxu0 0.0
    %2197 = vmatpush.msra.mxu0 0.0
    %2198 = vmatpush.msra.mxu0 0.0
    %2199 = vmatpush.msra.mxu0 0.0
    %2200 = vmatpush.msra.mxu0 0.0
    %2201 = vmatpush.msra.mxu0 0.0
    %2202 = vmatpush.msra.mxu0 0.0
    %2203 = vmatpush.msra.mxu0 0.0
    %2204 = vmatpush.msra.mxu0 0.0
    %2205 = vmatpush.msra.mxu0 0.0
    %2206 = vmatpush.msra.mxu0 0.0
    %2207 = vmatpush.msra.mxu0 0.0
    %2208 = vmatpush.msra.mxu0 %v2184
    %2209 = vmatpush.msra.mxu0 %v2183
    %2210 = vmatpush.msra.mxu0 %v2182
    %2211 = vmatpush.msra.mxu0 %v2181
    %2212 = vmatmul.f32.gmra.mxu0 %v2191
    %v2213 = vpop.f32.mrf.mxu0
    %v2214 = vadd.f32 %v2188, %v2213
    %2215 = vmatmul.f32.gmra.mxu0 %v2194
    %v2216 = vpop.f32.mrf.mxu0
    %v2217 = vadd.f32 %v2188, %v2216
    %2218 = vdwg.mxu0
    %v2220 = vsel %vm397, %v2130, 0
    %v2223 = vsel %vm397, %v2133, 0
    %v2226 = vsel %vm397, %v2175, 0
    %2228 = vmatpush.xpose.msra.mxu0 0.0
    %2229 = vmatpush.xpose.msra.mxu0 0.0
    %2230 = vmatpush.xpose.msra.mxu0 0.0
    %2231 = vmatpush.xpose.msra.mxu0 0.0
    %2232 = vmatpush.xpose.msra.mxu0 0.0
    %2233 = vmatpush.xpose.msra.mxu0 0.0
    %2234 = vmatpush.xpose.msra.mxu0 0.0
    %2235 = vmatpush.xpose.msra.mxu0 0.0
    %2236 = vmatpush.xpose.msra.mxu0 0.0
    %2237 = vmatpush.xpose.msra.mxu0 0.0
    %2238 = vmatpush.xpose.msra.mxu0 0.0
    %2239 = vmatpush.xpose.msra.mxu0 0.0
    %2240 = vmatpush.xpose.msra.mxu0 0.0
    %2241 = vmatpush.xpose.msra.mxu0 0.0
    %2242 = vmatpush.xpose.msra.mxu0 0.0
    %2243 = vmatpush.xpose.msra.mxu0 %v2226
    %2244 = vmatmul.f32.gmra.mxu0 %v2220
    %v2245 = vpop.f32.mrf.mxu0
    %v2246 = vadd.f32 0.0, %v2245
    %2247 = vmatmul.f32.gmra.mxu0 %v2223
    %v2248 = vpop.f32.mrf.mxu0
    %v2249 = vadd.f32 0.0, %v2248
    %2250 = vdwg.mxu0
    %v2252 = vsel %vm397, %v2136, 0
    %v2255 = vsel %vm397, %v2139, 0
    %v2258 = vsel %vm397, %v2178, 0
    %2260 = vmatpush.xpose.msra.mxu0 0.0
    %2261 = vmatpush.xpose.msra.mxu0 0.0
    %2262 = vmatpush.xpose.msra.mxu0 0.0
    %2263 = vmatpush.xpose.msra.mxu0 0.0
    %2264 = vmatpush.xpose.msra.mxu0 0.0
    %2265 = vmatpush.xpose.msra.mxu0 0.0
    %2266 = vmatpush.xpose.msra.mxu0 0.0
    %2267 = vmatpush.xpose.msra.mxu0 0.0
    %2268 = vmatpush.xpose.msra.mxu0 0.0
    %2269 = vmatpush.xpose.msra.mxu0 0.0
    %2270 = vmatpush.xpose.msra.mxu0 0.0
    %2271 = vmatpush.xpose.msra.mxu0 0.0
    %2272 = vmatpush.xpose.msra.mxu0 0.0
    %2273 = vmatpush.xpose.msra.mxu0 0.0
    %2274 = vmatpush.xpose.msra.mxu0 0.0
    %2275 = vmatpush.xpose.msra.mxu0 %v2258
    %2276 = vmatmul.f32.gmra.mxu0 %v2252
    %v2277 = vpop.f32.mrf.mxu0
    %v2278 = vadd.f32 0.0, %v2277
    %2279 = vmatmul.f32.gmra.mxu0 %v2255
    %v2280 = vpop.f32.mrf.mxu0
    %v2281 = vadd.f32 0.0, %v2280
    %2282 = vdwg.mxu0
    %v2283 = vsel %vm1424, %v2246, -inf
    %2284 = vmax.xlane.f32.xlu0 %v2283
    %v2285 = vpop.xlane.xlu0 %2284
    %v2286 = vsel %vm1424, %v2249, -inf
    %2287 = vmax.xlane.f32.xlu0 %v2286
    %v2288 = vpop.xlane.xlu0 %2287
    %v2289 = vsel %vm1424, %v2278, -inf
    %2290 = vmax.xlane.f32.xlu0 %v2289
    %v2291 = vpop.xlane.xlu0 %2290
    %v2292 = vsel %vm1424, %v2281, -inf
    %2293 = vmax.xlane.f32.xlu0 %v2292
    %v2294 = vpop.xlane.xlu0 %2293
    %v2295 = vsub.f32 %v2246, %v2285
    %v2296 = vsub.f32 %v2249, %v2288
    %v2297 = vsub.f32 %v2278, %v2291
    %v2298 = vsub.f32 %v2281, %v2294
    %v2299 = vmul.f32 %v2295, 1.442695
    %v2300 = vpow.pop %v2299
    %v2301 = vmul.f32 %v2296, 1.442695
    %v2302 = vpow.pop %v2301
    %v2303 = vmul.f32 %v2297, 1.442695
    %v2304 = vpow.pop %v2303
    %v2305 = vmul.f32 %v2298, 1.442695
    %v2306 = vpow.pop %v2305
    %v2307 = vsel %vm1424, %v2300, 0.0
    %2308 = vadd.xlane.f32.xlu0 %v2307
    %v2309 = vpop.xlane.xlu0 %2308
    %v2310 = vsel %vm1424, %v2302, 0.0
    %2311 = vadd.xlane.f32.xlu0 %v2310
    %v2312 = vpop.xlane.xlu0 %2311
    %v2313 = vsel %vm1424, %v2304, 0.0
    %2314 = vadd.xlane.f32.xlu0 %v2313
    %v2315 = vpop.xlane.xlu0 %2314
    %v2316 = vsel %vm1424, %v2306, 0.0
    %2317 = vadd.xlane.f32.xlu0 %v2316
    %v2318 = vpop.xlane.xlu0 %2317
    %v2319 = vrcp.pop %v2309
    %v2320 = vrcp.pop %v2312
    %v2321 = vrcp.pop %v2315
    %v2322 = vrcp.pop %v2318
    %v2323 = vmul.f32 %v2300, %v2319
    %v2324 = vmul.f32 %v2302, %v2320
    %v2325 = vmul.f32 %v2304, %v2321
    %v2326 = vmul.f32 %v2306, %v2322
    %v2328 = vsel %vm1424, %v2323, 0
    %v2331 = vsel %vm1424, %v2324, 0
    %2333 = vmatpush.msra.mxu0 0.0
    %2334 = vmatpush.msra.mxu0 0.0
    %2335 = vmatpush.msra.mxu0 0.0
    %2336 = vmatpush.msra.mxu0 0.0
    %2337 = vmatpush.msra.mxu0 0.0
    %2338 = vmatpush.msra.mxu0 0.0
    %2339 = vmatpush.msra.mxu0 0.0
    %2340 = vmatpush.msra.mxu0 0.0
    %2341 = vmatpush.msra.mxu0 0.0
    %2342 = vmatpush.msra.mxu0 0.0
    %2343 = vmatpush.msra.mxu0 0.0
    %2344 = vmatpush.msra.mxu0 0.0
    %2345 = vmatpush.msra.mxu0 0.0
    %2346 = vmatpush.msra.mxu0 0.0
    %2347 = vmatpush.msra.mxu0 0.0
    %2348 = vmatpush.msra.mxu0 %v2214
    %2349 = vmatmul.f32.gmra.mxu0 %v2328
    %v2350 = vpop.f32.mrf.mxu0
    %v2351 = vadd.f32 0.0, %v2350
    %2352 = vmatmul.f32.gmra.mxu0 %v2331
    %v2353 = vpop.f32.mrf.mxu0
    %v2354 = vadd.f32 0.0, %v2353
    %2355 = vdwg.mxu0
    %v2357 = vsel %vm1424, %v2325, 0
    %v2360 = vsel %vm1424, %v2326, 0
    %2362 = vmatpush.msra.mxu0 0.0
    %2363 = vmatpush.msra.mxu0 0.0
    %2364 = vmatpush.msra.mxu0 0.0
    %2365 = vmatpush.msra.mxu0 0.0
    %2366 = vmatpush.msra.mxu0 0.0
    %2367 = vmatpush.msra.mxu0 0.0
    %2368 = vmatpush.msra.mxu0 0.0
    %2369 = vmatpush.msra.mxu0 0.0
    %2370 = vmatpush.msra.mxu0 0.0
    %2371 = vmatpush.msra.mxu0 0.0
    %2372 = vmatpush.msra.mxu0 0.0
    %2373 = vmatpush.msra.mxu0 0.0
    %2374 = vmatpush.msra.mxu0 0.0
    %2375 = vmatpush.msra.mxu0 0.0
    %2376 = vmatpush.msra.mxu0 0.0
    %2377 = vmatpush.msra.mxu0 %v2217
    %2378 = vmatmul.f32.gmra.mxu0 %v2357
    %v2379 = vpop.f32.mrf.mxu0
    %v2380 = vadd.f32 0.0, %v2379
    %2381 = vmatmul.f32.gmra.mxu0 %v2360
    %v2382 = vpop.f32.mrf.mxu0
    %v2383 = vadd.f32 0.0, %v2382
    %2384 = vdwg.mxu0
    %s2385 = scalar_lea.vmem %s45, 352
    %v2386 = vld [vmem:[%s2385] sm:$0xff]
    %v2387 = vld [vmem:[%s2385 + $0x8] sm:$0xff]
    %v2388 = vld [vmem:[%s2385 + $0x10] sm:$0xff]
    %v2389 = vld [vmem:[%s2385 + $0x18] sm:$0xff]
    %s2390 = scalar_lea.vmem %s47, 11
    %v2391 = vld [vmem:[%s2390] sm:$0x1]
    %v2393 = vperm.slane %v2391, 0
    %v2396 = vsel %vm397, %v2351, 0
    %v2399 = vsel %vm397, %v2354, 0
    %v2402 = vsel %vm397, %v2380, 0
    %v2405 = vsel %vm397, %v2383, 0
    %2407 = vmatpush.msra.mxu0 0.0
    %2408 = vmatpush.msra.mxu0 0.0
    %2409 = vmatpush.msra.mxu0 0.0
    %2410 = vmatpush.msra.mxu0 0.0
    %2411 = vmatpush.msra.mxu0 0.0
    %2412 = vmatpush.msra.mxu0 0.0
    %2413 = vmatpush.msra.mxu0 0.0
    %2414 = vmatpush.msra.mxu0 0.0
    %2415 = vmatpush.msra.mxu0 0.0
    %2416 = vmatpush.msra.mxu0 0.0
    %2417 = vmatpush.msra.mxu0 0.0
    %2418 = vmatpush.msra.mxu0 0.0
    %2419 = vmatpush.msra.mxu0 %v2389
    %2420 = vmatpush.msra.mxu0 %v2388
    %2421 = vmatpush.msra.mxu0 %v2387
    %2422 = vmatpush.msra.mxu0 %v2386
    %2423 = vmatmul.f32.gmra.mxu0 %v2396
    %v2424 = vpop.f32.mrf.mxu0
    %v2425 = vadd.f32 %v2393, %v2424
    %2426 = vmatmul.f32.gmra.mxu0 %v2399
    %v2427 = vpop.f32.mrf.mxu0
    %v2428 = vadd.f32 %v2393, %v2427
    %2429 = vmatmul.f32.gmra.mxu0 %v2402
    %v2430 = vpop.f32.mrf.mxu0
    %v2431 = vadd.f32 %v2393, %v2430
    %2432 = vmatmul.f32.gmra.mxu0 %v2405
    %v2433 = vpop.f32.mrf.mxu0
    %v2434 = vadd.f32 %v2393, %v2433
    %2435 = vdwg.mxu0
    %v2436 = vadd.f32 %v1261, %v2425
    %v2437 = vadd.f32 %v1262, %v2428
    %v2438 = vadd.f32 %v1263, %v2431
    %v2439 = vadd.f32 %v1264, %v2434
    %s2440 = scalar_lea.vmem %s49, 3
    %v2441 = vld [vmem:[%s2440] sm:$0x1]
    %s2442 = scalar_lea.vmem %s51, 3
    %v2443 = vld [vmem:[%s2442] sm:$0x1]
    %v2444 = vsel %vm397, %v2436, 0.0
    %2445 = vadd.xlane.f32.xlu0 %v2444
    %v2446 = vpop.xlane.xlu0 %2445
    %v2447 = vsel %vm397, %v2437, 0.0
    %2448 = vadd.xlane.f32.xlu0 %v2447
    %v2449 = vpop.xlane.xlu0 %2448
    %v2450 = vsel %vm397, %v2438, 0.0
    %2451 = vadd.xlane.f32.xlu0 %v2450
    %v2452 = vpop.xlane.xlu0 %2451
    %v2453 = vsel %vm397, %v2439, 0.0
    %2454 = vadd.xlane.f32.xlu0 %v2453
    %v2455 = vpop.xlane.xlu0 %2454
    %v2456 = vmul.f32 %v2446, %v416
    %v2457 = vmul.f32 %v2449, %v416
    %v2458 = vmul.f32 %v2452, %v416
    %v2459 = vmul.f32 %v2455, %v416
    %v2460 = vsub.f32 %v2436, %v2456
    %v2461 = vsub.f32 %v2437, %v2457
    %v2462 = vsub.f32 %v2438, %v2458
    %v2463 = vsub.f32 %v2439, %v2459
    %v2464 = vmul.f32 %v2460, %v2460
    %v2465 = vmul.f32 %v2461, %v2461
    %v2466 = vmul.f32 %v2462, %v2462
    %v2467 = vmul.f32 %v2463, %v2463
    %v2468 = vsel %vm397, %v2464, 0.0
    %2469 = vadd.xlane.f32.xlu0 %v2468
    %v2470 = vpop.xlane.xlu0 %2469
    %v2471 = vsel %vm397, %v2465, 0.0
    %2472 = vadd.xlane.f32.xlu0 %v2471
    %v2473 = vpop.xlane.xlu0 %2472
    %v2474 = vsel %vm397, %v2466, 0.0
    %2475 = vadd.xlane.f32.xlu0 %v2474
    %v2476 = vpop.xlane.xlu0 %2475
    %v2477 = vsel %vm397, %v2467, 0.0
    %2478 = vadd.xlane.f32.xlu0 %v2477
    %v2479 = vpop.xlane.xlu0 %2478
    %v2480 = vmul.f32 %v2470, %v416
    %v2481 = vmul.f32 %v2473, %v416
    %v2482 = vmul.f32 %v2476, %v416
    %v2483 = vmul.f32 %v2479, %v416
    %v2484 = vadd.f32 %v2480, 1e-06
    %v2485 = vadd.f32 %v2481, 1e-06
    %v2486 = vadd.f32 %v2482, 1e-06
    %v2487 = vadd.f32 %v2483, 1e-06
    %v2488 = vrsqrt.pop %v2484
    %v2489 = vmul.f32 %v2488, %v2484
    %v2490 = vmul.f32 %v2489, %v2488
    %v2491 = vmul.f32 0.5, %v2490
    %v2492 = vsub.f32 1.5, %v2491
    %v2493 = vmul.f32 %v2488, %v2492
    %vm2494 = vweird.f32 %v2484
    %vm2495 = vweird.f32 %v2488
    %vm2496 = vmor %vm2494, %vm2495
    %v2497 = vsel %vm2496, %v2488, %v2493
    %v2498 = vrsqrt.pop %v2485
    %v2499 = vmul.f32 %v2498, %v2485
    %v2500 = vmul.f32 %v2499, %v2498
    %v2501 = vmul.f32 0.5, %v2500
    %v2502 = vsub.f32 1.5, %v2501
    %v2503 = vmul.f32 %v2498, %v2502
    %vm2504 = vweird.f32 %v2485
    %vm2505 = vweird.f32 %v2498
    %vm2506 = vmor %vm2504, %vm2505
    %v2507 = vsel %vm2506, %v2498, %v2503
    %v2508 = vrsqrt.pop %v2486
    %v2509 = vmul.f32 %v2508, %v2486
    %v2510 = vmul.f32 %v2509, %v2508
    %v2511 = vmul.f32 0.5, %v2510
    %v2512 = vsub.f32 1.5, %v2511
    %v2513 = vmul.f32 %v2508, %v2512
    %vm2514 = vweird.f32 %v2486
    %vm2515 = vweird.f32 %v2508
    %vm2516 = vmor %vm2514, %vm2515
    %v2517 = vsel %vm2516, %v2508, %v2513
    %v2518 = vrsqrt.pop %v2487
    %v2519 = vmul.f32 %v2518, %v2487
    %v2520 = vmul.f32 %v2519, %v2518
    %v2521 = vmul.f32 0.5, %v2520
    %v2522 = vsub.f32 1.5, %v2521
    %v2523 = vmul.f32 %v2518, %v2522
    %vm2524 = vweird.f32 %v2487
    %vm2525 = vweird.f32 %v2518
    %vm2526 = vmor %vm2524, %vm2525
    %v2527 = vsel %vm2526, %v2518, %v2523
    %v2528 = vmul.f32 %v2460, %v2497
    %v2529 = vmul.f32 %v2461, %v2507
    %v2530 = vmul.f32 %v2462, %v2517
    %v2531 = vmul.f32 %v2463, %v2527
    %v2533 = vperm.slane %v2441, 0
    %v2535 = vmul.f32 %v2528, %v2533
    %v2536 = vmul.f32 %v2529, %v2533
    %v2537 = vmul.f32 %v2530, %v2533
    %v2538 = vmul.f32 %v2531, %v2533
    %v2540 = vperm.slane %v2443, 0
    %v2542 = vadd.f32 %v2535, %v2540
    %v2543 = vadd.f32 %v2536, %v2540
    %v2544 = vadd.f32 %v2537, %v2540
    %v2545 = vadd.f32 %v2538, %v2540
    %v2546 = vadd.f32 %v2542, %v1265
    %v2547 = vadd.f32 %v2543, %v1266
    %v2548 = vadd.f32 %v2544, %v1267
    %v2549 = vadd.f32 %v2545, %v1268
    %s2550 = scalar_lea.vmem %s45, 384
    %v2551 = vld [vmem:[%s2550] sm:$0xff]
    %v2552 = vld [vmem:[%s2550 + $0x8] sm:$0xff]
    %v2553 = vld [vmem:[%s2550 + $0x10] sm:$0xff]
    %v2554 = vld [vmem:[%s2550 + $0x18] sm:$0xff]
    %s2555 = scalar_lea.vmem %s47, 12
    %v2556 = vld [vmem:[%s2555] sm:$0x1]
    %v2558 = vperm.slane %v2556, 0
    %2560 = vmatpush.msra.mxu0 0.0
    %2561 = vmatpush.msra.mxu0 0.0
    %2562 = vmatpush.msra.mxu0 0.0
    %2563 = vmatpush.msra.mxu0 0.0
    %2564 = vmatpush.msra.mxu0 0.0
    %2565 = vmatpush.msra.mxu0 0.0
    %2566 = vmatpush.msra.mxu0 0.0
    %2567 = vmatpush.msra.mxu0 0.0
    %2568 = vmatpush.msra.mxu0 0.0
    %2569 = vmatpush.msra.mxu0 0.0
    %2570 = vmatpush.msra.mxu0 0.0
    %2571 = vmatpush.msra.mxu0 0.0
    %2572 = vmatpush.msra.mxu0 %v2554
    %2573 = vmatpush.msra.mxu0 %v2553
    %2574 = vmatpush.msra.mxu0 %v2552
    %2575 = vmatpush.msra.mxu0 %v2551
    %2576 = vmatmul.f32.gmra.mxu0 %v2152
    %v2577 = vpop.f32.mrf.mxu0
    %v2578 = vadd.f32 %v2558, %v2577
    %2579 = vmatmul.f32.gmra.mxu0 %v2155
    %v2580 = vpop.f32.mrf.mxu0
    %v2581 = vadd.f32 %v2558, %v2580
    %2582 = vdwg.mxu0
    %s2583 = scalar_lea.vmem %s45, 416
    %v2584 = vld [vmem:[%s2583] sm:$0xff]
    %v2585 = vld [vmem:[%s2583 + $0x8] sm:$0xff]
    %v2586 = vld [vmem:[%s2583 + $0x10] sm:$0xff]
    %v2587 = vld [vmem:[%s2583 + $0x18] sm:$0xff]
    %s2588 = scalar_lea.vmem %s47, 13
    %v2589 = vld [vmem:[%s2588] sm:$0x1]
    %v2591 = vperm.slane %v2589, 0
    %v2594 = vsel %vm397, %v2546, 0
    %v2597 = vsel %vm397, %v2547, 0
    %v2600 = vsel %vm397, %v2548, 0
    %v2603 = vsel %vm397, %v2549, 0
    %2605 = vmatpush.msra.mxu0 0.0
    %2606 = vmatpush.msra.mxu0 0.0
    %2607 = vmatpush.msra.mxu0 0.0
    %2608 = vmatpush.msra.mxu0 0.0
    %2609 = vmatpush.msra.mxu0 0.0
    %2610 = vmatpush.msra.mxu0 0.0
    %2611 = vmatpush.msra.mxu0 0.0
    %2612 = vmatpush.msra.mxu0 0.0
    %2613 = vmatpush.msra.mxu0 0.0
    %2614 = vmatpush.msra.mxu0 0.0
    %2615 = vmatpush.msra.mxu0 0.0
    %2616 = vmatpush.msra.mxu0 0.0
    %2617 = vmatpush.msra.mxu0 %v2587
    %2618 = vmatpush.msra.mxu0 %v2586
    %2619 = vmatpush.msra.mxu0 %v2585
    %2620 = vmatpush.msra.mxu0 %v2584
    %2621 = vmatmul.f32.gmra.mxu0 %v2594
    %v2622 = vpop.f32.mrf.mxu0
    %v2623 = vadd.f32 %v2591, %v2622
    %2624 = vmatmul.f32.gmra.mxu0 %v2597
    %v2625 = vpop.f32.mrf.mxu0
    %v2626 = vadd.f32 %v2591, %v2625
    %2627 = vmatmul.f32.gmra.mxu0 %v2600
    %v2628 = vpop.f32.mrf.mxu0
    %v2629 = vadd.f32 %v2591, %v2628
    %2630 = vmatmul.f32.gmra.mxu0 %v2603
    %v2631 = vpop.f32.mrf.mxu0
    %v2632 = vadd.f32 %v2591, %v2631
    %2633 = vdwg.mxu0
    %s2634 = scalar_lea.vmem %s45, 448
    %v2635 = vld [vmem:[%s2634] sm:$0xff]
    %v2636 = vld [vmem:[%s2634 + $0x8] sm:$0xff]
    %v2637 = vld [vmem:[%s2634 + $0x10] sm:$0xff]
    %v2638 = vld [vmem:[%s2634 + $0x18] sm:$0xff]
    %s2639 = scalar_lea.vmem %s47, 14
    %v2640 = vld [vmem:[%s2639] sm:$0x1]
    %v2642 = vperm.slane %v2640, 0
    %v2645 = vsel %vm397, %v2542, 0
    %v2648 = vsel %vm397, %v2543, 0
    %v2651 = vsel %vm397, %v2544, 0
    %v2654 = vsel %vm397, %v2545, 0
    %2656 = vmatpush.msra.mxu0 0.0
    %2657 = vmatpush.msra.mxu0 0.0
    %2658 = vmatpush.msra.mxu0 0.0
    %2659 = vmatpush.msra.mxu0 0.0
    %2660 = vmatpush.msra.mxu0 0.0
    %2661 = vmatpush.msra.mxu0 0.0
    %2662 = vmatpush.msra.mxu0 0.0
    %2663 = vmatpush.msra.mxu0 0.0
    %2664 = vmatpush.msra.mxu0 0.0
    %2665 = vmatpush.msra.mxu0 0.0
    %2666 = vmatpush.msra.mxu0 0.0
    %2667 = vmatpush.msra.mxu0 0.0
    %2668 = vmatpush.msra.mxu0 %v2638
    %2669 = vmatpush.msra.mxu0 %v2637
    %2670 = vmatpush.msra.mxu0 %v2636
    %2671 = vmatpush.msra.mxu0 %v2635
    %2672 = vmatmul.f32.gmra.mxu0 %v2645
    %v2673 = vpop.f32.mrf.mxu0
    %v2674 = vadd.f32 %v2642, %v2673
    %2675 = vmatmul.f32.gmra.mxu0 %v2648
    %v2676 = vpop.f32.mrf.mxu0
    %v2677 = vadd.f32 %v2642, %v2676
    %2678 = vmatmul.f32.gmra.mxu0 %v2651
    %v2679 = vpop.f32.mrf.mxu0
    %v2680 = vadd.f32 %v2642, %v2679
    %2681 = vmatmul.f32.gmra.mxu0 %v2654
    %v2682 = vpop.f32.mrf.mxu0
    %v2683 = vadd.f32 %v2642, %v2682
    %2684 = vdwg.mxu0
    %v2686 = vsel %vm397, %v2578, 0
    %v2689 = vsel %vm397, %v2623, 0
    %v2692 = vsel %vm397, %v2626, 0
    %2694 = vmatpush.xpose.msra.mxu0 0.0
    %2695 = vmatpush.xpose.msra.mxu0 0.0
    %2696 = vmatpush.xpose.msra.mxu0 0.0
    %2697 = vmatpush.xpose.msra.mxu0 0.0
    %2698 = vmatpush.xpose.msra.mxu0 0.0
    %2699 = vmatpush.xpose.msra.mxu0 0.0
    %2700 = vmatpush.xpose.msra.mxu0 0.0
    %2701 = vmatpush.xpose.msra.mxu0 0.0
    %2702 = vmatpush.xpose.msra.mxu0 0.0
    %2703 = vmatpush.xpose.msra.mxu0 0.0
    %2704 = vmatpush.xpose.msra.mxu0 0.0
    %2705 = vmatpush.xpose.msra.mxu0 0.0
    %2706 = vmatpush.xpose.msra.mxu0 0.0
    %2707 = vmatpush.xpose.msra.mxu0 0.0
    %2708 = vmatpush.xpose.msra.mxu0 %v2692
    %2709 = vmatpush.xpose.msra.mxu0 %v2689
    %2710 = vmatmul.f32.gmra.mxu0 %v2686
    %v2711 = vpop.f32.mrf.mxu0
    %v2712 = vadd.f32 0.0, %v2711
    %2713 = vdwg.mxu0
    %v2715 = vsel %vm397, %v2581, 0
    %v2718 = vsel %vm397, %v2629, 0
    %v2721 = vsel %vm397, %v2632, 0
    %2723 = vmatpush.xpose.msra.mxu0 0.0
    %2724 = vmatpush.xpose.msra.mxu0 0.0
    %2725 = vmatpush.xpose.msra.mxu0 0.0
    %2726 = vmatpush.xpose.msra.mxu0 0.0
    %2727 = vmatpush.xpose.msra.mxu0 0.0
    %2728 = vmatpush.xpose.msra.mxu0 0.0
    %2729 = vmatpush.xpose.msra.mxu0 0.0
    %2730 = vmatpush.xpose.msra.mxu0 0.0
    %2731 = vmatpush.xpose.msra.mxu0 0.0
    %2732 = vmatpush.xpose.msra.mxu0 0.0
    %2733 = vmatpush.xpose.msra.mxu0 0.0
    %2734 = vmatpush.xpose.msra.mxu0 0.0
    %2735 = vmatpush.xpose.msra.mxu0 0.0
    %2736 = vmatpush.xpose.msra.mxu0 0.0
    %2737 = vmatpush.xpose.msra.mxu0 %v2721
    %2738 = vmatpush.xpose.msra.mxu0 %v2718
    %2739 = vmatmul.f32.gmra.mxu0 %v2715
    %v2740 = vpop.f32.mrf.mxu0
    %v2741 = vadd.f32 0.0, %v2740
    %2742 = vdwg.mxu0
    %v2743 = vsel %vm704, %v2712, -inf
    %2744 = vmax.xlane.f32.xlu0 %v2743
    %v2745 = vpop.xlane.xlu0 %2744
    %v2746 = vsel %vm704, %v2741, -inf
    %2747 = vmax.xlane.f32.xlu0 %v2746
    %v2748 = vpop.xlane.xlu0 %2747
    %v2749 = vsub.f32 %v2712, %v2745
    %v2750 = vsub.f32 %v2741, %v2748
    %v2751 = vmul.f32 %v2749, 1.442695
    %v2752 = vpow.pop %v2751
    %v2753 = vmul.f32 %v2750, 1.442695
    %v2754 = vpow.pop %v2753
    %v2755 = vsel %vm704, %v2752, 0.0
    %2756 = vadd.xlane.f32.xlu0 %v2755
    %v2757 = vpop.xlane.xlu0 %2756
    %v2758 = vsel %vm704, %v2754, 0.0
    %2759 = vadd.xlane.f32.xlu0 %v2758
    %v2760 = vpop.xlane.xlu0 %2759
    %v2761 = vrcp.pop %v2757
    %v2762 = vrcp.pop %v2760
    %v2763 = vmul.f32 %v2752, %v2761
    %v2764 = vmul.f32 %v2754, %v2762
    %v2766 = vsel %vm704, %v2763, 0
    %2768 = vmatpush.msra.mxu0 0.0
    %2769 = vmatpush.msra.mxu0 0.0
    %2770 = vmatpush.msra.mxu0 0.0
    %2771 = vmatpush.msra.mxu0 0.0
    %2772 = vmatpush.msra.mxu0 0.0
    %2773 = vmatpush.msra.mxu0 0.0
    %2774 = vmatpush.msra.mxu0 0.0
    %2775 = vmatpush.msra.mxu0 0.0
    %2776 = vmatpush.msra.mxu0 0.0
    %2777 = vmatpush.msra.mxu0 0.0
    %2778 = vmatpush.msra.mxu0 0.0
    %2779 = vmatpush.msra.mxu0 0.0
    %2780 = vmatpush.msra.mxu0 0.0
    %2781 = vmatpush.msra.mxu0 0.0
    %2782 = vmatpush.msra.mxu0 %v2677
    %2783 = vmatpush.msra.mxu0 %v2674
    %2784 = vmatmul.f32.gmra.mxu0 %v2766
    %v2785 = vpop.f32.mrf.mxu0
    %v2786 = vadd.f32 0.0, %v2785
    %2787 = vdwg.mxu0
    %v2789 = vsel %vm704, %v2764, 0
    %2791 = vmatpush.msra.mxu0 0.0
    %2792 = vmatpush.msra.mxu0 0.0
    %2793 = vmatpush.msra.mxu0 0.0
    %2794 = vmatpush.msra.mxu0 0.0
    %2795 = vmatpush.msra.mxu0 0.0
    %2796 = vmatpush.msra.mxu0 0.0
    %2797 = vmatpush.msra.mxu0 0.0
    %2798 = vmatpush.msra.mxu0 0.0
    %2799 = vmatpush.msra.mxu0 0.0
    %2800 = vmatpush.msra.mxu0 0.0
    %2801 = vmatpush.msra.mxu0 0.0
    %2802 = vmatpush.msra.mxu0 0.0
    %2803 = vmatpush.msra.mxu0 0.0
    %2804 = vmatpush.msra.mxu0 0.0
    %2805 = vmatpush.msra.mxu0 %v2683
    %2806 = vmatpush.msra.mxu0 %v2680
    %2807 = vmatmul.f32.gmra.mxu0 %v2789
    %v2808 = vpop.f32.mrf.mxu0
    %v2809 = vadd.f32 0.0, %v2808
    %2810 = vdwg.mxu0
    %s2811 = scalar_lea.vmem %s45, 480
    %v2812 = vld [vmem:[%s2811] sm:$0xff]
    %v2813 = vld [vmem:[%s2811 + $0x8] sm:$0xff]
    %v2814 = vld [vmem:[%s2811 + $0x10] sm:$0xff]
    %v2815 = vld [vmem:[%s2811 + $0x18] sm:$0xff]
    %s2816 = scalar_lea.vmem %s47, 15
    %v2817 = vld [vmem:[%s2816] sm:$0x1]
    %v2819 = vperm.slane %v2817, 0
    %v2822 = vsel %vm397, %v2786, 0
    %v2825 = vsel %vm397, %v2809, 0
    %2827 = vmatpush.msra.mxu0 0.0
    %2828 = vmatpush.msra.mxu0 0.0
    %2829 = vmatpush.msra.mxu0 0.0
    %2830 = vmatpush.msra.mxu0 0.0
    %2831 = vmatpush.msra.mxu0 0.0
    %2832 = vmatpush.msra.mxu0 0.0
    %2833 = vmatpush.msra.mxu0 0.0
    %2834 = vmatpush.msra.mxu0 0.0
    %2835 = vmatpush.msra.mxu0 0.0
    %2836 = vmatpush.msra.mxu0 0.0
    %2837 = vmatpush.msra.mxu0 0.0
    %2838 = vmatpush.msra.mxu0 0.0
    %2839 = vmatpush.msra.mxu0 %v2815
    %2840 = vmatpush.msra.mxu0 %v2814
    %2841 = vmatpush.msra.mxu0 %v2813
    %2842 = vmatpush.msra.mxu0 %v2812
    %2843 = vmatmul.f32.gmra.mxu0 %v2822
    %v2844 = vpop.f32.mrf.mxu0
    %v2845 = vadd.f32 %v2819, %v2844
    %2846 = vmatmul.f32.gmra.mxu0 %v2825
    %v2847 = vpop.f32.mrf.mxu0
    %v2848 = vadd.f32 %v2819, %v2847
    %2849 = vdwg.mxu0
    %v2850 = vadd.f32 %v2098, %v2845
    %v2851 = vadd.f32 %v2099, %v2848
    %s2852 = scalar_lea.vmem %s49, 4
    %v2853 = vld [vmem:[%s2852] sm:$0x1]
    %s2854 = scalar_lea.vmem %s51, 4
    %v2855 = vld [vmem:[%s2854] sm:$0x1]
    %v2856 = vsel %vm397, %v2850, 0.0
    %2857 = vadd.xlane.f32.xlu0 %v2856
    %v2858 = vpop.xlane.xlu0 %2857
    %v2859 = vsel %vm397, %v2851, 0.0
    %2860 = vadd.xlane.f32.xlu0 %v2859
    %v2861 = vpop.xlane.xlu0 %2860
    %v2862 = vmul.f32 %v2858, %v416
    %v2863 = vmul.f32 %v2861, %v416
    %v2864 = vsub.f32 %v2850, %v2862
    %v2865 = vsub.f32 %v2851, %v2863
    %v2866 = vmul.f32 %v2864, %v2864
    %v2867 = vmul.f32 %v2865, %v2865
    %v2868 = vsel %vm397, %v2866, 0.0
    %2869 = vadd.xlane.f32.xlu0 %v2868
    %v2870 = vpop.xlane.xlu0 %2869
    %v2871 = vsel %vm397, %v2867, 0.0
    %2872 = vadd.xlane.f32.xlu0 %v2871
    %v2873 = vpop.xlane.xlu0 %2872
    %v2874 = vmul.f32 %v2870, %v416
    %v2875 = vmul.f32 %v2873, %v416
    %v2876 = vadd.f32 %v2874, 1e-06
    %v2877 = vadd.f32 %v2875, 1e-06
    %v2878 = vrsqrt.pop %v2876
    %v2879 = vmul.f32 %v2878, %v2876
    %v2880 = vmul.f32 %v2879, %v2878
    %v2881 = vmul.f32 0.5, %v2880
    %v2882 = vsub.f32 1.5, %v2881
    %v2883 = vmul.f32 %v2878, %v2882
    %vm2884 = vweird.f32 %v2876
    %vm2885 = vweird.f32 %v2878
    %vm2886 = vmor %vm2884, %vm2885
    %v2887 = vsel %vm2886, %v2878, %v2883
    %v2888 = vrsqrt.pop %v2877
    %v2889 = vmul.f32 %v2888, %v2877
    %v2890 = vmul.f32 %v2889, %v2888
    %v2891 = vmul.f32 0.5, %v2890
    %v2892 = vsub.f32 1.5, %v2891
    %v2893 = vmul.f32 %v2888, %v2892
    %vm2894 = vweird.f32 %v2877
    %vm2895 = vweird.f32 %v2888
    %vm2896 = vmor %vm2894, %vm2895
    %v2897 = vsel %vm2896, %v2888, %v2893
    %v2898 = vmul.f32 %v2864, %v2887
    %v2899 = vmul.f32 %v2865, %v2897
    %v2901 = vperm.slane %v2853, 0
    %v2903 = vmul.f32 %v2898, %v2901
    %v2904 = vmul.f32 %v2899, %v2901
    %v2906 = vperm.slane %v2855, 0
    %v2908 = vadd.f32 %v2903, %v2906
    %v2909 = vadd.f32 %v2904, %v2906
    %v2910 = vld [vmem:[%s61] sm:$0xff]
    %v2911 = vld [vmem:[%s61 + $0x8] sm:$0xff]
    %v2912 = vld [vmem:[%s61 + $0x10] sm:$0xff]
    %v2913 = vld [vmem:[%s61 + $0x18] sm:$0xff]
    %v2914 = vld [vmem:[%s63] sm:$0x1]
    %v2916 = vperm.slane %v2914, 0
    %2918 = vmatpush.msra.mxu0 0.0
    %2919 = vmatpush.msra.mxu0 0.0
    %2920 = vmatpush.msra.mxu0 0.0
    %2921 = vmatpush.msra.mxu0 0.0
    %2922 = vmatpush.msra.mxu0 0.0
    %2923 = vmatpush.msra.mxu0 0.0
    %2924 = vmatpush.msra.mxu0 0.0
    %2925 = vmatpush.msra.mxu0 0.0
    %2926 = vmatpush.msra.mxu0 0.0
    %2927 = vmatpush.msra.mxu0 0.0
    %2928 = vmatpush.msra.mxu0 0.0
    %2929 = vmatpush.msra.mxu0 0.0
    %2930 = vmatpush.msra.mxu0 %v2913
    %2931 = vmatpush.msra.mxu0 %v2912
    %2932 = vmatpush.msra.mxu0 %v2911
    %2933 = vmatpush.msra.mxu0 %v2910
    %2934 = vmatmul.f32.gmra.mxu0 %v2645
    %v2935 = vpop.f32.mrf.mxu0
    %v2936 = vadd.f32 %v2916, %v2935
    %2937 = vmatmul.f32.gmra.mxu0 %v2648
    %v2938 = vpop.f32.mrf.mxu0
    %v2939 = vadd.f32 %v2916, %v2938
    %2940 = vmatmul.f32.gmra.mxu0 %v2651
    %v2941 = vpop.f32.mrf.mxu0
    %v2942 = vadd.f32 %v2916, %v2941
    %2943 = vmatmul.f32.gmra.mxu0 %v2654
    %v2944 = vpop.f32.mrf.mxu0
    %v2945 = vadd.f32 %v2916, %v2944
    %2946 = vdwg.mxu0
    %v2947 = vld [vmem:[#allocation2] sm:$0x1]
    %v2948 = vld [vmem:[#allocation4] sm:$0x1]
    %v2949 = vsel %vm1424, %v2936, 0.0
    %2950 = vadd.xlane.f32.xlu0 %v2949
    %v2951 = vpop.xlane.xlu0 %2950
    %v2952 = vsel %vm1424, %v2939, 0.0
    %2953 = vadd.xlane.f32.xlu0 %v2952
    %v2954 = vpop.xlane.xlu0 %2953
    %v2955 = vsel %vm1424, %v2942, 0.0
    %2956 = vadd.xlane.f32.xlu0 %v2955
    %v2957 = vpop.xlane.xlu0 %2956
    %v2958 = vsel %vm1424, %v2945, 0.0
    %2959 = vadd.xlane.f32.xlu0 %v2958
    %v2960 = vpop.xlane.xlu0 %2959
    %v2961 = vrcp.pop 8.0
    %v2962 = vmul.f32 8.0, %v2961
    %v2963 = vsub.f32 1.0, %v2962
    %v2964 = vmul.f32 %v2961, %v2963
    %v2965 = vadd.f32 %v2961, %v2964
    %vm2966 = vweird.f32 %v2961
    %v2967 = vsel %vm2966, %v2961, %v2965
    %v2968 = vmul.f32 %v2951, %v2967
    %v2969 = vmul.f32 %v2954, %v2967
    %v2970 = vmul.f32 %v2957, %v2967
    %v2971 = vmul.f32 %v2960, %v2967
    %v2972 = vsub.f32 %v2936, %v2968
    %v2973 = vsub.f32 %v2939, %v2969
    %v2974 = vsub.f32 %v2942, %v2970
    %v2975 = vsub.f32 %v2945, %v2971
    %v2976 = vmul.f32 %v2972, %v2972
    %v2977 = vmul.f32 %v2973, %v2973
    %v2978 = vmul.f32 %v2974, %v2974
    %v2979 = vmul.f32 %v2975, %v2975
    %v2980 = vsel %vm1424, %v2976, 0.0
    %2981 = vadd.xlane.f32.xlu0 %v2980
    %v2982 = vpop.xlane.xlu0 %2981
    %v2983 = vsel %vm1424, %v2977, 0.0
    %2984 = vadd.xlane.f32.xlu0 %v2983
    %v2985 = vpop.xlane.xlu0 %2984
    %v2986 = vsel %vm1424, %v2978, 0.0
    %2987 = vadd.xlane.f32.xlu0 %v2986
    %v2988 = vpop.xlane.xlu0 %2987
    %v2989 = vsel %vm1424, %v2979, 0.0
    %2990 = vadd.xlane.f32.xlu0 %v2989
    %v2991 = vpop.xlane.xlu0 %2990
    %v2992 = vmul.f32 %v2982, %v2967
    %v2993 = vmul.f32 %v2985, %v2967
    %v2994 = vmul.f32 %v2988, %v2967
    %v2995 = vmul.f32 %v2991, %v2967
    %v2996 = vadd.f32 %v2992, 1e-06
    %v2997 = vadd.f32 %v2993, 1e-06
    %v2998 = vadd.f32 %v2994, 1e-06
    %v2999 = vadd.f32 %v2995, 1e-06
    %v3000 = vrsqrt.pop %v2996
    %v3001 = vmul.f32 %v3000, %v2996
    %v3002 = vmul.f32 %v3001, %v3000
    %v3003 = vmul.f32 0.5, %v3002
    %v3004 = vsub.f32 1.5, %v3003
    %v3005 = vmul.f32 %v3000, %v3004
    %vm3006 = vweird.f32 %v2996
    %vm3007 = vweird.f32 %v3000
    %vm3008 = vmor %vm3006, %vm3007
    %v3009 = vsel %vm3008, %v3000, %v3005
    %v3010 = vrsqrt.pop %v2997
    %v3011 = vmul.f32 %v3010, %v2997
    %v3012 = vmul.f32 %v3011, %v3010
    %v3013 = vmul.f32 0.5, %v3012
    %v3014 = vsub.f32 1.5, %v3013
    %v3015 = vmul.f32 %v3010, %v3014
    %vm3016 = vweird.f32 %v2997
    %vm3017 = vweird.f32 %v3010
    %vm3018 = vmor %vm3016, %vm3017
    %v3019 = vsel %vm3018, %v3010, %v3015
    %v3020 = vrsqrt.pop %v2998
    %v3021 = vmul.f32 %v3020, %v2998
    %v3022 = vmul.f32 %v3021, %v3020
    %v3023 = vmul.f32 0.5, %v3022
    %v3024 = vsub.f32 1.5, %v3023
    %v3025 = vmul.f32 %v3020, %v3024
    %vm3026 = vweird.f32 %v2998
    %vm3027 = vweird.f32 %v3020
    %vm3028 = vmor %vm3026, %vm3027
    %v3029 = vsel %vm3028, %v3020, %v3025
    %v3030 = vrsqrt.pop %v2999
    %v3031 = vmul.f32 %v3030, %v2999
    %v3032 = vmul.f32 %v3031, %v3030
    %v3033 = vmul.f32 0.5, %v3032
    %v3034 = vsub.f32 1.5, %v3033
    %v3035 = vmul.f32 %v3030, %v3034
    %vm3036 = vweird.f32 %v2999
    %vm3037 = vweird.f32 %v3030
    %vm3038 = vmor %vm3036, %vm3037
    %v3039 = vsel %vm3038, %v3030, %v3035
    %v3040 = vmul.f32 %v2972, %v3009
    %v3041 = vmul.f32 %v2973, %v3019
    %v3042 = vmul.f32 %v2974, %v3029
    %v3043 = vmul.f32 %v2975, %v3039
    %v3045 = vperm.slane %v2947, 0
    %v3047 = vmul.f32 %v3040, %v3045
    %v3048 = vmul.f32 %v3041, %v3045
    %v3049 = vmul.f32 %v3042, %v3045
    %v3050 = vmul.f32 %v3043, %v3045
    %v3052 = vperm.slane %v2948, 0
    %v3054 = vadd.f32 %v3047, %v3052
    %v3055 = vadd.f32 %v3048, %v3052
    %v3056 = vadd.f32 %v3049, %v3052
    %v3057 = vadd.f32 %v3050, %v3052
    %v3058 = vmul.f32 %v3054, %v3054
    %v3059 = vmul.f32 %v3055, %v3055
    %v3060 = vmul.f32 %v3056, %v3056
    %v3061 = vmul.f32 %v3057, %v3057
    %v3062 = vmul.f32 %v3054, %v3058
    %v3063 = vmul.f32 %v3055, %v3059
    %v3064 = vmul.f32 %v3056, %v3060
    %v3065 = vmul.f32 %v3057, %v3061
    %v3066 = vmul.f32 %v3062, 0.044715
    %v3067 = vmul.f32 %v3063, 0.044715
    %v3068 = vmul.f32 %v3064, 0.044715
    %v3069 = vmul.f32 %v3065, 0.044715
    %v3070 = vadd.f32 %v3054, %v3066
    %v3071 = vadd.f32 %v3055, %v3067
    %v3072 = vadd.f32 %v3056, %v3068
    %v3073 = vadd.f32 %v3057, %v3069
    %v3074 = vmul.f32 %v3070, 0.7978846
    %v3075 = vmul.f32 %v3071, 0.7978846
    %v3076 = vmul.f32 %v3072, 0.7978846
    %v3077 = vmul.f32 %v3073, 0.7978846
    %v3078 = vtanh.pop %v3074
    %v3079 = vtanh.pop %v3075
    %v3080 = vtanh.pop %v3076
    %v3081 = vtanh.pop %v3077
    %v3082 = vadd.f32 %v3078, 1.0
    %v3083 = vadd.f32 %v3079, 1.0
    %v3084 = vadd.f32 %v3080, 1.0
    %v3085 = vadd.f32 %v3081, 1.0
    %v3086 = vmul.f32 %v3082, 0.5
    %v3087 = vmul.f32 %v3083, 0.5
    %v3088 = vmul.f32 %v3084, 0.5
    %v3089 = vmul.f32 %v3085, 0.5
    %v3090 = vmul.f32 %v3054, %v3086
    %v3091 = vmul.f32 %v3055, %v3087
    %v3092 = vmul.f32 %v3056, %v3088
    %v3093 = vmul.f32 %v3057, %v3089
    %v3094 = vld [vmem:[%s69] sm:$0xff]
    %v3095 = vld [vmem:[#allocation6] sm:$0x1]
    %v3097 = vperm.slane %v3095, 0
    %v3100 = vsel %vm1424, %v3090, 0
    %v3103 = vsel %vm1424, %v3091, 0
    %v3106 = vsel %vm1424, %v3092, 0
    %v3109 = vsel %vm1424, %v3093, 0
    %3111 = vmatpush.msra.mxu0 0.0
    %3112 = vmatpush.msra.mxu0 0.0
    %3113 = vmatpush.msra.mxu0 0.0
    %3114 = vmatpush.msra.mxu0 0.0
    %3115 = vmatpush.msra.mxu0 0.0
    %3116 = vmatpush.msra.mxu0 0.0
    %3117 = vmatpush.msra.mxu0 0.0
    %3118 = vmatpush.msra.mxu0 0.0
    %3119 = vmatpush.msra.mxu0 0.0
    %3120 = vmatpush.msra.mxu0 0.0
    %3121 = vmatpush.msra.mxu0 0.0
    %3122 = vmatpush.msra.mxu0 0.0
    %3123 = vmatpush.msra.mxu0 0.0
    %3124 = vmatpush.msra.mxu0 0.0
    %3125 = vmatpush.msra.mxu0 0.0
    %3126 = vmatpush.msra.mxu0 %v3094
    %3127 = vmatmul.f32.gmra.mxu0 %v3100
    %v3128 = vpop.f32.mrf.mxu0
    %v3129 = vadd.f32 %v3097, %v3128
    %3130 = vmatmul.f32.gmra.mxu0 %v3103
    %v3131 = vpop.f32.mrf.mxu0
    %v3132 = vadd.f32 %v3097, %v3131
    %3133 = vmatmul.f32.gmra.mxu0 %v3106
    %v3134 = vpop.f32.mrf.mxu0
    %v3135 = vadd.f32 %v3097, %v3134
    %3136 = vmatmul.f32.gmra.mxu0 %v3109
    %v3137 = vpop.f32.mrf.mxu0
    %v3138 = vadd.f32 %v3097, %v3137
    %3139 = vdwg.mxu0
    %v3140 = vmul.f32 %v3129, %v3129
    %v3141 = vmul.f32 %v3132, %v3132
    %v3142 = vmul.f32 %v3135, %v3135
    %v3143 = vmul.f32 %v3138, %v3138
    %v3144 = vmul.f32 %v3129, %v3140
    %v3145 = vmul.f32 %v3132, %v3141
    %v3146 = vmul.f32 %v3135, %v3142
    %v3147 = vmul.f32 %v3138, %v3143
    %v3148 = vmul.f32 %v3144, 0.044715
    %v3149 = vmul.f32 %v3145, 0.044715
    %v3150 = vmul.f32 %v3146, 0.044715
    %v3151 = vmul.f32 %v3147, 0.044715
    %v3152 = vadd.f32 %v3129, %v3148
    %v3153 = vadd.f32 %v3132, %v3149
    %v3154 = vadd.f32 %v3135, %v3150
    %v3155 = vadd.f32 %v3138, %v3151
    %v3156 = vmul.f32 %v3152, 0.7978846
    %v3157 = vmul.f32 %v3153, 0.7978846
    %v3158 = vmul.f32 %v3154, 0.7978846
    %v3159 = vmul.f32 %v3155, 0.7978846
    %v3160 = vtanh.pop %v3156
    %v3161 = vtanh.pop %v3157
    %v3162 = vtanh.pop %v3158
    %v3163 = vtanh.pop %v3159
    %v3164 = vadd.f32 %v3160, 1.0
    %v3165 = vadd.f32 %v3161, 1.0
    %v3166 = vadd.f32 %v3162, 1.0
    %v3167 = vadd.f32 %v3163, 1.0
    %v3168 = vmul.f32 %v3164, 0.5
    %v3169 = vmul.f32 %v3165, 0.5
    %v3170 = vmul.f32 %v3166, 0.5
    %v3171 = vmul.f32 %v3167, 0.5
    %v3172 = vmul.f32 %v3129, %v3168
    %v3173 = vmul.f32 %v3132, %v3169
    %v3174 = vmul.f32 %v3135, %v3170
    %v3175 = vmul.f32 %v3138, %v3171
    %v3176 = vld [vmem:[%s73] sm:$0xff]
    %v3177 = vld [vmem:[%s73 + $0x8] sm:$0xff]
    %v3178 = vld [vmem:[%s73 + $0x10] sm:$0xff]
    %v3179 = vld [vmem:[%s73 + $0x18] sm:$0xff]
    %v3180 = vld [vmem:[#allocation7] sm:$0x1]
    %v3182 = vperm.slane %v3180, 0
    %v3185 = vsel %vm397, %v1251, 0
    %v3188 = vsel %vm397, %v1252, 0
    %v3191 = vsel %vm397, %v1253, 0
    %v3194 = vsel %vm397, %v1254, 0
    %3196 = vmatpush.msra.mxu0 0.0
    %3197 = vmatpush.msra.mxu0 0.0
    %3198 = vmatpush.msra.mxu0 0.0
    %3199 = vmatpush.msra.mxu0 0.0
    %3200 = vmatpush.msra.mxu0 0.0
    %3201 = vmatpush.msra.mxu0 0.0
    %3202 = vmatpush.msra.mxu0 0.0
    %3203 = vmatpush.msra.mxu0 0.0
    %3204 = vmatpush.msra.mxu0 0.0
    %3205 = vmatpush.msra.mxu0 0.0
    %3206 = vmatpush.msra.mxu0 0.0
    %3207 = vmatpush.msra.mxu0 0.0
    %3208 = vmatpush.msra.mxu0 %v3179
    %3209 = vmatpush.msra.mxu0 %v3178
    %3210 = vmatpush.msra.mxu0 %v3177
    %3211 = vmatpush.msra.mxu0 %v3176
    %3212 = vmatmul.f32.gmra.mxu0 %v3185
    %v3213 = vpop.f32.mrf.mxu0
    %v3214 = vadd.f32 %v3182, %v3213
    %3215 = vmatmul.f32.gmra.mxu0 %v3188
    %v3216 = vpop.f32.mrf.mxu0
    %v3217 = vadd.f32 %v3182, %v3216
    %3218 = vmatmul.f32.gmra.mxu0 %v3191
    %v3219 = vpop.f32.mrf.mxu0
    %v3220 = vadd.f32 %v3182, %v3219
    %3221 = vmatmul.f32.gmra.mxu0 %v3194
    %v3222 = vpop.f32.mrf.mxu0
    %v3223 = vadd.f32 %v3182, %v3222
    %3224 = vdwg.mxu0
    %v3225 = vld [vmem:[%s77] sm:$0xff]
    %v3226 = vld [vmem:[%s77 + $0x8] sm:$0xff]
    %v3227 = vld [vmem:[%s77 + $0x10] sm:$0xff]
    %v3228 = vld [vmem:[%s77 + $0x18] sm:$0xff]
    %v3229 = vld [vmem:[#allocation9] sm:$0x1]
    %v3231 = vperm.slane %v3229, 0
    %3233 = vmatpush.msra.mxu0 0.0
    %3234 = vmatpush.msra.mxu0 0.0
    %3235 = vmatpush.msra.mxu0 0.0
    %3236 = vmatpush.msra.mxu0 0.0
    %3237 = vmatpush.msra.mxu0 0.0
    %3238 = vmatpush.msra.mxu0 0.0
    %3239 = vmatpush.msra.mxu0 0.0
    %3240 = vmatpush.msra.mxu0 0.0
    %3241 = vmatpush.msra.mxu0 0.0
    %3242 = vmatpush.msra.mxu0 0.0
    %3243 = vmatpush.msra.mxu0 0.0
    %3244 = vmatpush.msra.mxu0 0.0
    %3245 = vmatpush.msra.mxu0 %v3228
    %3246 = vmatpush.msra.mxu0 %v3227
    %3247 = vmatpush.msra.mxu0 %v3226
    %3248 = vmatpush.msra.mxu0 %v3225
    %3249 = vmatmul.f32.gmra.mxu0 %v1111
    %v3250 = vpop.f32.mrf.mxu0
    %v3251 = vadd.f32 %v3231, %v3250
    %3252 = vmatmul.f32.gmra.mxu0 %v1114
    %v3253 = vpop.f32.mrf.mxu0
    %v3254 = vadd.f32 %v3231, %v3253
    %3255 = vmatmul.f32.gmra.mxu0 %v1117
    %v3256 = vpop.f32.mrf.mxu0
    %v3257 = vadd.f32 %v3231, %v3256
    %3258 = vmatmul.f32.gmra.mxu0 %v1120
    %v3259 = vpop.f32.mrf.mxu0
    %v3260 = vadd.f32 %v3231, %v3259
    %3261 = vdwg.mxu0
    %v3262 = vadd.f32 %v3214, %v3251
    %v3263 = vadd.f32 %v3217, %v3254
    %v3264 = vadd.f32 %v3220, %v3257
    %v3265 = vadd.f32 %v3223, %v3260
    %v3266 = vld [vmem:[%s81] sm:$0xf]
    %v3267 = vld [vmem:[#allocation10] sm:$0x1]
    %v3269 = vperm.slane %v3267, 0
    %vm3271 = vcmask 31744
    %v3273 = vsel %vm3271, %v3172, 0
    %v3276 = vsel %vm3271, %v3173, 0
    %v3279 = vsel %vm3271, %v3174, 0
    %v3282 = vsel %vm3271, %v3175, 0
    %vm3284 = vcmask 1043456
    %v3286 = vsel %vm3284, %v3266, 0
    %3288 = vmatpush.msra.mxu0 0.0
    %3289 = vmatpush.msra.mxu0 0.0
    %3290 = vmatpush.msra.mxu0 0.0
    %3291 = vmatpush.msra.mxu0 0.0
    %3292 = vmatpush.msra.mxu0 0.0
    %3293 = vmatpush.msra.mxu0 0.0
    %3294 = vmatpush.msra.mxu0 0.0
    %3295 = vmatpush.msra.mxu0 0.0
    %3296 = vmatpush.msra.mxu0 0.0
    %3297 = vmatpush.msra.mxu0 0.0
    %3298 = vmatpush.msra.mxu0 0.0
    %3299 = vmatpush.msra.mxu0 0.0
    %3300 = vmatpush.msra.mxu0 0.0
    %3301 = vmatpush.msra.mxu0 0.0
    %3302 = vmatpush.msra.mxu0 0.0
    %3303 = vmatpush.msra.mxu0 %v3286
    %3304 = vmatmul.f32.gmra.mxu0 %v3273
    %v3305 = vpop.f32.mrf.mxu0
    %v3306 = vadd.f32 %v3269, %v3305
    %3307 = vmatmul.f32.gmra.mxu0 %v3276
    %v3308 = vpop.f32.mrf.mxu0
    %v3309 = vadd.f32 %v3269, %v3308
    %3310 = vmatmul.f32.gmra.mxu0 %v3279
    %v3311 = vpop.f32.mrf.mxu0
    %v3312 = vadd.f32 %v3269, %v3311
    %3313 = vmatmul.f32.gmra.mxu0 %v3282
    %v3314 = vpop.f32.mrf.mxu0
    %v3315 = vadd.f32 %v3269, %v3314
    %3316 = vdwg.mxu0
    %v3317 = vadd.f32 %v3306, %v3262
    %v3318 = vadd.f32 %v3309, %v3263
    %v3319 = vadd.f32 %v3312, %v3264
    %v3320 = vadd.f32 %v3315, %v3265
    %v3321 = vld [vmem:[%s93] sm:$0x3]
    %v3323 = vsel %vm704, %v3321, 0
    %3325 = vmatpush.msra.mxu0 0.0
    %3326 = vmatpush.msra.mxu0 0.0
    %3327 = vmatpush.msra.mxu0 0.0
    %3328 = vmatpush.msra.mxu0 0.0
    %3329 = vmatpush.msra.mxu0 0.0
    %3330 = vmatpush.msra.mxu0 0.0
    %3331 = vmatpush.msra.mxu0 0.0
    %3332 = vmatpush.msra.mxu0 0.0
    %3333 = vmatpush.msra.mxu0 0.0
    %3334 = vmatpush.msra.mxu0 0.0
    %3335 = vmatpush.msra.mxu0 0.0
    %3336 = vmatpush.msra.mxu0 0.0
    %3337 = vmatpush.msra.mxu0 0.0
    %3338 = vmatpush.msra.mxu0 0.0
    %3339 = vmatpush.msra.mxu0 %v2909
    %3340 = vmatpush.msra.mxu0 %v2908
    %3341 = vmatmul.f32.gmra.mxu0 %v3323
    %v3342 = vpop.f32.mrf.mxu0
    %v3343 = vadd.f32 0.0, %v3342
    %3344 = vdwg.mxu0
    %v3345 = vld [vmem:[%s95] sm:$0x3]
    %v3347 = vsel %vm704, %v3345, 0
    %3349 = vmatpush.msra.mxu0 0.0
    %3350 = vmatpush.msra.mxu0 0.0
    %3351 = vmatpush.msra.mxu0 0.0
    %3352 = vmatpush.msra.mxu0 0.0
    %3353 = vmatpush.msra.mxu0 0.0
    %3354 = vmatpush.msra.mxu0 0.0
    %3355 = vmatpush.msra.mxu0 0.0
    %3356 = vmatpush.msra.mxu0 0.0
    %3357 = vmatpush.msra.mxu0 0.0
    %3358 = vmatpush.msra.mxu0 0.0
    %3359 = vmatpush.msra.mxu0 0.0
    %3360 = vmatpush.msra.mxu0 0.0
    %3361 = vmatpush.msra.mxu0 0.0
    %3362 = vmatpush.msra.mxu0 0.0
    %3363 = vmatpush.msra.mxu0 %v2909
    %3364 = vmatpush.msra.mxu0 %v2908
    %3365 = vmatmul.f32.gmra.mxu0 %v3347
    %v3366 = vpop.f32.mrf.mxu0
    %v3367 = vadd.f32 0.0, %v3366
    %3368 = vdwg.mxu0
    %v3369 = vld [vmem:[%s85] sm:$0xff]
    %v3370 = vld [vmem:[%s85 + $0x8] sm:$0xff]
    %v3371 = vld [vmem:[%s85 + $0x10] sm:$0xff]
    %v3372 = vld [vmem:[%s85 + $0x18] sm:$0xff]
    %v3373 = vld [vmem:[%s87] sm:$0x1]
    %v3375 = vperm.slane %v3373, 0
    %v3378 = vsel %vm397, %v3343, 0
    %3380 = vmatpush.msra.mxu0 0.0
    %3381 = vmatpush.msra.mxu0 0.0
    %3382 = vmatpush.msra.mxu0 0.0
    %3383 = vmatpush.msra.mxu0 0.0
    %3384 = vmatpush.msra.mxu0 0.0
    %3385 = vmatpush.msra.mxu0 0.0
    %3386 = vmatpush.msra.mxu0 0.0
    %3387 = vmatpush.msra.mxu0 0.0
    %3388 = vmatpush.msra.mxu0 0.0
    %3389 = vmatpush.msra.mxu0 0.0
    %3390 = vmatpush.msra.mxu0 0.0
    %3391 = vmatpush.msra.mxu0 0.0
    %3392 = vmatpush.msra.mxu0 %v3372
    %3393 = vmatpush.msra.mxu0 %v3371
    %3394 = vmatpush.msra.mxu0 %v3370
    %3395 = vmatpush.msra.mxu0 %v3369
    %3396 = vmatmul.f32.gmra.mxu0 %v3378
    %v3397 = vpop.f32.mrf.mxu0
    %v3398 = vadd.f32 %v3375, %v3397
    %3399 = vdwg.mxu0
    %v3400 = vmax.f32 %v3398, 0.0
    %v3401 = vld [vmem:[%s89] sm:$0xff]
    %v3402 = vld [vmem:[%s89 + $0x8] sm:$0xff]
    %v3403 = vld [vmem:[%s89 + $0x10] sm:$0xff]
    %v3404 = vld [vmem:[%s89 + $0x18] sm:$0xff]
    %v3405 = vld [vmem:[%s91] sm:$0x1]
    %v3407 = vperm.slane %v3405, 0
    %v3410 = vsel %vm397, %v3400, 0
    %3412 = vmatpush.msra.mxu0 0.0
    %3413 = vmatpush.msra.mxu0 0.0
    %3414 = vmatpush.msra.mxu0 0.0
    %3415 = vmatpush.msra.mxu0 0.0
    %3416 = vmatpush.msra.mxu0 0.0
    %3417 = vmatpush.msra.mxu0 0.0
    %3418 = vmatpush.msra.mxu0 0.0
    %3419 = vmatpush.msra.mxu0 0.0
    %3420 = vmatpush.msra.mxu0 0.0
    %3421 = vmatpush.msra.mxu0 0.0
    %3422 = vmatpush.msra.mxu0 0.0
    %3423 = vmatpush.msra.mxu0 0.0
    %3424 = vmatpush.msra.mxu0 %v3404
    %3425 = vmatpush.msra.mxu0 %v3403
    %3426 = vmatpush.msra.mxu0 %v3402
    %3427 = vmatpush.msra.mxu0 %v3401
    %3428 = vmatmul.f32.gmra.mxu0 %v3410
    %v3429 = vpop.f32.mrf.mxu0
    %v3430 = vadd.f32 %v3407, %v3429
    %3431 = vdwg.mxu0
    %s3432 = scalar_lea.vmem %s85, 32
    %v3433 = vld [vmem:[%s3432] sm:$0xff]
    %v3434 = vld [vmem:[%s3432 + $0x8] sm:$0xff]
    %v3435 = vld [vmem:[%s3432 + $0x10] sm:$0xff]
    %v3436 = vld [vmem:[%s3432 + $0x18] sm:$0xff]
    %s3437 = scalar_lea.vmem %s87, 1
    %v3438 = vld [vmem:[%s3437] sm:$0x1]
    %v3440 = vperm.slane %v3438, 0
    %v3443 = vsel %vm397, %v3367, 0
    %3445 = vmatpush.msra.mxu0 0.0
    %3446 = vmatpush.msra.mxu0 0.0
    %3447 = vmatpush.msra.mxu0 0.0
    %3448 = vmatpush.msra.mxu0 0.0
    %3449 = vmatpush.msra.mxu0 0.0
    %3450 = vmatpush.msra.mxu0 0.0
    %3451 = vmatpush.msra.mxu0 0.0
    %3452 = vmatpush.msra.mxu0 0.0
    %3453 = vmatpush.msra.mxu0 0.0
    %3454 = vmatpush.msra.mxu0 0.0
    %3455 = vmatpush.msra.mxu0 0.0
    %3456 = vmatpush.msra.mxu0 0.0
    %3457 = vmatpush.msra.mxu0 %v3436
    %3458 = vmatpush.msra.mxu0 %v3435
    %3459 = vmatpush.msra.mxu0 %v3434
    %3460 = vmatpush.msra.mxu0 %v3433
    %3461 = vmatmul.f32.gmra.mxu0 %v3443
    %v3462 = vpop.f32.mrf.mxu0
    %v3463 = vadd.f32 %v3440, %v3462
    %3464 = vdwg.mxu0
    %v3465 = vmax.f32 %v3463, 0.0
    %s3466 = scalar_lea.vmem %s89, 32
    %v3467 = vld [vmem:[%s3466] sm:$0xff]
    %v3468 = vld [vmem:[%s3466 + $0x8] sm:$0xff]
    %v3469 = vld [vmem:[%s3466 + $0x10] sm:$0xff]
    %v3470 = vld [vmem:[%s3466 + $0x18] sm:$0xff]
    %s3471 = scalar_lea.vmem %s91, 1
    %v3472 = vld [vmem:[%s3471] sm:$0x1]
    %v3474 = vperm.slane %v3472, 0
    %v3477 = vsel %vm397, %v3465, 0
    %3479 = vmatpush.msra.mxu0 0.0
    %3480 = vmatpush.msra.mxu0 0.0
    %3481 = vmatpush.msra.mxu0 0.0
    %3482 = vmatpush.msra.mxu0 0.0
    %3483 = vmatpush.msra.mxu0 0.0
    %3484 = vmatpush.msra.mxu0 0.0
    %3485 = vmatpush.msra.mxu0 0.0
    %3486 = vmatpush.msra.mxu0 0.0
    %3487 = vmatpush.msra.mxu0 0.0
    %3488 = vmatpush.msra.mxu0 0.0
    %3489 = vmatpush.msra.mxu0 0.0
    %3490 = vmatpush.msra.mxu0 0.0
    %3491 = vmatpush.msra.mxu0 %v3470
    %3492 = vmatpush.msra.mxu0 %v3469
    %3493 = vmatpush.msra.mxu0 %v3468
    %3494 = vmatpush.msra.mxu0 %v3467
    %3495 = vmatmul.f32.gmra.mxu0 %v3477
    %v3496 = vpop.f32.mrf.mxu0
    %v3497 = vadd.f32 %v3474, %v3496
    %3498 = vdwg.mxu0
    %v3500 = vrot.slane %v3430, 1
    %v3501 = vperm.slane %v3430, 0
    %v3502 = vperm.slane %v3500, 0
    %v3505 = vmul.f32 %v3501, %v3172
    %v3506 = vmul.f32 %v3501, %v3173
    %v3507 = vmul.f32 %v3502, %v3174
    %v3508 = vmul.f32 %v3502, %v3175
    %v3510 = vrot.slane %v3497, 1
    %v3511 = vperm.slane %v3497, 0
    %v3512 = vperm.slane %v3510, 0
    %v3515 = vmul.f32 %v3511, %v3317
    %v3516 = vmul.f32 %v3511, %v3318
    %v3517 = vmul.f32 %v3512, %v3319
    %v3518 = vmul.f32 %v3512, %v3320
    %v3519 = vadd.f32 %v3505, %v3515
    %v3520 = vadd.f32 %v3506, %v3516
    %v3521 = vadd.f32 %v3507, %v3517
    %v3522 = vadd.f32 %v3508, %v3518
    %v3523 = vsel %vm3271, %v3519, 0.0
    %3524 = vadd.xlane.f32.xlu0 %v3523
    %v3525 = vpop.xlane.xlu0 %3524
    %v3526 = vsel %vm3271, %v3520, 0.0
    %3527 = vadd.xlane.f32.xlu0 %v3526
    %v3528 = vpop.xlane.xlu0 %3527
    %v3529 = vsel %vm3271, %v3521, 0.0
    %3530 = vadd.xlane.f32.xlu0 %v3529
    %v3531 = vpop.xlane.xlu0 %3530
    %v3532 = vsel %vm3271, %v3522, 0.0
    %3533 = vadd.xlane.f32.xlu0 %v3532
    %v3534 = vpop.xlane.xlu0 %3533
    %v3539 = vlaneseq
    %v3540 = vand.u32 %v3539, 127
    %v3541 = vperm.slane %v3525, %v3540
    %v3542 = vadd.s32 %v3540, 4294967288
    %v3543 = vperm.slane %v3528, %v3542
    %vm3544 = vcmask 130112
    %v3545 = vsel %vm3544, %v3543, %v3541
    %v3546 = vperm.slane %v3531, %v3540
    %v3547 = vperm.slane %v3534, %v3542
    %v3548 = vsel %vm3544, %v3547, %v3546
    %vm3549 = vcmask 1041409
    %v3550 = vsel %vm3549, %v3548, %v3545
    %vm3552 = vcmask 123904
    %3553 = vst.msk [vmem:[%s97] sm:$0x3] %vm3552, %v3550
    // Predicated region
    $region218: #{samhq_forward.1} parent=1 // pred_check
      _
    $region219: #{samhq_forward.1} parent=1 // pred_check_branch
      %3555 = sbr.rel (0) target = $region221
    $region220: #{samhq_forward.1} parent=1 // pred_region
      _
    $region221: #{samhq_forward.1} parent=1 // pred_fallthru
      _
    // Predicated region
    $region222: #{samhq_forward.1} parent=1 // pred_check
      _
    $region223: #{samhq_forward.1} parent=1 // pred_check_branch
      %3557 = sbr.rel (0) target = $region225
    $region224: #{samhq_forward.1} parent=1 // pred_region
      _
    $region225: #{samhq_forward.1} parent=1 // pred_fallthru
      _
    %3558 = vsyncpa [#allocation3], 1
    %3559 = vsyncpa [#allocation5], 1
    %3560 = vsyncpa [#allocation8], 1
    %3561 = vsyncpa [#allocation11], 1

</llo_original>
